<compile_context>
chip_gen: v7x
topology: tpu7x:2x2x1
jax: 0.10.0
libtpu: 0.0.40
codegen_flags: <defaults>
</compile_context>

<pallas_src>
import functools

import jax
import jax.numpy as jnp
import numpy as np
from jax.experimental import pallas as pl
from jax.experimental.pallas import tpu as pltpu


# ----------------------------- Pallas kernel -----------------------------

def _fused_node_attention_kernel(x_ref, wk_ref, bk_ref, q_ref, v_ref, wo_ref,
                                 bo_ref, o_ref, *, n_heads, n_nodes):
    """One row-tile of the fused multi-head node-attention forward.

    x_ref : (tm, C)     input rows (channels-last)
    wk_ref: (C, C)      concat of per-head key weights  (Linear3d C -> Ci)
    bk_ref: (1, C)      concat of per-head key biases
    q_ref : (C, nH*N)   block-diag of query_h^T  ((Ci, N) blocks)
    v_ref : (nH*N, C)   block-diag of value_h    ((N, Ci) blocks)
    wo_ref: (C, C)      stacked per-head output weights ((Ci, C) blocks)
    bo_ref: (1, C)      sum over heads of output biases
    o_ref : (tm, C)     out = sum_h head_out_h + n_heads * x
    """
    x = x_ref[...]
    # Keys for every head at once: columns [h*Ci, (h+1)*Ci) hold head h's key.
    key = jnp.dot(x, wk_ref[...], preferred_element_type=jnp.float32) + bk_ref[...]
    # Attention logits for every head: columns [h*N, (h+1)*N) hold head h's logits.
    logits = jnp.dot(key, q_ref[...], preferred_element_type=jnp.float32)
    # Per-head softmax over the node dimension (N contiguous columns per head).
    parts = []
    for h in range(n_heads):
        seg = logits[:, h * n_nodes:(h + 1) * n_nodes]
        seg = seg - jnp.max(seg, axis=-1, keepdims=True)
        e = jnp.exp(seg)
        parts.append(e / jnp.sum(e, axis=-1, keepdims=True))
    alpha = jnp.concatenate(parts, axis=-1) if n_heads > 1 else parts[0]
    # Weighted node values for every head, then the stacked output projection
    # (the single matmul already sums the heads' contributions).
    y = jnp.dot(alpha, v_ref[...], preferred_element_type=jnp.float32)
    out = jnp.dot(y, wo_ref[...], preferred_element_type=jnp.float32) + bo_ref[...]
    # Each head adds the residual x, so the head-sum adds n_heads * x.
    o_ref[...] = out + jnp.float32(n_heads) * x


# ----------------------------- wrapper -----------------------------

def _block_diag(blocks):
    rows = sum(b.shape[0] for b in blocks)
    cols = sum(b.shape[1] for b in blocks)
    out = jnp.zeros((rows, cols), jnp.float32)
    r = c = 0
    for b in blocks:
        out = out.at[r:r + b.shape[0], c:c + b.shape[1]].set(b)
        r += b.shape[0]
        c += b.shape[1]
    return out


def node_attention_multihead_forward(x, params, *, tm=512):
    """x: (B, C, T, H, W) float32.  params: {'nodes': (N, Ci), 'heads': [dict]*n_heads}."""
    B, C, T, H, W = x.shape
    nodes = params["nodes"].astype(jnp.float32)
    heads = params["heads"]
    n_heads = len(heads)
    n_nodes, c_inter = nodes.shape
    assert C == n_heads * c_inter
    assert tm % 8 == 0

    # ---- tiny per-head packing in plain JAX (off the streaming critical path) ----
    # TODO(synk): nn.Dropout layers are identity in eval mode and are omitted.
    wk_cols, bk_parts, q_blocks, v_blocks, wo_rows = [], [], [], [], []
    bo_sum = jnp.zeros((C,), jnp.float32)
    for hp in heads:
        query = nodes @ hp["wq"].T + hp["bq"]          # (N, Ci)
        value = nodes @ hp["wv"].T + hp["bv"]          # (N, Ci)
        wk_cols.append(hp["wk"].T)                     # (C, Ci)
        bk_parts.append(hp["bk"])                      # (Ci,)
        q_blocks.append(query.T)                       # (Ci, N)
        v_blocks.append(value)                         # (N, Ci)
        wo_rows.append(hp["wo"].T)                     # (Ci, C)
        bo_sum = bo_sum + hp["bo"]
    wk_cat = jnp.concatenate(wk_cols, axis=1)          # (C, C)
    bk_cat = jnp.concatenate(bk_parts).reshape(1, C)   # (1, C)
    q_blk = _block_diag(q_blocks)                      # (C, nH*N)
    v_blk = _block_diag(v_blocks)                      # (nH*N, C)
    wo_cat = jnp.concatenate(wo_rows, axis=0)          # (C, C)
    bo_sum = bo_sum.reshape(1, C)
    nl = n_heads * n_nodes

    # ---- flatten to channels-last rows: one position per row, C in the lane dim ----
    # TODO(synk): the NCDHW<->rows permutes stay in XLA; a channels-last caller
    # layout (or a 5-D out BlockSpec) would remove these two extra HBM passes.
    M = B * T * H * W
    x_flat = jnp.transpose(x, (0, 2, 3, 4, 1)).reshape(M, C).astype(jnp.float32)

    # Remainder handling: pad rows so the grid covers M exactly, slice off below.
    n_tiles = -(-M // tm)
    m_pad = n_tiles * tm
    if m_pad != M:
        x_flat = jnp.pad(x_flat, ((0, m_pad - M), (0, 0)))

    kernel = functools.partial(_fused_node_attention_kernel,
                               n_heads=n_heads, n_nodes=n_nodes)
    out_flat = pl.pallas_call(
        kernel,
        out_shape=jax.ShapeDtypeStruct((m_pad, C), jnp.float32),
        grid=(n_tiles,),
        in_specs=[
            pl.BlockSpec((tm, C), lambda i: (i, 0)),     # streamed x rows
            pl.BlockSpec((C, C), lambda i: (0, 0)),      # resident packed weights
            pl.BlockSpec((1, C), lambda i: (0, 0)),
            pl.BlockSpec((C, nl), lambda i: (0, 0)),
            pl.BlockSpec((nl, C), lambda i: (0, 0)),
            pl.BlockSpec((C, C), lambda i: (0, 0)),
            pl.BlockSpec((1, C), lambda i: (0, 0)),
        ],
        out_specs=pl.BlockSpec((tm, C), lambda i: (i, 0)),
        compiler_params=pltpu.CompilerParams(
            dimension_semantics=("parallel",),           # independent tiles -> megacore
            vmem_limit_bytes=32 * 1024 * 1024,
        ),
    )(x_flat, wk_cat, bk_cat, q_blk, v_blk, wo_cat, bo_sum)

    out_flat = out_flat[:M]
    return out_flat.reshape(B, T, H, W, C).transpose(0, 4, 1, 2, 3)


# ------------------- pure-JAX reference (PyTorch permute order) -------------------

def reference_forward(x, params):
    B, C, T, H, W = x.shape
    nodes = params["nodes"]
    N, Ci = nodes.shape
    total = None
    for hp in params["heads"]:
        # key_embedding: Linear3d C -> Ci applied over the channel dim.
        key = jnp.einsum("bcthw,oc->bothw", x, hp["wk"]) + hp["bk"][None, :, None, None, None]
        query = nodes @ hp["wq"].T + hp["bq"]
        value = nodes @ hp["wv"].T + hp["bv"]
        # tensor_product_1
        xk = jnp.transpose(key, (0, 2, 3, 4, 1)).reshape(B * T * H * W, Ci)
        f = xk @ query.T
        f = f.reshape(B, T, H, W, N).transpose(0, 2, 3, 4, 1)          # (B,H,W,N,T)
        alpha = jax.nn.softmax(f, axis=3)
        # tensor_product_2
        a = jnp.transpose(alpha, (0, 1, 2, 4, 3)).reshape(B * H * W * T, N)
        y = (a @ value).reshape(B, H, W, T, Ci).transpose(0, 4, 3, 1, 2)  # (B,Ci,T,H,W)
        # output_embedding: Linear3d Ci -> C, then residual.
        y = jnp.einsum("bcthw,oc->bothw", y, hp["wo"]) + hp["bo"][None, :, None, None, None]
        y = y + x
        total = y if total is None else total + y
    return total


# ----------------------------- main -----------------------------

if __name__ == "__main__":
    # Small shapes consistent with the module: input_shape = (C, T, H, W),
    # n_heads divides C, nodes has n_channels_inter = C // n_heads columns.
    B, C, T, H, W = 2, 128, 4, 16, 16
    N_HEADS = 4
    C_INTER = C // N_HEADS            # 32
    N_NODES = 16

    key = jax.random.PRNGKey(0)
    k_nodes, k_x, k_heads = jax.random.split(key, 3)

    def uni(k, shape, scale):
        return jax.random.uniform(k, shape, jnp.float32, -scale, scale)

    # TODO(synk): the module's nodes come from an external numpy array (sliced to
    # n_channels_inter columns); replaced by deterministic uniform samples in [0, 1).
    nodes = jax.random.uniform(k_nodes, (N_NODES, C_INTER), jnp.float32)

    heads = []
    s_c, s_ci = 1.0 / np.sqrt(C), 1.0 / np.sqrt(C_INTER)
    for hk in jax.random.split(k_heads, N_HEADS):
        ks = jax.random.split(hk, 8)
        # TODO(synk): the spec's __init_layers zero-init indexes the Dropout layer
        # (would raise in PyTorch); the output Linear3d is left randomly initialized.
        heads.append(dict(
            wq=uni(ks[0], (C_INTER, C_INTER), s_ci), bq=uni(ks[1], (C_INTER,), s_ci),
            wv=uni(ks[2], (C_INTER, C_INTER), s_ci), bv=uni(ks[3], (C_INTER,), s_ci),
            wk=uni(ks[4], (C_INTER, C), s_c),        bk=uni(ks[5], (C_INTER,), s_c),
            wo=uni(ks[6], (C, C_INTER), s_ci),       bo=uni(ks[7], (C,), s_ci),
        ))
    params = {"nodes": nodes, "heads": heads}

    x = jax.random.normal(k_x, (B, C, T, H, W), jnp.float32)

    fwd = jax.jit(functools.partial(node_attention_multihead_forward, tm=512))
    out = jax.block_until_ready(fwd(x, params))
    assert out.shape == (B, C, T, H, W)

    ref = jax.block_until_ready(reference_forward(x, params))
    np.testing.assert_allclose(np.asarray(out), np.asarray(ref), rtol=2e-2, atol=2e-2)

    print("KERNEL_OK")
</pallas_src>

<mosaic_0001>
module attributes {stable_mosaic.version = 11 : i64} {
  func.func @_fused_node_attention_kernel(%arg0: i32, %arg1: memref<512x128xf32, #tpu.memory_space<vmem>>, %arg2: memref<128x128xf32, #tpu.memory_space<vmem>>, %arg3: memref<1x128xf32, #tpu.memory_space<vmem>>, %arg4: memref<128x64xf32, #tpu.memory_space<vmem>>, %arg5: memref<64x128xf32, #tpu.memory_space<vmem>>, %arg6: memref<128x128xf32, #tpu.memory_space<vmem>>, %arg7: memref<1x128xf32, #tpu.memory_space<vmem>>, %arg8: memref<512x128xf32, #tpu.memory_space<vmem>>) attributes {dimension_semantics = [#tpu.dimension_semantics<parallel>], iteration_bounds = array<i64: 4>, scalar_prefetch = 0 : i64, scratch_operands = 0 : i64, tpu.core_type = #tpu.core_type<tc>, window_params = [{transform_indices = @transform_0, window_bounds = array<i64: 512, 128>}, {pipeline_mode = #tpu.pipeline_mode<synchronous>, transform_indices = @transform_1, window_bounds = array<i64: 128, 128>}, {pipeline_mode = #tpu.pipeline_mode<synchronous>, transform_indices = @transform_2, window_bounds = array<i64: 1, 128>}, {pipeline_mode = #tpu.pipeline_mode<synchronous>, transform_indices = @transform_3, window_bounds = array<i64: 128, 64>}, {pipeline_mode = #tpu.pipeline_mode<synchronous>, transform_indices = @transform_4, window_bounds = array<i64: 64, 128>}, {pipeline_mode = #tpu.pipeline_mode<synchronous>, transform_indices = @transform_5, window_bounds = array<i64: 128, 128>}, {pipeline_mode = #tpu.pipeline_mode<synchronous>, transform_indices = @transform_6, window_bounds = array<i64: 1, 128>}, {transform_indices = @transform_7, window_bounds = array<i64: 512, 128>}]} {
    %c0 = arith.constant 0 : index
    %c0_0 = arith.constant 0 : index
    %0 = vector.load %arg1[%c0, %c0_0] : memref<512x128xf32, #tpu.memory_space<vmem>>, vector<512x128xf32>
    %c0_1 = arith.constant 0 : index
    %c0_2 = arith.constant 0 : index
    %1 = vector.load %arg2[%c0_1, %c0_2] : memref<128x128xf32, #tpu.memory_space<vmem>>, vector<128x128xf32>
    %cst = arith.constant dense<0.000000e+00> : vector<512x128xf32>
    %2 = tpu.matmul %0, %1, %cst {dimension_numbers = #tpu.dot_dimension_numbers<[1], [0], [0], [1], [0, 0, 1, 1], [], []>} : vector<512x128xf32>, vector<128x128xf32>, vector<512x128xf32> -> vector<512x128xf32>
    %c0_3 = arith.constant 0 : index
    %c0_4 = arith.constant 0 : index
    %3 = vector.load %arg3[%c0_3, %c0_4] : memref<1x128xf32, #tpu.memory_space<vmem>>, vector<1x128xf32>
    %4 = vector.broadcast %3 : vector<1x128xf32> to vector<512x128xf32>
    %5 = arith.addf %2, %4 : vector<512x128xf32>
    %c0_5 = arith.constant 0 : index
    %c0_6 = arith.constant 0 : index
    %6 = vector.load %arg4[%c0_5, %c0_6] : memref<128x64xf32, #tpu.memory_space<vmem>>, vector<128x64xf32>
    %cst_7 = arith.constant dense<0.000000e+00> : vector<512x64xf32>
    %7 = tpu.matmul %5, %6, %cst_7 {dimension_numbers = #tpu.dot_dimension_numbers<[1], [0], [0], [1], [0, 0, 1, 1], [], []>} : vector<512x128xf32>, vector<128x64xf32>, vector<512x64xf32> -> vector<512x64xf32>
    %8 = vector.extract_strided_slice %7 {offsets = [0, 0], sizes = [512, 16], strides = [1, 1]} : vector<512x64xf32> to vector<512x16xf32>
    %cst_8 = arith.constant dense<0xFF800000> : vector<512xf32>
    %9 = vector.multi_reduction <maximumf>, %8, %cst_8 [1] : vector<512x16xf32> to vector<512xf32>
    %10 = vector.shape_cast %9 : vector<512xf32> to vector<512x1xf32>
    %11 = vector.broadcast %10 : vector<512x1xf32> to vector<512x16xf32>
    %12 = arith.subf %8, %11 : vector<512x16xf32>
    %13 = math.exp %12 : vector<512x16xf32>
    %cst_9 = arith.constant dense<0.000000e+00> : vector<512xf32>
    %14 = vector.multi_reduction <add>, %13, %cst_9 [1] : vector<512x16xf32> to vector<512xf32>
    %15 = vector.shape_cast %14 : vector<512xf32> to vector<512x1xf32>
    %16 = vector.broadcast %15 : vector<512x1xf32> to vector<512x16xf32>
    %17 = arith.divf %13, %16 : vector<512x16xf32>
    %18 = vector.extract_strided_slice %7 {offsets = [0, 16], sizes = [512, 16], strides = [1, 1]} : vector<512x64xf32> to vector<512x16xf32>
    %cst_10 = arith.constant dense<0xFF800000> : vector<512xf32>
    %19 = vector.multi_reduction <maximumf>, %18, %cst_10 [1] : vector<512x16xf32> to vector<512xf32>
    %20 = vector.shape_cast %19 : vector<512xf32> to vector<512x1xf32>
    %21 = vector.broadcast %20 : vector<512x1xf32> to vector<512x16xf32>
    %22 = arith.subf %18, %21 : vector<512x16xf32>
    %23 = math.exp %22 : vector<512x16xf32>
    %cst_11 = arith.constant dense<0.000000e+00> : vector<512xf32>
    %24 = vector.multi_reduction <add>, %23, %cst_11 [1] : vector<512x16xf32> to vector<512xf32>
    %25 = vector.shape_cast %24 : vector<512xf32> to vector<512x1xf32>
    %26 = vector.broadcast %25 : vector<512x1xf32> to vector<512x16xf32>
    %27 = arith.divf %23, %26 : vector<512x16xf32>
    %28 = vector.extract_strided_slice %7 {offsets = [0, 32], sizes = [512, 16], strides = [1, 1]} : vector<512x64xf32> to vector<512x16xf32>
    %cst_12 = arith.constant dense<0xFF800000> : vector<512xf32>
    %29 = vector.multi_reduction <maximumf>, %28, %cst_12 [1] : vector<512x16xf32> to vector<512xf32>
    %30 = vector.shape_cast %29 : vector<512xf32> to vector<512x1xf32>
    %31 = vector.broadcast %30 : vector<512x1xf32> to vector<512x16xf32>
    %32 = arith.subf %28, %31 : vector<512x16xf32>
    %33 = math.exp %32 : vector<512x16xf32>
    %cst_13 = arith.constant dense<0.000000e+00> : vector<512xf32>
    %34 = vector.multi_reduction <add>, %33, %cst_13 [1] : vector<512x16xf32> to vector<512xf32>
    %35 = vector.shape_cast %34 : vector<512xf32> to vector<512x1xf32>
    %36 = vector.broadcast %35 : vector<512x1xf32> to vector<512x16xf32>
    %37 = arith.divf %33, %36 : vector<512x16xf32>
    %38 = vector.extract_strided_slice %7 {offsets = [0, 48], sizes = [512, 16], strides = [1, 1]} : vector<512x64xf32> to vector<512x16xf32>
    %cst_14 = arith.constant dense<0xFF800000> : vector<512xf32>
    %39 = vector.multi_reduction <maximumf>, %38, %cst_14 [1] : vector<512x16xf32> to vector<512xf32>
    %40 = vector.shape_cast %39 : vector<512xf32> to vector<512x1xf32>
    %41 = vector.broadcast %40 : vector<512x1xf32> to vector<512x16xf32>
    %42 = arith.subf %38, %41 : vector<512x16xf32>
    %43 = math.exp %42 : vector<512x16xf32>
    %cst_15 = arith.constant dense<0.000000e+00> : vector<512xf32>
    %44 = vector.multi_reduction <add>, %43, %cst_15 [1] : vector<512x16xf32> to vector<512xf32>
    %45 = vector.shape_cast %44 : vector<512xf32> to vector<512x1xf32>
    %46 = vector.broadcast %45 : vector<512x1xf32> to vector<512x16xf32>
    %47 = arith.divf %43, %46 : vector<512x16xf32>
    %48 = tpu.concatenate %17, %27, %37, %47 in 1 : vector<512x16xf32>, vector<512x16xf32>, vector<512x16xf32>, vector<512x16xf32> -> vector<512x64xf32>
    %c0_16 = arith.constant 0 : index
    %c0_17 = arith.constant 0 : index
    %49 = vector.load %arg5[%c0_16, %c0_17] : memref<64x128xf32, #tpu.memory_space<vmem>>, vector<64x128xf32>
    %cst_18 = arith.constant dense<0.000000e+00> : vector<512x128xf32>
    %50 = tpu.matmul %48, %49, %cst_18 {dimension_numbers = #tpu.dot_dimension_numbers<[1], [0], [0], [1], [0, 0, 1, 1], [], []>} : vector<512x64xf32>, vector<64x128xf32>, vector<512x128xf32> -> vector<512x128xf32>
    %c0_19 = arith.constant 0 : index
    %c0_20 = arith.constant 0 : index
    %51 = vector.load %arg6[%c0_19, %c0_20] : memref<128x128xf32, #tpu.memory_space<vmem>>, vector<128x128xf32>
    %cst_21 = arith.constant dense<0.000000e+00> : vector<512x128xf32>
    %52 = tpu.matmul %50, %51, %cst_21 {dimension_numbers = #tpu.dot_dimension_numbers<[1], [0], [0], [1], [0, 0, 1, 1], [], []>} : vector<512x128xf32>, vector<128x128xf32>, vector<512x128xf32> -> vector<512x128xf32>
    %c0_22 = arith.constant 0 : index
    %c0_23 = arith.constant 0 : index
    %53 = vector.load %arg7[%c0_22, %c0_23] : memref<1x128xf32, #tpu.memory_space<vmem>>, vector<1x128xf32>
    %54 = vector.broadcast %53 : vector<1x128xf32> to vector<512x128xf32>
    %55 = arith.addf %52, %54 : vector<512x128xf32>
    %cst_24 = arith.constant 4.000000e+00 : f32
    %56 = vector.broadcast %cst_24 : f32 to vector<512x128xf32>
    %57 = arith.mulf %56, %0 : vector<512x128xf32>
    %58 = arith.addf %55, %57 : vector<512x128xf32>
    %c0_25 = arith.constant 0 : index
    %c0_26 = arith.constant 0 : index
    %59 = vector.load %arg8[%c0_25, %c0_26] : memref<512x128xf32, #tpu.memory_space<vmem>>, vector<512x128xf32>
    tpu.vector_store %arg8[%c0_25, %c0_26], %58 {strides = array<i32>} : memref<512x128xf32, #tpu.memory_space<vmem>>, vector<512x128xf32>,
    return
  }
  func.func @transform_0(%arg0: i32) -> (i32, i32) {
    %c0_i32 = arith.constant 0 : i32
    %c0_i32_0 = arith.constant 0 : i32
    return %arg0, %c0_i32 : i32, i32
  }
  func.func @transform_1(%arg0: i32) -> (i32, i32) {
    %c0_i32 = arith.constant 0 : i32
    %c0_i32_0 = arith.constant 0 : i32
    %c0_i32_1 = arith.constant 0 : i32
    return %c0_i32, %c0_i32_0 : i32, i32
  }
  func.func @transform_2(%arg0: i32) -> (i32, i32) {
    %c0_i32 = arith.constant 0 : i32
    %c0_i32_0 = arith.constant 0 : i32
    %c0_i32_1 = arith.constant 0 : i32
    return %c0_i32, %c0_i32_0 : i32, i32
  }
  func.func @transform_3(%arg0: i32) -> (i32, i32) {
    %c0_i32 = arith.constant 0 : i32
    %c0_i32_0 = arith.constant 0 : i32
    %c0_i32_1 = arith.constant 0 : i32
    return %c0_i32, %c0_i32_0 : i32, i32
  }
  func.func @transform_4(%arg0: i32) -> (i32, i32) {
    %c0_i32 = arith.constant 0 : i32
    %c0_i32_0 = arith.constant 0 : i32
    %c0_i32_1 = arith.constant 0 : i32
    return %c0_i32, %c0_i32_0 : i32, i32
  }
  func.func @transform_5(%arg0: i32) -> (i32, i32) {
    %c0_i32 = arith.constant 0 : i32
    %c0_i32_0 = arith.constant 0 : i32
    %c0_i32_1 = arith.constant 0 : i32
    return %c0_i32, %c0_i32_0 : i32, i32
  }
  func.func @transform_6(%arg0: i32) -> (i32, i32) {
    %c0_i32 = arith.constant 0 : i32
    %c0_i32_0 = arith.constant 0 : i32
    %c0_i32_1 = arith.constant 0 : i32
    return %c0_i32, %c0_i32_0 : i32, i32
  }
  func.func @transform_7(%arg0: i32) -> (i32, i32) {
    %c0_i32 = arith.constant 0 : i32
    %c0_i32_0 = arith.constant 0 : i32
    return %arg0, %c0_i32 : i32, i32
  }
}

</mosaic_0001>

<llo_original>
// kernel: node_attention_multihead_forward.1
$region0: #{node_attention_multihead_forward.1}
  #allocation0 [shape = 'u32[]', space=smem, size = 0x4, offset = 0x4, fixed_abs, tag = 'smem constant byte address 0x4 - core index']
  #allocation1 [shape = 'u32[144,128]{1,0:T(1,128)}', space=vmem, size = 0x12000, scoped, tag = 'internal scratch']
  %s0 = inlined_call_operand.vmem [shape: f32[2048,128], index: 0, kind: input, shape index: {}]
  %s1 = inlined_call_operand.vmem [shape: f32[128,128], index: 1, kind: input, shape index: {}]
  %s2 = inlined_call_operand.vmem [shape: f32[1,128], index: 2, kind: input, shape index: {}]
  %s3 = inlined_call_operand.vmem [shape: f32[128,64], index: 3, kind: input, shape index: {}]
  %s4 = inlined_call_operand.vmem [shape: f32[64,128], index: 4, kind: input, shape index: {}]
  %s5 = inlined_call_operand.vmem [shape: f32[128,128], index: 5, kind: input, shape index: {}]
  %s6 = inlined_call_operand.vmem [shape: f32[1,128], index: 6, kind: input, shape index: {}]
  %s7 = inlined_call_operand.hbm [shape: f32[2048,128], index: 7, kind: output, shape index: {}]
  %s8 = sld [smem:[#allocation0]]
  $region61: #{node_attention_multihead_forward.1} parent=0
    _
  %s10 = ssub.s32 1, %s8
  %s11 = scalar_select 0, %s10, %s8
  $region1: #{node_attention_multihead_forward.1} parent=0
    #allocation2 [shape = 'u8[524288]{0}', space=vmem, size = 0x80000, scoped, tag = 'output window, operand 0']
    #allocation3 [shape = 's32[2]{0}', space=sflag, size = 0x8, scoped, tag = 'scoped memory for node_attention_multihead_forward.1']
    %12 = vsyncpa [#allocation3], 0
    %s13 = scalar_lea.sflag [#allocation3], 1
    %14 = vsyncpa %s13, 0
    loop: start=0, step=1, limit=6
    $region2: #{node_attention_multihead_forward.1} parent=1 // loop_pre_header
      _
    $region3: #{node_attention_multihead_forward.1} parent=1 // loop_header
      %s16 = sphi 0, %s20
      %p17 = scmp.ge.s32.totalorder %s16, 6
      %s26 = sphi 0, %s28
      %s29 = sphi 0, %s26
      %s30 = sphi 0, %s29
      %s46 = sphi 0, %s30
      %s50 = sphi 0, %s50
      %s52 = sphi 0, %s50
      %s53 = sphi 0, %s52
      %s67 = sphi 0, %s53
      %s71 = sphi 0, %s71
      %s73 = sphi 0, %s71
      %s74 = sphi 0, %s73
      %s88 = sphi 0, %s74
      %s92 = sphi 0, %s92
      %s94 = sphi 0, %s92
      %s95 = sphi 0, %s94
      %s109 = sphi 0, %s95
      %s113 = sphi 0, %s113
      %s115 = sphi 0, %s113
      %s116 = sphi 0, %s115
      %s130 = sphi 0, %s116
      %s134 = sphi 0, %s134
      %s136 = sphi 0, %s134
      %s137 = sphi 0, %s136
      %s151 = sphi 0, %s137
      %s155 = sphi 0, %s155
      %s157 = sphi 0, %s155
      %s158 = sphi 0, %s157
      %s172 = sphi 0, %s158
      %s178 = sphi 0, %s180
      %s181 = sphi 0, %s178
      %s182 = sphi 0, %s181
      %s198 = sphi 0, %s182
    $region4: #{node_attention_multihead_forward.1} parent=1 // loop_header_branch
      %19 = sbr.rel (%p17) target = $region8
    $region5: #{node_attention_multihead_forward.1} parent=1 // loop_body
      %s21 = ssub.s32 %s16, 1
      %s22 = ssub.s32 %s16, 2
      %s23 = sadd.s32 %s16, 1
      %s24 = ssub.s32 %s16, %s23
      %p25 = scmp.eq.s32.totalorder %s24, 0
      %s27 = sadd.s32 %s26, 1
      %s28 = scalar_select %p25, %s26, %s27
      %p31 = pneg %p25
      %p32 = scmp.eq.s32.totalorder %s16, 3
      %p33 = por %p31, %p32
      %p34 = scmp.ne.s32.totalorder %s26, %s29
      %p35 = scmp.eq.s32.totalorder %s16, 0
      %p36 = por %p34, %p35
      %p37 = scmp.ne.s32.totalorder %s26, %s29
      %p38 = scmp.eq.s32.totalorder %s21, 3
      %p39 = por %p37, %p38
      %p40 = scmp.ne.s32.totalorder %s29, %s30
      %p41 = scmp.eq.s32.totalorder %s21, 0
      %p42 = por %p40, %p41
      %p43 = scmp.ne.s32.totalorder %s29, %s30
      %p44 = scmp.eq.s32.totalorder %s22, 3
      %p45 = por %p43, %p44
      %p47 = scmp.ne.s32.totalorder %s30, %s46
      %p48 = scmp.eq.s32.totalorder %s22, 0
      %p49 = por %p47, %p48
      %s51 = sadd.s32 %s50, 1
      %p54 = scmp.eq.s32.totalorder %s16, 3
      %p55 = scmp.ne.s32.totalorder %s50, %s52
      %p56 = scmp.eq.s32.totalorder %s16, 0
      %p57 = por %p55, %p56
      %p58 = scmp.ne.s32.totalorder %s50, %s52
      %p59 = scmp.eq.s32.totalorder %s21, 3
      %p60 = por %p58, %p59
      %p61 = scmp.ne.s32.totalorder %s52, %s53
      %p62 = scmp.eq.s32.totalorder %s21, 0
      %p63 = por %p61, %p62
      %p64 = scmp.ne.s32.totalorder %s52, %s53
      %p65 = scmp.eq.s32.totalorder %s22, 3
      %p66 = por %p64, %p65
      %p68 = scmp.ne.s32.totalorder %s53, %s67
      %p69 = scmp.eq.s32.totalorder %s22, 0
      %p70 = por %p68, %p69
      %s72 = sadd.s32 %s71, 1
      %p75 = scmp.eq.s32.totalorder %s16, 3
      %p76 = scmp.ne.s32.totalorder %s71, %s73
      %p77 = scmp.eq.s32.totalorder %s16, 0
      %p78 = por %p76, %p77
      %p79 = scmp.ne.s32.totalorder %s71, %s73
      %p80 = scmp.eq.s32.totalorder %s21, 3
      %p81 = por %p79, %p80
      %p82 = scmp.ne.s32.totalorder %s73, %s74
      %p83 = scmp.eq.s32.totalorder %s21, 0
      %p84 = por %p82, %p83
      %p85 = scmp.ne.s32.totalorder %s73, %s74
      %p86 = scmp.eq.s32.totalorder %s22, 3
      %p87 = por %p85, %p86
      %p89 = scmp.ne.s32.totalorder %s74, %s88
      %p90 = scmp.eq.s32.totalorder %s22, 0
      %p91 = por %p89, %p90
      %s93 = sadd.s32 %s92, 1
      %p96 = scmp.eq.s32.totalorder %s16, 3
      %p97 = scmp.ne.s32.totalorder %s92, %s94
      %p98 = scmp.eq.s32.totalorder %s16, 0
      %p99 = por %p97, %p98
      %p100 = scmp.ne.s32.totalorder %s92, %s94
      %p101 = scmp.eq.s32.totalorder %s21, 3
      %p102 = por %p100, %p101
      %p103 = scmp.ne.s32.totalorder %s94, %s95
      %p104 = scmp.eq.s32.totalorder %s21, 0
      %p105 = por %p103, %p104
      %p106 = scmp.ne.s32.totalorder %s94, %s95
      %p107 = scmp.eq.s32.totalorder %s22, 3
      %p108 = por %p106, %p107
      %p110 = scmp.ne.s32.totalorder %s95, %s109
      %p111 = scmp.eq.s32.totalorder %s22, 0
      %p112 = por %p110, %p111
      %s114 = sadd.s32 %s113, 1
      %p117 = scmp.eq.s32.totalorder %s16, 3
      %p118 = scmp.ne.s32.totalorder %s113, %s115
      %p119 = scmp.eq.s32.totalorder %s16, 0
      %p120 = por %p118, %p119
      %p121 = scmp.ne.s32.totalorder %s113, %s115
      %p122 = scmp.eq.s32.totalorder %s21, 3
      %p123 = por %p121, %p122
      %p124 = scmp.ne.s32.totalorder %s115, %s116
      %p125 = scmp.eq.s32.totalorder %s21, 0
      %p126 = por %p124, %p125
      %p127 = scmp.ne.s32.totalorder %s115, %s116
      %p128 = scmp.eq.s32.totalorder %s22, 3
      %p129 = por %p127, %p128
      %p131 = scmp.ne.s32.totalorder %s116, %s130
      %p132 = scmp.eq.s32.totalorder %s22, 0
      %p133 = por %p131, %p132
      %s135 = sadd.s32 %s134, 1
      %p138 = scmp.eq.s32.totalorder %s16, 3
      %p139 = scmp.ne.s32.totalorder %s134, %s136
      %p140 = scmp.eq.s32.totalorder %s16, 0
      %p141 = por %p139, %p140
      %p142 = scmp.ne.s32.totalorder %s134, %s136
      %p143 = scmp.eq.s32.totalorder %s21, 3
      %p144 = por %p142, %p143
      %p145 = scmp.ne.s32.totalorder %s136, %s137
      %p146 = scmp.eq.s32.totalorder %s21, 0
      %p147 = por %p145, %p146
      %p148 = scmp.ne.s32.totalorder %s136, %s137
      %p149 = scmp.eq.s32.totalorder %s22, 3
      %p150 = por %p148, %p149
      %p152 = scmp.ne.s32.totalorder %s137, %s151
      %p153 = scmp.eq.s32.totalorder %s22, 0
      %p154 = por %p152, %p153
      %s156 = sadd.s32 %s155, 1
      %p159 = scmp.eq.s32.totalorder %s16, 3
      %p160 = scmp.ne.s32.totalorder %s155, %s157
      %p161 = scmp.eq.s32.totalorder %s16, 0
      %p162 = por %p160, %p161
      %p163 = scmp.ne.s32.totalorder %s155, %s157
      %p164 = scmp.eq.s32.totalorder %s21, 3
      %p165 = por %p163, %p164
      %p166 = scmp.ne.s32.totalorder %s157, %s158
      %p167 = scmp.eq.s32.totalorder %s21, 0
      %p168 = por %p166, %p167
      %p169 = scmp.ne.s32.totalorder %s157, %s158
      %p170 = scmp.eq.s32.totalorder %s22, 3
      %p171 = por %p169, %p170
      %p173 = scmp.ne.s32.totalorder %s158, %s172
      %p174 = scmp.eq.s32.totalorder %s22, 0
      %p175 = por %p173, %p174
      %s176 = ssub.s32 %s16, %s23
      %p177 = scmp.eq.s32.totalorder %s176, 0
      %s179 = sadd.s32 %s178, 1
      %s180 = scalar_select %p177, %s178, %s179
      %p183 = pneg %p177
      %p184 = scmp.eq.s32.totalorder %s16, 3
      %p185 = por %p183, %p184
      %p186 = scmp.ne.s32.totalorder %s178, %s181
      %p187 = scmp.eq.s32.totalorder %s16, 0
      %p188 = por %p186, %p187
      %p189 = scmp.ne.s32.totalorder %s178, %s181
      %p190 = scmp.eq.s32.totalorder %s21, 3
      %p191 = por %p189, %p190
      %p192 = scmp.ne.s32.totalorder %s181, %s182
      %p193 = scmp.eq.s32.totalorder %s21, 0
      %p194 = por %p192, %p193
      %p195 = scmp.ne.s32.totalorder %s181, %s182
      %p196 = scmp.eq.s32.totalorder %s22, 3
      %p197 = por %p195, %p196
      %p199 = scmp.ne.s32.totalorder %s182, %s198
      %p200 = scmp.eq.s32.totalorder %s22, 0
      %p201 = por %p199, %p200
      %p202 = scmp.le.s32.totalorder 1, %s16
      %p203 = scmp.lt.s32.totalorder %s16, 5
      %p204 = pnand %p202, %p203
      %p205 = pneg %p204
      // Predicated region
      $region9: #{node_attention_multihead_forward.1} parent=5 // pred_check
        _
      $region10: #{node_attention_multihead_forward.1} parent=5 // pred_check_branch
        %207 = sbr.rel (%p204) target = $region12
      $region11: #{node_attention_multihead_forward.1} parent=5 // pred_region
        %s208 = ssub.s32 %s16, 1
        // Predicated region
        $region13: #{node_attention_multihead_forward.1} parent=11 // pred_check
          %p209 = pneg %p63
        $region14: #{node_attention_multihead_forward.1} parent=11 // pred_check_branch
          %211 = sbr.rel (%p209) target = $region16
        $region15: #{node_attention_multihead_forward.1} parent=11 // pred_region
          _
        $region16: #{node_attention_multihead_forward.1} parent=11 // pred_fallthru
          _
        // Predicated region
        $region17: #{node_attention_multihead_forward.1} parent=11 // pred_check
          %p212 = pneg %p84
        $region18: #{node_attention_multihead_forward.1} parent=11 // pred_check_branch
          %214 = sbr.rel (%p212) target = $region20
        $region19: #{node_attention_multihead_forward.1} parent=11 // pred_region
          _
        $region20: #{node_attention_multihead_forward.1} parent=11 // pred_fallthru
          _
        // Predicated region
        $region21: #{node_attention_multihead_forward.1} parent=11 // pred_check
          %p215 = pneg %p105
        $region22: #{node_attention_multihead_forward.1} parent=11 // pred_check_branch
          %217 = sbr.rel (%p215) target = $region24
        $region23: #{node_attention_multihead_forward.1} parent=11 // pred_region
          _
        $region24: #{node_attention_multihead_forward.1} parent=11 // pred_fallthru
          _
        // Predicated region
        $region25: #{node_attention_multihead_forward.1} parent=11 // pred_check
          %p218 = pneg %p126
        $region26: #{node_attention_multihead_forward.1} parent=11 // pred_check_branch
          %220 = sbr.rel (%p218) target = $region28
        $region27: #{node_attention_multihead_forward.1} parent=11 // pred_region
          _
        $region28: #{node_attention_multihead_forward.1} parent=11 // pred_fallthru
          _
        // Predicated region
        $region29: #{node_attention_multihead_forward.1} parent=11 // pred_check
          %p221 = pneg %p147
        $region30: #{node_attention_multihead_forward.1} parent=11 // pred_check_branch
          %223 = sbr.rel (%p221) target = $region32
        $region31: #{node_attention_multihead_forward.1} parent=11 // pred_region
          _
        $region32: #{node_attention_multihead_forward.1} parent=11 // pred_fallthru
          _
        // Predicated region
        $region33: #{node_attention_multihead_forward.1} parent=11 // pred_check
          %p224 = pneg %p168
        $region34: #{node_attention_multihead_forward.1} parent=11 // pred_check_branch
          %226 = sbr.rel (%p224) target = $region36
        $region35: #{node_attention_multihead_forward.1} parent=11 // pred_region
          _
        $region36: #{node_attention_multihead_forward.1} parent=11 // pred_fallthru
          _
      $region12: #{node_attention_multihead_forward.1} parent=5 // pred_fallthru
        _
      %p227 = scmp.lt.s32.totalorder %s16, 4
      // Predicated region
      $region37: #{node_attention_multihead_forward.1} parent=5 // pred_check
        %p228 = pneg %p227
      $region38: #{node_attention_multihead_forward.1} parent=5 // pred_check_branch
        %230 = sbr.rel (%p228) target = $region40
      $region39: #{node_attention_multihead_forward.1} parent=5 // pred_region
        // Predicated region
        $region41: #{node_attention_multihead_forward.1} parent=39 // pred_check
          %p231 = pneg %p36
        $region42: #{node_attention_multihead_forward.1} parent=39 // pred_check_branch
          %233 = sbr.rel (%p231) target = $region44
        $region43: #{node_attention_multihead_forward.1} parent=39 // pred_region
          %s234 = smul.u32 64, %s16
          %p235 = scmp.lt.s32.totalorder %s234, 255
          %s236 = scalar_select %p235, %s234, 255
          %s237 = smul.addr %s236, 8
          %s238 = scalar_lea.vmem %s0, %s237
          %s239 = smul.u32 64, %s16
        $region44: #{node_attention_multihead_forward.1} parent=39 // pred_fallthru
          _
      $region40: #{node_attention_multihead_forward.1} parent=5 // pred_fallthru
        _
      %p240 = scmp.le.s32.totalorder 1, %s16
      %p241 = scmp.lt.s32.totalorder %s16, 5
      %p242 = pnand %p240, %p241
      %p243 = pneg %p242
      // Predicated region
      $region45: #{node_attention_multihead_forward.1} parent=5 // pred_check
        _
      $region46: #{node_attention_multihead_forward.1} parent=5 // pred_check_branch
        %245 = sbr.rel (%p242) target = $region48
      $region47: #{node_attention_multihead_forward.1} parent=5 // pred_region
        %s246 = ssub.s32 %s16, 1
        %s247 = smul.u32 64, %s21
        %p248 = scmp.lt.s32.totalorder %s247, 255
        %s249 = scalar_select %p248, %s247, 255
        %s250 = smul.addr %s249, 8
        %s251 = scalar_lea.vmem %s0, %s250
        %p252 = pneg %p42
        %p253 = pneg %p39
        %p254 = pneg %p63
        %p255 = pneg %p60
        %p256 = pneg %p84
        %p257 = pneg %p81
        %p258 = pneg %p105
        %p259 = pneg %p102
        %p260 = pneg %p126
        %p261 = pneg %p123
        %p262 = pneg %p147
        %p263 = pneg %p144
        %p264 = pneg %p168
        %p265 = pneg %p165
        %p266 = pneg %p194
        %p267 = pneg %p191
        %s268 = sand.u32 %s181, 1
        %s269 = scalar_lea.sflag [#allocation3], %s268
        %s270 = sand.u32 %s181, 1
        %s271 = smul.addr %s270, 512
        %s272 = scalar_lea.vmem [#allocation2], %s271
        %s273 = smul.u32 64, %s21
        %p274 = scmp.lt.s32.totalorder %s273, 255
        %s275 = scalar_select %p274, %s273, 255
        %s276 = smul.addr %s275, 8
        %s277 = scalar_lea.vmem %s0, %s276
        %s278 = smul.u32 64, %s21
        %s279 = smul.u32 64, %s21
        %v280 = vld [vmem:[%s277] sm:$0xff]
        %v281 = vld [vmem:[%s277 + $0x8] sm:$0xff]
        %v282 = vld [vmem:[%s277 + $0x10] sm:$0xff]
        %v283 = vld [vmem:[%s277 + $0x18] sm:$0xff]
        %v284 = vld [vmem:[%s277 + $0x20] sm:$0xff]
        %v285 = vld [vmem:[%s277 + $0x28] sm:$0xff]
        %v286 = vld [vmem:[%s277 + $0x30] sm:$0xff]
        %v287 = vld [vmem:[%s277 + $0x38] sm:$0xff]
        %v288 = vld [vmem:[%s277 + $0x40] sm:$0xff]
        %v289 = vld [vmem:[%s277 + $0x48] sm:$0xff]
        %v290 = vld [vmem:[%s277 + $0x50] sm:$0xff]
        %v291 = vld [vmem:[%s277 + $0x58] sm:$0xff]
        %v292 = vld [vmem:[%s277 + $0x60] sm:$0xff]
        %v293 = vld [vmem:[%s277 + $0x68] sm:$0xff]
        %v294 = vld [vmem:[%s277 + $0x70] sm:$0xff]
        %v295 = vld [vmem:[%s277 + $0x78] sm:$0xff]
        %v296 = vld [vmem:[%s277 + $0x80] sm:$0xff]
        %v297 = vld [vmem:[%s277 + $0x88] sm:$0xff]
        %v298 = vld [vmem:[%s277 + $0x90] sm:$0xff]
        %v299 = vld [vmem:[%s277 + $0x98] sm:$0xff]
        %v300 = vld [vmem:[%s277 + $0xa0] sm:$0xff]
        %v301 = vld [vmem:[%s277 + $0xa8] sm:$0xff]
        %v302 = vld [vmem:[%s277 + $0xb0] sm:$0xff]
        %v303 = vld [vmem:[%s277 + $0xb8] sm:$0xff]
        %v304 = vld [vmem:[%s277 + $0xc0] sm:$0xff]
        %v305 = vld [vmem:[%s277 + $0xc8] sm:$0xff]
        %v306 = vld [vmem:[%s277 + $0xd0] sm:$0xff]
        %v307 = vld [vmem:[%s277 + $0xd8] sm:$0xff]
        %v308 = vld [vmem:[%s277 + $0xe0] sm:$0xff]
        %v309 = vld [vmem:[%s277 + $0xe8] sm:$0xff]
        %v310 = vld [vmem:[%s277 + $0xf0] sm:$0xff]
        %v311 = vld [vmem:[%s277 + $0xf8] sm:$0xff]
        %v312 = vld [vmem:[%s277 + $0x100] sm:$0xff]
        %v313 = vld [vmem:[%s277 + $0x108] sm:$0xff]
        %v314 = vld [vmem:[%s277 + $0x110] sm:$0xff]
        %v315 = vld [vmem:[%s277 + $0x118] sm:$0xff]
        %v316 = vld [vmem:[%s277 + $0x120] sm:$0xff]
        %v317 = vld [vmem:[%s277 + $0x128] sm:$0xff]
        %v318 = vld [vmem:[%s277 + $0x130] sm:$0xff]
        %v319 = vld [vmem:[%s277 + $0x138] sm:$0xff]
        %v320 = vld [vmem:[%s277 + $0x140] sm:$0xff]
        %v321 = vld [vmem:[%s277 + $0x148] sm:$0xff]
        %v322 = vld [vmem:[%s277 + $0x150] sm:$0xff]
        %v323 = vld [vmem:[%s277 + $0x158] sm:$0xff]
        %v324 = vld [vmem:[%s277 + $0x160] sm:$0xff]
        %v325 = vld [vmem:[%s277 + $0x168] sm:$0xff]
        %v326 = vld [vmem:[%s277 + $0x170] sm:$0xff]
        %v327 = vld [vmem:[%s277 + $0x178] sm:$0xff]
        %v328 = vld [vmem:[%s277 + $0x180] sm:$0xff]
        %v329 = vld [vmem:[%s277 + $0x188] sm:$0xff]
        %v330 = vld [vmem:[%s277 + $0x190] sm:$0xff]
        %v331 = vld [vmem:[%s277 + $0x198] sm:$0xff]
        %v332 = vld [vmem:[%s277 + $0x1a0] sm:$0xff]
        %v333 = vld [vmem:[%s277 + $0x1a8] sm:$0xff]
        %v334 = vld [vmem:[%s277 + $0x1b0] sm:$0xff]
        %v335 = vld [vmem:[%s277 + $0x1b8] sm:$0xff]
        %v336 = vld [vmem:[%s277 + $0x1c0] sm:$0xff]
        %v337 = vld [vmem:[%s277 + $0x1c8] sm:$0xff]
        %v338 = vld [vmem:[%s277 + $0x1d0] sm:$0xff]
        %v339 = vld [vmem:[%s277 + $0x1d8] sm:$0xff]
        %v340 = vld [vmem:[%s277 + $0x1e0] sm:$0xff]
        %v341 = vld [vmem:[%s277 + $0x1e8] sm:$0xff]
        %v342 = vld [vmem:[%s277 + $0x1f0] sm:$0xff]
        %v343 = vld [vmem:[%s277 + $0x1f8] sm:$0xff]
        %v344 = vld [vmem:[%s1] sm:$0xff]
        %v345 = vld [vmem:[%s1 + $0x8] sm:$0xff]
        %v346 = vld [vmem:[%s1 + $0x10] sm:$0xff]
        %v347 = vld [vmem:[%s1 + $0x18] sm:$0xff]
        %v348 = vld [vmem:[%s1 + $0x20] sm:$0xff]
        %v349 = vld [vmem:[%s1 + $0x28] sm:$0xff]
        %v350 = vld [vmem:[%s1 + $0x30] sm:$0xff]
        %v351 = vld [vmem:[%s1 + $0x38] sm:$0xff]
        %v352 = vld [vmem:[%s1 + $0x40] sm:$0xff]
        %v353 = vld [vmem:[%s1 + $0x48] sm:$0xff]
        %v354 = vld [vmem:[%s1 + $0x50] sm:$0xff]
        %v355 = vld [vmem:[%s1 + $0x58] sm:$0xff]
        %v356 = vld [vmem:[%s1 + $0x60] sm:$0xff]
        %v357 = vld [vmem:[%s1 + $0x68] sm:$0xff]
        %v358 = vld [vmem:[%s1 + $0x70] sm:$0xff]
        %v359 = vld [vmem:[%s1 + $0x78] sm:$0xff]
        %v360 = vld [vmem:[%s2] sm:$0x1]
        %v362 = vlaneseq
        %v363 = vshrl.u32 %v362, 7
        %v364 = vsub.s32 0, %v363
        %v365 = vrot.slane %v360, %v364
        %367 = vmatprep.subr.mxu0 0.0
        %368 = vmatpush1.msra.mxu0 %v344
        %369 = vmatprep.subr.mxu0 0.0
        %370 = vmatpush1.msra.mxu0 %v345
        %371 = vmatprep.subr.mxu0 0.0
        %372 = vmatpush1.msra.mxu0 %v346
        %373 = vmatprep.subr.mxu0 0.0
        %374 = vmatpush1.msra.mxu0 %v347
        %375 = vmatprep.subr.mxu0 0.0
        %376 = vmatpush1.msra.mxu0 %v348
        %377 = vmatprep.subr.mxu0 0.0
        %378 = vmatpush1.msra.mxu0 %v349
        %379 = vmatprep.subr.mxu0 0.0
        %380 = vmatpush1.msra.mxu0 %v350
        %381 = vmatprep.subr.mxu0 0.0
        %382 = vmatpush1.msra.mxu0 %v351
        %383 = vmatprep.subr.mxu0 0.0
        %384 = vmatpush1.msra.mxu0 %v352
        %385 = vmatprep.subr.mxu0 0.0
        %386 = vmatpush1.msra.mxu0 %v353
        %387 = vmatprep.subr.mxu0 0.0
        %388 = vmatpush1.msra.mxu0 %v354
        %389 = vmatprep.subr.mxu0 0.0
        %390 = vmatpush1.msra.mxu0 %v355
        %391 = vmatprep.subr.mxu0 0.0
        %392 = vmatpush1.msra.mxu0 %v356
        %393 = vmatprep.subr.mxu0 0.0
        %394 = vmatpush1.msra.mxu0 %v357
        %395 = vmatprep.subr.mxu0 0.0
        %396 = vmatpush1.msra.mxu0 %v358
        %397 = vmatprep.subr.mxu0 0.0
        %398 = vmatpush1.msra.mxu0 %v359
        %399 = vmatprep.subr.mxu0 0.0
        %400 = vmatpush1.msra.mxu0 0.0
        %401 = vmatprep.subr.mxu0 0.0
        %402 = vmatpush1.msra.mxu0 0.0
        %403 = vmatprep.subr.mxu0 0.0
        %404 = vmatpush1.msra.mxu0 0.0
        %405 = vmatprep.subr.mxu0 0.0
        %406 = vmatpush1.msra.mxu0 0.0
        %407 = vmatprep.subr.mxu0 0.0
        %408 = vmatpush1.msra.mxu0 0.0
        %409 = vmatprep.subr.mxu0 0.0
        %410 = vmatpush1.msra.mxu0 0.0
        %411 = vmatprep.subr.mxu0 0.0
        %412 = vmatpush1.msra.mxu0 0.0
        %413 = vmatprep.subr.mxu0 0.0
        %414 = vmatpush1.msra.mxu0 0.0
        %415 = vmatprep.subr.mxu0 0.0
        %416 = vmatpush1.msra.mxu0 0.0
        %417 = vmatprep.subr.mxu0 0.0
        %418 = vmatpush1.msra.mxu0 0.0
        %419 = vmatprep.subr.mxu0 0.0
        %420 = vmatpush1.msra.mxu0 0.0
        %421 = vmatprep.subr.mxu0 0.0
        %422 = vmatpush1.msra.mxu0 0.0
        %423 = vmatprep.subr.mxu0 0.0
        %424 = vmatpush1.msra.mxu0 0.0
        %425 = vmatprep.subr.mxu0 0.0
        %426 = vmatpush1.msra.mxu0 0.0
        %427 = vmatprep.subr.mxu0 0.0
        %428 = vmatpush1.msra.mxu0 0.0
        %429 = vmatprep.subr.mxu0 0.0
        %430 = vmatpush1.msra.mxu0 0.0
        %431 = vmatprep.mubr.f32.mxu0 0.0
        %432 = vmatmul.mubr.f32.gmra.mrb[0].mxu0 %v280
        %v433 = vpop.f32.mrb[0].mxu0
        %v434 = vadd.f32 %v365, %v433
        %v435 = vpop.f32.mrb[0].mxu0
        %436 = vmatprep.mubr.f32.mxu0 0.0
        %437 = vmatmul.mubr.f32.gmra.mrb[0].mxu0 %v281
        %v438 = vpop.f32.mrb[0].mxu0
        %v439 = vadd.f32 %v365, %v438
        %v440 = vpop.f32.mrb[0].mxu0
        %441 = vmatprep.mubr.f32.mxu0 0.0
        %442 = vmatmul.mubr.f32.gmra.mrb[0].mxu0 %v282
        %v443 = vpop.f32.mrb[0].mxu0
        %v444 = vadd.f32 %v365, %v443
        %v445 = vpop.f32.mrb[0].mxu0
        %446 = vmatprep.mubr.f32.mxu0 0.0
        %447 = vmatmul.mubr.f32.gmra.mrb[0].mxu0 %v283
        %v448 = vpop.f32.mrb[0].mxu0
        %v449 = vadd.f32 %v365, %v448
        %v450 = vpop.f32.mrb[0].mxu0
        %451 = vmatprep.mubr.f32.mxu0 0.0
        %452 = vmatmul.mubr.f32.gmra.mrb[0].mxu0 %v284
        %v453 = vpop.f32.mrb[0].mxu0
        %v454 = vadd.f32 %v365, %v453
        %v455 = vpop.f32.mrb[0].mxu0
        %456 = vmatprep.mubr.f32.mxu0 0.0
        %457 = vmatmul.mubr.f32.gmra.mrb[0].mxu0 %v285
        %v458 = vpop.f32.mrb[0].mxu0
        %v459 = vadd.f32 %v365, %v458
        %v460 = vpop.f32.mrb[0].mxu0
        %461 = vmatprep.mubr.f32.mxu0 0.0
        %462 = vmatmul.mubr.f32.gmra.mrb[0].mxu0 %v286
        %v463 = vpop.f32.mrb[0].mxu0
        %v464 = vadd.f32 %v365, %v463
        %v465 = vpop.f32.mrb[0].mxu0
        %466 = vmatprep.mubr.f32.mxu0 0.0
        %467 = vmatmul.mubr.f32.gmra.mrb[0].mxu0 %v287
        %v468 = vpop.f32.mrb[0].mxu0
        %v469 = vadd.f32 %v365, %v468
        %v470 = vpop.f32.mrb[0].mxu0
        %471 = vmatprep.mubr.f32.mxu0 0.0
        %472 = vmatmul.mubr.f32.gmra.mrb[0].mxu0 %v288
        %v473 = vpop.f32.mrb[0].mxu0
        %v474 = vadd.f32 %v365, %v473
        %v475 = vpop.f32.mrb[0].mxu0
        %476 = vmatprep.mubr.f32.mxu0 0.0
        %477 = vmatmul.mubr.f32.gmra.mrb[0].mxu0 %v289
        %v478 = vpop.f32.mrb[0].mxu0
        %v479 = vadd.f32 %v365, %v478
        %v480 = vpop.f32.mrb[0].mxu0
        %481 = vmatprep.mubr.f32.mxu0 0.0
        %482 = vmatmul.mubr.f32.gmra.mrb[0].mxu0 %v290
        %v483 = vpop.f32.mrb[0].mxu0
        %v484 = vadd.f32 %v365, %v483
        %v485 = vpop.f32.mrb[0].mxu0
        %486 = vmatprep.mubr.f32.mxu0 0.0
        %487 = vmatmul.mubr.f32.gmra.mrb[0].mxu0 %v291
        %v488 = vpop.f32.mrb[0].mxu0
        %v489 = vadd.f32 %v365, %v488
        %v490 = vpop.f32.mrb[0].mxu0
        %491 = vmatprep.mubr.f32.mxu0 0.0
        %492 = vmatmul.mubr.f32.gmra.mrb[0].mxu0 %v292
        %v493 = vpop.f32.mrb[0].mxu0
        %v494 = vadd.f32 %v365, %v493
        %v495 = vpop.f32.mrb[0].mxu0
        %496 = vmatprep.mubr.f32.mxu0 0.0
        %497 = vmatmul.mubr.f32.gmra.mrb[0].mxu0 %v293
        %v498 = vpop.f32.mrb[0].mxu0
        %v499 = vadd.f32 %v365, %v498
        %v500 = vpop.f32.mrb[0].mxu0
        %501 = vmatprep.mubr.f32.mxu0 0.0
        %502 = vmatmul.mubr.f32.gmra.mrb[0].mxu0 %v294
        %v503 = vpop.f32.mrb[0].mxu0
        %v504 = vadd.f32 %v365, %v503
        %v505 = vpop.f32.mrb[0].mxu0
        %506 = vmatprep.mubr.f32.mxu0 0.0
        %507 = vmatmul.mubr.f32.gmra.mrb[0].mxu0 %v295
        %v508 = vpop.f32.mrb[0].mxu0
        %v509 = vadd.f32 %v365, %v508
        %v510 = vpop.f32.mrb[0].mxu0
        %511 = vmatprep.mubr.f32.mxu0 0.0
        %512 = vmatmul.mubr.f32.gmra.mrb[0].mxu0 %v296
        %v513 = vpop.f32.mrb[0].mxu0
        %v514 = vadd.f32 %v365, %v513
        %v515 = vpop.f32.mrb[0].mxu0
        %516 = vmatprep.mubr.f32.mxu0 0.0
        %517 = vmatmul.mubr.f32.gmra.mrb[0].mxu0 %v297
        %v518 = vpop.f32.mrb[0].mxu0
        %v519 = vadd.f32 %v365, %v518
        %v520 = vpop.f32.mrb[0].mxu0
        %521 = vmatprep.mubr.f32.mxu0 0.0
        %522 = vmatmul.mubr.f32.gmra.mrb[0].mxu0 %v298
        %v523 = vpop.f32.mrb[0].mxu0
        %v524 = vadd.f32 %v365, %v523
        %v525 = vpop.f32.mrb[0].mxu0
        %526 = vmatprep.mubr.f32.mxu0 0.0
        %527 = vmatmul.mubr.f32.gmra.mrb[0].mxu0 %v299
        %v528 = vpop.f32.mrb[0].mxu0
        %v529 = vadd.f32 %v365, %v528
        %v530 = vpop.f32.mrb[0].mxu0
        %531 = vmatprep.mubr.f32.mxu0 0.0
        %532 = vmatmul.mubr.f32.gmra.mrb[0].mxu0 %v300
        %v533 = vpop.f32.mrb[0].mxu0
        %v534 = vadd.f32 %v365, %v533
        %v535 = vpop.f32.mrb[0].mxu0
        %536 = vmatprep.mubr.f32.mxu0 0.0
        %537 = vmatmul.mubr.f32.gmra.mrb[0].mxu0 %v301
        %v538 = vpop.f32.mrb[0].mxu0
        %v539 = vadd.f32 %v365, %v538
        %v540 = vpop.f32.mrb[0].mxu0
        %541 = vmatprep.mubr.f32.mxu0 0.0
        %542 = vmatmul.mubr.f32.gmra.mrb[0].mxu0 %v302
        %v543 = vpop.f32.mrb[0].mxu0
        %v544 = vadd.f32 %v365, %v543
        %v545 = vpop.f32.mrb[0].mxu0
        %546 = vmatprep.mubr.f32.mxu0 0.0
        %547 = vmatmul.mubr.f32.gmra.mrb[0].mxu0 %v303
        %v548 = vpop.f32.mrb[0].mxu0
        %v549 = vadd.f32 %v365, %v548
        %v550 = vpop.f32.mrb[0].mxu0
        %551 = vmatprep.mubr.f32.mxu0 0.0
        %552 = vmatmul.mubr.f32.gmra.mrb[0].mxu0 %v304
        %v553 = vpop.f32.mrb[0].mxu0
        %v554 = vadd.f32 %v365, %v553
        %v555 = vpop.f32.mrb[0].mxu0
        %556 = vmatprep.mubr.f32.mxu0 0.0
        %557 = vmatmul.mubr.f32.gmra.mrb[0].mxu0 %v305
        %v558 = vpop.f32.mrb[0].mxu0
        %v559 = vadd.f32 %v365, %v558
        %v560 = vpop.f32.mrb[0].mxu0
        %561 = vmatprep.mubr.f32.mxu0 0.0
        %562 = vmatmul.mubr.f32.gmra.mrb[0].mxu0 %v306
        %v563 = vpop.f32.mrb[0].mxu0
        %v564 = vadd.f32 %v365, %v563
        %v565 = vpop.f32.mrb[0].mxu0
        %566 = vmatprep.mubr.f32.mxu0 0.0
        %567 = vmatmul.mubr.f32.gmra.mrb[0].mxu0 %v307
        %v568 = vpop.f32.mrb[0].mxu0
        %v569 = vadd.f32 %v365, %v568
        %v570 = vpop.f32.mrb[0].mxu0
        %571 = vmatprep.mubr.f32.mxu0 0.0
        %572 = vmatmul.mubr.f32.gmra.mrb[0].mxu0 %v308
        %v573 = vpop.f32.mrb[0].mxu0
        %v574 = vadd.f32 %v365, %v573
        %v575 = vpop.f32.mrb[0].mxu0
        %576 = vmatprep.mubr.f32.mxu0 0.0
        %577 = vmatmul.mubr.f32.gmra.mrb[0].mxu0 %v309
        %v578 = vpop.f32.mrb[0].mxu0
        %v579 = vadd.f32 %v365, %v578
        %v580 = vpop.f32.mrb[0].mxu0
        %581 = vmatprep.mubr.f32.mxu0 0.0
        %582 = vmatmul.mubr.f32.gmra.mrb[0].mxu0 %v310
        %v583 = vpop.f32.mrb[0].mxu0
        %v584 = vadd.f32 %v365, %v583
        %v585 = vpop.f32.mrb[0].mxu0
        %586 = vmatprep.mubr.f32.mxu0 0.0
        %587 = vmatmul.mubr.f32.gmra.mrb[0].mxu0 %v311
        %v588 = vpop.f32.mrb[0].mxu0
        %v589 = vadd.f32 %v365, %v588
        %v590 = vpop.f32.mrb[0].mxu0
        %591 = vmatprep.mubr.f32.mxu0 0.0
        %592 = vmatmul.mubr.f32.gmra.mrb[0].mxu0 %v312
        %v593 = vpop.f32.mrb[0].mxu0
        %v594 = vadd.f32 %v365, %v593
        %v595 = vpop.f32.mrb[0].mxu0
        %596 = vmatprep.mubr.f32.mxu0 0.0
        %597 = vmatmul.mubr.f32.gmra.mrb[0].mxu0 %v313
        %v598 = vpop.f32.mrb[0].mxu0
        %v599 = vadd.f32 %v365, %v598
        %v600 = vpop.f32.mrb[0].mxu0
        %601 = vmatprep.mubr.f32.mxu0 0.0
        %602 = vmatmul.mubr.f32.gmra.mrb[0].mxu0 %v314
        %v603 = vpop.f32.mrb[0].mxu0
        %v604 = vadd.f32 %v365, %v603
        %v605 = vpop.f32.mrb[0].mxu0
        %606 = vmatprep.mubr.f32.mxu0 0.0
        %607 = vmatmul.mubr.f32.gmra.mrb[0].mxu0 %v315
        %v608 = vpop.f32.mrb[0].mxu0
        %v609 = vadd.f32 %v365, %v608
        %v610 = vpop.f32.mrb[0].mxu0
        %611 = vmatprep.mubr.f32.mxu0 0.0
        %612 = vmatmul.mubr.f32.gmra.mrb[0].mxu0 %v316
        %v613 = vpop.f32.mrb[0].mxu0
        %v614 = vadd.f32 %v365, %v613
        %v615 = vpop.f32.mrb[0].mxu0
        %616 = vmatprep.mubr.f32.mxu0 0.0
        %617 = vmatmul.mubr.f32.gmra.mrb[0].mxu0 %v317
        %v618 = vpop.f32.mrb[0].mxu0
        %v619 = vadd.f32 %v365, %v618
        %v620 = vpop.f32.mrb[0].mxu0
        %621 = vmatprep.mubr.f32.mxu0 0.0
        %622 = vmatmul.mubr.f32.gmra.mrb[0].mxu0 %v318
        %v623 = vpop.f32.mrb[0].mxu0
        %v624 = vadd.f32 %v365, %v623
        %v625 = vpop.f32.mrb[0].mxu0
        %626 = vmatprep.mubr.f32.mxu0 0.0
        %627 = vmatmul.mubr.f32.gmra.mrb[0].mxu0 %v319
        %v628 = vpop.f32.mrb[0].mxu0
        %v629 = vadd.f32 %v365, %v628
        %v630 = vpop.f32.mrb[0].mxu0
        %631 = vmatprep.mubr.f32.mxu0 0.0
        %632 = vmatmul.mubr.f32.gmra.mrb[0].mxu0 %v320
        %v633 = vpop.f32.mrb[0].mxu0
        %v634 = vadd.f32 %v365, %v633
        %v635 = vpop.f32.mrb[0].mxu0
        %636 = vmatprep.mubr.f32.mxu0 0.0
        %637 = vmatmul.mubr.f32.gmra.mrb[0].mxu0 %v321
        %v638 = vpop.f32.mrb[0].mxu0
        %v639 = vadd.f32 %v365, %v638
        %v640 = vpop.f32.mrb[0].mxu0
        %641 = vmatprep.mubr.f32.mxu0 0.0
        %642 = vmatmul.mubr.f32.gmra.mrb[0].mxu0 %v322
        %v643 = vpop.f32.mrb[0].mxu0
        %v644 = vadd.f32 %v365, %v643
        %v645 = vpop.f32.mrb[0].mxu0
        %646 = vmatprep.mubr.f32.mxu0 0.0
        %647 = vmatmul.mubr.f32.gmra.mrb[0].mxu0 %v323
        %v648 = vpop.f32.mrb[0].mxu0
        %v649 = vadd.f32 %v365, %v648
        %v650 = vpop.f32.mrb[0].mxu0
        %651 = vmatprep.mubr.f32.mxu0 0.0
        %652 = vmatmul.mubr.f32.gmra.mrb[0].mxu0 %v324
        %v653 = vpop.f32.mrb[0].mxu0
        %v654 = vadd.f32 %v365, %v653
        %v655 = vpop.f32.mrb[0].mxu0
        %656 = vmatprep.mubr.f32.mxu0 0.0
        %657 = vmatmul.mubr.f32.gmra.mrb[0].mxu0 %v325
        %v658 = vpop.f32.mrb[0].mxu0
        %v659 = vadd.f32 %v365, %v658
        %v660 = vpop.f32.mrb[0].mxu0
        %661 = vmatprep.mubr.f32.mxu0 0.0
        %662 = vmatmul.mubr.f32.gmra.mrb[0].mxu0 %v326
        %v663 = vpop.f32.mrb[0].mxu0
        %v664 = vadd.f32 %v365, %v663
        %v665 = vpop.f32.mrb[0].mxu0
        %666 = vmatprep.mubr.f32.mxu0 0.0
        %667 = vmatmul.mubr.f32.gmra.mrb[0].mxu0 %v327
        %v668 = vpop.f32.mrb[0].mxu0
        %v669 = vadd.f32 %v365, %v668
        %v670 = vpop.f32.mrb[0].mxu0
        %671 = vmatprep.mubr.f32.mxu0 0.0
        %672 = vmatmul.mubr.f32.gmra.mrb[0].mxu0 %v328
        %v673 = vpop.f32.mrb[0].mxu0
        %v674 = vadd.f32 %v365, %v673
        %v675 = vpop.f32.mrb[0].mxu0
        %676 = vmatprep.mubr.f32.mxu0 0.0
        %677 = vmatmul.mubr.f32.gmra.mrb[0].mxu0 %v329
        %v678 = vpop.f32.mrb[0].mxu0
        %v679 = vadd.f32 %v365, %v678
        %v680 = vpop.f32.mrb[0].mxu0
        %681 = vmatprep.mubr.f32.mxu0 0.0
        %682 = vmatmul.mubr.f32.gmra.mrb[0].mxu0 %v330
        %v683 = vpop.f32.mrb[0].mxu0
        %v684 = vadd.f32 %v365, %v683
        %v685 = vpop.f32.mrb[0].mxu0
        %686 = vmatprep.mubr.f32.mxu0 0.0
        %687 = vmatmul.mubr.f32.gmra.mrb[0].mxu0 %v331
        %v688 = vpop.f32.mrb[0].mxu0
        %v689 = vadd.f32 %v365, %v688
        %v690 = vpop.f32.mrb[0].mxu0
        %691 = vmatprep.mubr.f32.mxu0 0.0
        %692 = vmatmul.mubr.f32.gmra.mrb[0].mxu0 %v332
        %v693 = vpop.f32.mrb[0].mxu0
        %v694 = vadd.f32 %v365, %v693
        %v695 = vpop.f32.mrb[0].mxu0
        %696 = vmatprep.mubr.f32.mxu0 0.0
        %697 = vmatmul.mubr.f32.gmra.mrb[0].mxu0 %v333
        %v698 = vpop.f32.mrb[0].mxu0
        %v699 = vadd.f32 %v365, %v698
        %v700 = vpop.f32.mrb[0].mxu0
        %701 = vmatprep.mubr.f32.mxu0 0.0
        %702 = vmatmul.mubr.f32.gmra.mrb[0].mxu0 %v334
        %v703 = vpop.f32.mrb[0].mxu0
        %v704 = vadd.f32 %v365, %v703
        %v705 = vpop.f32.mrb[0].mxu0
        %706 = vmatprep.mubr.f32.mxu0 0.0
        %707 = vmatmul.mubr.f32.gmra.mrb[0].mxu0 %v335
        %v708 = vpop.f32.mrb[0].mxu0
        %v709 = vadd.f32 %v365, %v708
        %v710 = vpop.f32.mrb[0].mxu0
        %711 = vmatprep.mubr.f32.mxu0 0.0
        %712 = vmatmul.mubr.f32.gmra.mrb[0].mxu0 %v336
        %v713 = vpop.f32.mrb[0].mxu0
        %v714 = vadd.f32 %v365, %v713
        %v715 = vpop.f32.mrb[0].mxu0
        %716 = vmatprep.mubr.f32.mxu0 0.0
        %717 = vmatmul.mubr.f32.gmra.mrb[0].mxu0 %v337
        %v718 = vpop.f32.mrb[0].mxu0
        %v719 = vadd.f32 %v365, %v718
        %v720 = vpop.f32.mrb[0].mxu0
        %721 = vmatprep.mubr.f32.mxu0 0.0
        %722 = vmatmul.mubr.f32.gmra.mrb[0].mxu0 %v338
        %v723 = vpop.f32.mrb[0].mxu0
        %v724 = vadd.f32 %v365, %v723
        %v725 = vpop.f32.mrb[0].mxu0
        %726 = vmatprep.mubr.f32.mxu0 0.0
        %727 = vmatmul.mubr.f32.gmra.mrb[0].mxu0 %v339
        %v728 = vpop.f32.mrb[0].mxu0
        %v729 = vadd.f32 %v365, %v728
        %v730 = vpop.f32.mrb[0].mxu0
        %731 = vmatprep.mubr.f32.mxu0 0.0
        %732 = vmatmul.mubr.f32.gmra.mrb[0].mxu0 %v340
        %v733 = vpop.f32.mrb[0].mxu0
        %v734 = vadd.f32 %v365, %v733
        %v735 = vpop.f32.mrb[0].mxu0
        %736 = vmatprep.mubr.f32.mxu0 0.0
        %737 = vmatmul.mubr.f32.gmra.mrb[0].mxu0 %v341
        %v738 = vpop.f32.mrb[0].mxu0
        %v739 = vadd.f32 %v365, %v738
        %v740 = vpop.f32.mrb[0].mxu0
        %741 = vmatprep.mubr.f32.mxu0 0.0
        %742 = vmatmul.mubr.f32.gmra.mrb[0].mxu0 %v342
        %v743 = vpop.f32.mrb[0].mxu0
        %v744 = vadd.f32 %v365, %v743
        %v745 = vpop.f32.mrb[0].mxu0
        %746 = vmatprep.mubr.f32.mxu0 0.0
        %747 = vmatmul.mubr.f32.gmra.mrb[0].mxu0 %v343
        %v748 = vpop.f32.mrb[0].mxu0
        %v749 = vadd.f32 %v365, %v748
        %v750 = vpop.f32.mrb[0].mxu0
        %751 = vdwg.mxu0
        %v752 = vld [vmem:[%s3] sm:$0xff]
        %v753 = vld [vmem:[%s3 + $0x8] sm:$0xff]
        %v754 = vld [vmem:[%s3 + $0x10] sm:$0xff]
        %v755 = vld [vmem:[%s3 + $0x18] sm:$0xff]
        %v756 = vld [vmem:[%s3 + $0x20] sm:$0xff]
        %v757 = vld [vmem:[%s3 + $0x28] sm:$0xff]
        %v758 = vld [vmem:[%s3 + $0x30] sm:$0xff]
        %v759 = vld [vmem:[%s3 + $0x38] sm:$0xff]
        %v760 = vld [vmem:[%s3 + $0x40] sm:$0xff]
        %v761 = vld [vmem:[%s3 + $0x48] sm:$0xff]
        %v762 = vld [vmem:[%s3 + $0x50] sm:$0xff]
        %v763 = vld [vmem:[%s3 + $0x58] sm:$0xff]
        %v764 = vld [vmem:[%s3 + $0x60] sm:$0xff]
        %v765 = vld [vmem:[%s3 + $0x68] sm:$0xff]
        %v766 = vld [vmem:[%s3 + $0x70] sm:$0xff]
        %v767 = vld [vmem:[%s3 + $0x78] sm:$0xff]
        %768 = vmatprep.subr.mxu0 0.0
        %769 = vmatpush1.msra.mxu0 %v752
        %770 = vmatprep.subr.mxu0 0.0
        %771 = vmatpush1.msra.mxu0 %v753
        %772 = vmatprep.subr.mxu0 0.0
        %773 = vmatpush1.msra.mxu0 %v754
        %774 = vmatprep.subr.mxu0 0.0
        %775 = vmatpush1.msra.mxu0 %v755
        %776 = vmatprep.subr.mxu0 0.0
        %777 = vmatpush1.msra.mxu0 %v756
        %778 = vmatprep.subr.mxu0 0.0
        %779 = vmatpush1.msra.mxu0 %v757
        %780 = vmatprep.subr.mxu0 0.0
        %781 = vmatpush1.msra.mxu0 %v758
        %782 = vmatprep.subr.mxu0 0.0
        %783 = vmatpush1.msra.mxu0 %v759
        %784 = vmatprep.subr.mxu0 0.0
        %785 = vmatpush1.msra.mxu0 %v760
        %786 = vmatprep.subr.mxu0 0.0
        %787 = vmatpush1.msra.mxu0 %v761
        %788 = vmatprep.subr.mxu0 0.0
        %789 = vmatpush1.msra.mxu0 %v762
        %790 = vmatprep.subr.mxu0 0.0
        %791 = vmatpush1.msra.mxu0 %v763
        %792 = vmatprep.subr.mxu0 0.0
        %793 = vmatpush1.msra.mxu0 %v764
        %794 = vmatprep.subr.mxu0 0.0
        %795 = vmatpush1.msra.mxu0 %v765
        %796 = vmatprep.subr.mxu0 0.0
        %797 = vmatpush1.msra.mxu0 %v766
        %798 = vmatprep.subr.mxu0 0.0
        %799 = vmatpush1.msra.mxu0 %v767
        %800 = vmatprep.subr.mxu0 0.0
        %801 = vmatpush1.msra.mxu0 0.0
        %802 = vmatprep.subr.mxu0 0.0
        %803 = vmatpush1.msra.mxu0 0.0
        %804 = vmatprep.subr.mxu0 0.0
        %805 = vmatpush1.msra.mxu0 0.0
        %806 = vmatprep.subr.mxu0 0.0
        %807 = vmatpush1.msra.mxu0 0.0
        %808 = vmatprep.subr.mxu0 0.0
        %809 = vmatpush1.msra.mxu0 0.0
        %810 = vmatprep.subr.mxu0 0.0
        %811 = vmatpush1.msra.mxu0 0.0
        %812 = vmatprep.subr.mxu0 0.0
        %813 = vmatpush1.msra.mxu0 0.0
        %814 = vmatprep.subr.mxu0 0.0
        %815 = vmatpush1.msra.mxu0 0.0
        %816 = vmatprep.subr.mxu0 0.0
        %817 = vmatpush1.msra.mxu0 0.0
        %818 = vmatprep.subr.mxu0 0.0
        %819 = vmatpush1.msra.mxu0 0.0
        %820 = vmatprep.subr.mxu0 0.0
        %821 = vmatpush1.msra.mxu0 0.0
        %822 = vmatprep.subr.mxu0 0.0
        %823 = vmatpush1.msra.mxu0 0.0
        %824 = vmatprep.subr.mxu0 0.0
        %825 = vmatpush1.msra.mxu0 0.0
        %826 = vmatprep.subr.mxu0 0.0
        %827 = vmatpush1.msra.mxu0 0.0
        %828 = vmatprep.subr.mxu0 0.0
        %829 = vmatpush1.msra.mxu0 0.0
        %830 = vmatprep.subr.mxu0 0.0
        %831 = vmatpush1.msra.mxu0 0.0
        %832 = vmatprep.mubr.f32.mxu0 0.0
        %833 = vmatmul.mubr.f32.gmra.mrb[0].mxu0 %v434
        %v834 = vpop.f32.mrb[0].mxu0
        %v835 = vadd.f32 0.0, %v834
        %v836 = vpop.f32.mrb[0].mxu0
        %837 = vmatprep.mubr.f32.mxu0 0.0
        %838 = vmatmul.mubr.f32.gmra.mrb[0].mxu0 %v439
        %v839 = vpop.f32.mrb[0].mxu0
        %v840 = vadd.f32 0.0, %v839
        %v841 = vpop.f32.mrb[0].mxu0
        %842 = vmatprep.mubr.f32.mxu0 0.0
        %843 = vmatmul.mubr.f32.gmra.mrb[0].mxu0 %v444
        %v844 = vpop.f32.mrb[0].mxu0
        %v845 = vadd.f32 0.0, %v844
        %v846 = vpop.f32.mrb[0].mxu0
        %847 = vmatprep.mubr.f32.mxu0 0.0
        %848 = vmatmul.mubr.f32.gmra.mrb[0].mxu0 %v449
        %v849 = vpop.f32.mrb[0].mxu0
        %v850 = vadd.f32 0.0, %v849
        %v851 = vpop.f32.mrb[0].mxu0
        %852 = vmatprep.mubr.f32.mxu0 0.0
        %853 = vmatmul.mubr.f32.gmra.mrb[0].mxu0 %v454
        %v854 = vpop.f32.mrb[0].mxu0
        %v855 = vadd.f32 0.0, %v854
        %v856 = vpop.f32.mrb[0].mxu0
        %857 = vmatprep.mubr.f32.mxu0 0.0
        %858 = vmatmul.mubr.f32.gmra.mrb[0].mxu0 %v459
        %v859 = vpop.f32.mrb[0].mxu0
        %v860 = vadd.f32 0.0, %v859
        %v861 = vpop.f32.mrb[0].mxu0
        %862 = vmatprep.mubr.f32.mxu0 0.0
        %863 = vmatmul.mubr.f32.gmra.mrb[0].mxu0 %v464
        %v864 = vpop.f32.mrb[0].mxu0
        %v865 = vadd.f32 0.0, %v864
        %v866 = vpop.f32.mrb[0].mxu0
        %867 = vmatprep.mubr.f32.mxu0 0.0
        %868 = vmatmul.mubr.f32.gmra.mrb[0].mxu0 %v469
        %v869 = vpop.f32.mrb[0].mxu0
        %v870 = vadd.f32 0.0, %v869
        %v871 = vpop.f32.mrb[0].mxu0
        %872 = vmatprep.mubr.f32.mxu0 0.0
        %873 = vmatmul.mubr.f32.gmra.mrb[0].mxu0 %v474
        %v874 = vpop.f32.mrb[0].mxu0
        %v875 = vadd.f32 0.0, %v874
        %v876 = vpop.f32.mrb[0].mxu0
        %877 = vmatprep.mubr.f32.mxu0 0.0
        %878 = vmatmul.mubr.f32.gmra.mrb[0].mxu0 %v479
        %v879 = vpop.f32.mrb[0].mxu0
        %v880 = vadd.f32 0.0, %v879
        %v881 = vpop.f32.mrb[0].mxu0
        %882 = vmatprep.mubr.f32.mxu0 0.0
        %883 = vmatmul.mubr.f32.gmra.mrb[0].mxu0 %v484
        %v884 = vpop.f32.mrb[0].mxu0
        %v885 = vadd.f32 0.0, %v884
        %v886 = vpop.f32.mrb[0].mxu0
        %887 = vmatprep.mubr.f32.mxu0 0.0
        %888 = vmatmul.mubr.f32.gmra.mrb[0].mxu0 %v489
        %v889 = vpop.f32.mrb[0].mxu0
        %v890 = vadd.f32 0.0, %v889
        %v891 = vpop.f32.mrb[0].mxu0
        %892 = vmatprep.mubr.f32.mxu0 0.0
        %893 = vmatmul.mubr.f32.gmra.mrb[0].mxu0 %v494
        %v894 = vpop.f32.mrb[0].mxu0
        %v895 = vadd.f32 0.0, %v894
        %v896 = vpop.f32.mrb[0].mxu0
        %897 = vmatprep.mubr.f32.mxu0 0.0
        %898 = vmatmul.mubr.f32.gmra.mrb[0].mxu0 %v499
        %v899 = vpop.f32.mrb[0].mxu0
        %v900 = vadd.f32 0.0, %v899
        %v901 = vpop.f32.mrb[0].mxu0
        %902 = vmatprep.mubr.f32.mxu0 0.0
        %903 = vmatmul.mubr.f32.gmra.mrb[0].mxu0 %v504
        %v904 = vpop.f32.mrb[0].mxu0
        %v905 = vadd.f32 0.0, %v904
        %v906 = vpop.f32.mrb[0].mxu0
        %907 = vmatprep.mubr.f32.mxu0 0.0
        %908 = vmatmul.mubr.f32.gmra.mrb[0].mxu0 %v509
        %v909 = vpop.f32.mrb[0].mxu0
        %v910 = vadd.f32 0.0, %v909
        %v911 = vpop.f32.mrb[0].mxu0
        %912 = vmatprep.mubr.f32.mxu0 0.0
        %913 = vmatmul.mubr.f32.gmra.mrb[0].mxu0 %v514
        %v914 = vpop.f32.mrb[0].mxu0
        %v915 = vadd.f32 0.0, %v914
        %v916 = vpop.f32.mrb[0].mxu0
        %917 = vmatprep.mubr.f32.mxu0 0.0
        %918 = vmatmul.mubr.f32.gmra.mrb[0].mxu0 %v519
        %v919 = vpop.f32.mrb[0].mxu0
        %v920 = vadd.f32 0.0, %v919
        %v921 = vpop.f32.mrb[0].mxu0
        %922 = vmatprep.mubr.f32.mxu0 0.0
        %923 = vmatmul.mubr.f32.gmra.mrb[0].mxu0 %v524
        %v924 = vpop.f32.mrb[0].mxu0
        %v925 = vadd.f32 0.0, %v924
        %v926 = vpop.f32.mrb[0].mxu0
        %927 = vmatprep.mubr.f32.mxu0 0.0
        %928 = vmatmul.mubr.f32.gmra.mrb[0].mxu0 %v529
        %v929 = vpop.f32.mrb[0].mxu0
        %v930 = vadd.f32 0.0, %v929
        %v931 = vpop.f32.mrb[0].mxu0
        %932 = vmatprep.mubr.f32.mxu0 0.0
        %933 = vmatmul.mubr.f32.gmra.mrb[0].mxu0 %v534
        %v934 = vpop.f32.mrb[0].mxu0
        %v935 = vadd.f32 0.0, %v934
        %v936 = vpop.f32.mrb[0].mxu0
        %937 = vmatprep.mubr.f32.mxu0 0.0
        %938 = vmatmul.mubr.f32.gmra.mrb[0].mxu0 %v539
        %v939 = vpop.f32.mrb[0].mxu0
        %v940 = vadd.f32 0.0, %v939
        %v941 = vpop.f32.mrb[0].mxu0
        %942 = vmatprep.mubr.f32.mxu0 0.0
        %943 = vmatmul.mubr.f32.gmra.mrb[0].mxu0 %v544
        %v944 = vpop.f32.mrb[0].mxu0
        %v945 = vadd.f32 0.0, %v944
        %v946 = vpop.f32.mrb[0].mxu0
        %947 = vmatprep.mubr.f32.mxu0 0.0
        %948 = vmatmul.mubr.f32.gmra.mrb[0].mxu0 %v549
        %v949 = vpop.f32.mrb[0].mxu0
        %v950 = vadd.f32 0.0, %v949
        %v951 = vpop.f32.mrb[0].mxu0
        %952 = vmatprep.mubr.f32.mxu0 0.0
        %953 = vmatmul.mubr.f32.gmra.mrb[0].mxu0 %v554
        %v954 = vpop.f32.mrb[0].mxu0
        %v955 = vadd.f32 0.0, %v954
        %v956 = vpop.f32.mrb[0].mxu0
        %957 = vmatprep.mubr.f32.mxu0 0.0
        %958 = vmatmul.mubr.f32.gmra.mrb[0].mxu0 %v559
        %v959 = vpop.f32.mrb[0].mxu0
        %v960 = vadd.f32 0.0, %v959
        %v961 = vpop.f32.mrb[0].mxu0
        %962 = vmatprep.mubr.f32.mxu0 0.0
        %963 = vmatmul.mubr.f32.gmra.mrb[0].mxu0 %v564
        %v964 = vpop.f32.mrb[0].mxu0
        %v965 = vadd.f32 0.0, %v964
        %v966 = vpop.f32.mrb[0].mxu0
        %967 = vmatprep.mubr.f32.mxu0 0.0
        %968 = vmatmul.mubr.f32.gmra.mrb[0].mxu0 %v569
        %v969 = vpop.f32.mrb[0].mxu0
        %v970 = vadd.f32 0.0, %v969
        %v971 = vpop.f32.mrb[0].mxu0
        %972 = vmatprep.mubr.f32.mxu0 0.0
        %973 = vmatmul.mubr.f32.gmra.mrb[0].mxu0 %v574
        %v974 = vpop.f32.mrb[0].mxu0
        %v975 = vadd.f32 0.0, %v974
        %v976 = vpop.f32.mrb[0].mxu0
        %977 = vmatprep.mubr.f32.mxu0 0.0
        %978 = vmatmul.mubr.f32.gmra.mrb[0].mxu0 %v579
        %v979 = vpop.f32.mrb[0].mxu0
        %v980 = vadd.f32 0.0, %v979
        %v981 = vpop.f32.mrb[0].mxu0
        %982 = vmatprep.mubr.f32.mxu0 0.0
        %983 = vmatmul.mubr.f32.gmra.mrb[0].mxu0 %v584
        %v984 = vpop.f32.mrb[0].mxu0
        %v985 = vadd.f32 0.0, %v984
        %v986 = vpop.f32.mrb[0].mxu0
        %987 = vmatprep.mubr.f32.mxu0 0.0
        %988 = vmatmul.mubr.f32.gmra.mrb[0].mxu0 %v589
        %v989 = vpop.f32.mrb[0].mxu0
        %v990 = vadd.f32 0.0, %v989
        %v991 = vpop.f32.mrb[0].mxu0
        %992 = vmatprep.mubr.f32.mxu0 0.0
        %993 = vmatmul.mubr.f32.gmra.mrb[0].mxu0 %v594
        %v994 = vpop.f32.mrb[0].mxu0
        %v995 = vadd.f32 0.0, %v994
        %v996 = vpop.f32.mrb[0].mxu0
        %997 = vmatprep.mubr.f32.mxu0 0.0
        %998 = vmatmul.mubr.f32.gmra.mrb[0].mxu0 %v599
        %v999 = vpop.f32.mrb[0].mxu0
        %v1000 = vadd.f32 0.0, %v999
        %v1001 = vpop.f32.mrb[0].mxu0
        %1002 = vmatprep.mubr.f32.mxu0 0.0
        %1003 = vmatmul.mubr.f32.gmra.mrb[0].mxu0 %v604
        %v1004 = vpop.f32.mrb[0].mxu0
        %v1005 = vadd.f32 0.0, %v1004
        %v1006 = vpop.f32.mrb[0].mxu0
        %1007 = vmatprep.mubr.f32.mxu0 0.0
        %1008 = vmatmul.mubr.f32.gmra.mrb[0].mxu0 %v609
        %v1009 = vpop.f32.mrb[0].mxu0
        %v1010 = vadd.f32 0.0, %v1009
        %v1011 = vpop.f32.mrb[0].mxu0
        %1012 = vmatprep.mubr.f32.mxu0 0.0
        %1013 = vmatmul.mubr.f32.gmra.mrb[0].mxu0 %v614
        %v1014 = vpop.f32.mrb[0].mxu0
        %v1015 = vadd.f32 0.0, %v1014
        %v1016 = vpop.f32.mrb[0].mxu0
        %1017 = vmatprep.mubr.f32.mxu0 0.0
        %1018 = vmatmul.mubr.f32.gmra.mrb[0].mxu0 %v619
        %v1019 = vpop.f32.mrb[0].mxu0
        %v1020 = vadd.f32 0.0, %v1019
        %v1021 = vpop.f32.mrb[0].mxu0
        %1022 = vmatprep.mubr.f32.mxu0 0.0
        %1023 = vmatmul.mubr.f32.gmra.mrb[0].mxu0 %v624
        %v1024 = vpop.f32.mrb[0].mxu0
        %v1025 = vadd.f32 0.0, %v1024
        %v1026 = vpop.f32.mrb[0].mxu0
        %1027 = vmatprep.mubr.f32.mxu0 0.0
        %1028 = vmatmul.mubr.f32.gmra.mrb[0].mxu0 %v629
        %v1029 = vpop.f32.mrb[0].mxu0
        %v1030 = vadd.f32 0.0, %v1029
        %v1031 = vpop.f32.mrb[0].mxu0
        %1032 = vmatprep.mubr.f32.mxu0 0.0
        %1033 = vmatmul.mubr.f32.gmra.mrb[0].mxu0 %v634
        %v1034 = vpop.f32.mrb[0].mxu0
        %v1035 = vadd.f32 0.0, %v1034
        %v1036 = vpop.f32.mrb[0].mxu0
        %1037 = vmatprep.mubr.f32.mxu0 0.0
        %1038 = vmatmul.mubr.f32.gmra.mrb[0].mxu0 %v639
        %v1039 = vpop.f32.mrb[0].mxu0
        %v1040 = vadd.f32 0.0, %v1039
        %v1041 = vpop.f32.mrb[0].mxu0
        %1042 = vmatprep.mubr.f32.mxu0 0.0
        %1043 = vmatmul.mubr.f32.gmra.mrb[0].mxu0 %v644
        %v1044 = vpop.f32.mrb[0].mxu0
        %v1045 = vadd.f32 0.0, %v1044
        %v1046 = vpop.f32.mrb[0].mxu0
        %1047 = vmatprep.mubr.f32.mxu0 0.0
        %1048 = vmatmul.mubr.f32.gmra.mrb[0].mxu0 %v649
        %v1049 = vpop.f32.mrb[0].mxu0
        %v1050 = vadd.f32 0.0, %v1049
        %v1051 = vpop.f32.mrb[0].mxu0
        %1052 = vmatprep.mubr.f32.mxu0 0.0
        %1053 = vmatmul.mubr.f32.gmra.mrb[0].mxu0 %v654
        %v1054 = vpop.f32.mrb[0].mxu0
        %v1055 = vadd.f32 0.0, %v1054
        %v1056 = vpop.f32.mrb[0].mxu0
        %1057 = vmatprep.mubr.f32.mxu0 0.0
        %1058 = vmatmul.mubr.f32.gmra.mrb[0].mxu0 %v659
        %v1059 = vpop.f32.mrb[0].mxu0
        %v1060 = vadd.f32 0.0, %v1059
        %v1061 = vpop.f32.mrb[0].mxu0
        %1062 = vmatprep.mubr.f32.mxu0 0.0
        %1063 = vmatmul.mubr.f32.gmra.mrb[0].mxu0 %v664
        %v1064 = vpop.f32.mrb[0].mxu0
        %v1065 = vadd.f32 0.0, %v1064
        %v1066 = vpop.f32.mrb[0].mxu0
        %1067 = vmatprep.mubr.f32.mxu0 0.0
        %1068 = vmatmul.mubr.f32.gmra.mrb[0].mxu0 %v669
        %v1069 = vpop.f32.mrb[0].mxu0
        %v1070 = vadd.f32 0.0, %v1069
        %v1071 = vpop.f32.mrb[0].mxu0
        %1072 = vmatprep.mubr.f32.mxu0 0.0
        %1073 = vmatmul.mubr.f32.gmra.mrb[0].mxu0 %v674
        %v1074 = vpop.f32.mrb[0].mxu0
        %v1075 = vadd.f32 0.0, %v1074
        %v1076 = vpop.f32.mrb[0].mxu0
        %1077 = vmatprep.mubr.f32.mxu0 0.0
        %1078 = vmatmul.mubr.f32.gmra.mrb[0].mxu0 %v679
        %v1079 = vpop.f32.mrb[0].mxu0
        %v1080 = vadd.f32 0.0, %v1079
        %v1081 = vpop.f32.mrb[0].mxu0
        %1082 = vmatprep.mubr.f32.mxu0 0.0
        %1083 = vmatmul.mubr.f32.gmra.mrb[0].mxu0 %v684
        %v1084 = vpop.f32.mrb[0].mxu0
        %v1085 = vadd.f32 0.0, %v1084
        %v1086 = vpop.f32.mrb[0].mxu0
        %1087 = vmatprep.mubr.f32.mxu0 0.0
        %1088 = vmatmul.mubr.f32.gmra.mrb[0].mxu0 %v689
        %v1089 = vpop.f32.mrb[0].mxu0
        %v1090 = vadd.f32 0.0, %v1089
        %v1091 = vpop.f32.mrb[0].mxu0
        %1092 = vmatprep.mubr.f32.mxu0 0.0
        %1093 = vmatmul.mubr.f32.gmra.mrb[0].mxu0 %v694
        %v1094 = vpop.f32.mrb[0].mxu0
        %v1095 = vadd.f32 0.0, %v1094
        %v1096 = vpop.f32.mrb[0].mxu0
        %1097 = vmatprep.mubr.f32.mxu0 0.0
        %1098 = vmatmul.mubr.f32.gmra.mrb[0].mxu0 %v699
        %v1099 = vpop.f32.mrb[0].mxu0
        %v1100 = vadd.f32 0.0, %v1099
        %v1101 = vpop.f32.mrb[0].mxu0
        %1102 = vmatprep.mubr.f32.mxu0 0.0
        %1103 = vmatmul.mubr.f32.gmra.mrb[0].mxu0 %v704
        %v1104 = vpop.f32.mrb[0].mxu0
        %v1105 = vadd.f32 0.0, %v1104
        %v1106 = vpop.f32.mrb[0].mxu0
        %1107 = vmatprep.mubr.f32.mxu0 0.0
        %1108 = vmatmul.mubr.f32.gmra.mrb[0].mxu0 %v709
        %v1109 = vpop.f32.mrb[0].mxu0
        %v1110 = vadd.f32 0.0, %v1109
        %v1111 = vpop.f32.mrb[0].mxu0
        %1112 = vmatprep.mubr.f32.mxu0 0.0
        %1113 = vmatmul.mubr.f32.gmra.mrb[0].mxu0 %v714
        %v1114 = vpop.f32.mrb[0].mxu0
        %v1115 = vadd.f32 0.0, %v1114
        %v1116 = vpop.f32.mrb[0].mxu0
        %1117 = vmatprep.mubr.f32.mxu0 0.0
        %1118 = vmatmul.mubr.f32.gmra.mrb[0].mxu0 %v719
        %v1119 = vpop.f32.mrb[0].mxu0
        %v1120 = vadd.f32 0.0, %v1119
        %v1121 = vpop.f32.mrb[0].mxu0
        %1122 = vmatprep.mubr.f32.mxu0 0.0
        %1123 = vmatmul.mubr.f32.gmra.mrb[0].mxu0 %v724
        %v1124 = vpop.f32.mrb[0].mxu0
        %v1125 = vadd.f32 0.0, %v1124
        %v1126 = vpop.f32.mrb[0].mxu0
        %1127 = vmatprep.mubr.f32.mxu0 0.0
        %1128 = vmatmul.mubr.f32.gmra.mrb[0].mxu0 %v729
        %v1129 = vpop.f32.mrb[0].mxu0
        %v1130 = vadd.f32 0.0, %v1129
        %v1131 = vpop.f32.mrb[0].mxu0
        %1132 = vmatprep.mubr.f32.mxu0 0.0
        %1133 = vmatmul.mubr.f32.gmra.mrb[0].mxu0 %v734
        %v1134 = vpop.f32.mrb[0].mxu0
        %v1135 = vadd.f32 0.0, %v1134
        %v1136 = vpop.f32.mrb[0].mxu0
        %1137 = vmatprep.mubr.f32.mxu0 0.0
        %1138 = vmatmul.mubr.f32.gmra.mrb[0].mxu0 %v739
        %v1139 = vpop.f32.mrb[0].mxu0
        %v1140 = vadd.f32 0.0, %v1139
        %v1141 = vpop.f32.mrb[0].mxu0
        %1142 = vmatprep.mubr.f32.mxu0 0.0
        %1143 = vmatmul.mubr.f32.gmra.mrb[0].mxu0 %v744
        %v1144 = vpop.f32.mrb[0].mxu0
        %v1145 = vadd.f32 0.0, %v1144
        %v1146 = vpop.f32.mrb[0].mxu0
        %1147 = vmatprep.mubr.f32.mxu0 0.0
        %1148 = vmatmul.mubr.f32.gmra.mrb[0].mxu0 %v749
        %v1149 = vpop.f32.mrb[0].mxu0
        %v1150 = vadd.f32 0.0, %v1149
        %v1151 = vpop.f32.mrb[0].mxu0
        %1152 = vdwg.mxu0
        %vm1153 = vcmask 130048
        %v1154 = vsel %vm1153, %v835, -inf
        %1155 = vmax.xlane.f32.xlu0 %v1154
        %v1156 = vpop.xlane.xlu0 %1155
        %v1157 = vsel %vm1153, %v840, -inf
        %1158 = vmax.xlane.f32.xlu0 %v1157
        %v1159 = vpop.xlane.xlu0 %1158
        %v1160 = vsel %vm1153, %v845, -inf
        %1161 = vmax.xlane.f32.xlu0 %v1160
        %v1162 = vpop.xlane.xlu0 %1161
        %v1163 = vsel %vm1153, %v850, -inf
        %1164 = vmax.xlane.f32.xlu0 %v1163
        %v1165 = vpop.xlane.xlu0 %1164
        %v1166 = vsel %vm1153, %v855, -inf
        %1167 = vmax.xlane.f32.xlu0 %v1166
        %v1168 = vpop.xlane.xlu0 %1167
        %v1169 = vsel %vm1153, %v860, -inf
        %1170 = vmax.xlane.f32.xlu0 %v1169
        %v1171 = vpop.xlane.xlu0 %1170
        %v1172 = vsel %vm1153, %v865, -inf
        %1173 = vmax.xlane.f32.xlu0 %v1172
        %v1174 = vpop.xlane.xlu0 %1173
        %v1175 = vsel %vm1153, %v870, -inf
        %1176 = vmax.xlane.f32.xlu0 %v1175
        %v1177 = vpop.xlane.xlu0 %1176
        %v1178 = vsel %vm1153, %v875, -inf
        %1179 = vmax.xlane.f32.xlu0 %v1178
        %v1180 = vpop.xlane.xlu0 %1179
        %v1181 = vsel %vm1153, %v880, -inf
        %1182 = vmax.xlane.f32.xlu0 %v1181
        %v1183 = vpop.xlane.xlu0 %1182
        %v1184 = vsel %vm1153, %v885, -inf
        %1185 = vmax.xlane.f32.xlu0 %v1184
        %v1186 = vpop.xlane.xlu0 %1185
        %v1187 = vsel %vm1153, %v890, -inf
        %1188 = vmax.xlane.f32.xlu0 %v1187
        %v1189 = vpop.xlane.xlu0 %1188
        %v1190 = vsel %vm1153, %v895, -inf
        %1191 = vmax.xlane.f32.xlu0 %v1190
        %v1192 = vpop.xlane.xlu0 %1191
        %v1193 = vsel %vm1153, %v900, -inf
        %1194 = vmax.xlane.f32.xlu0 %v1193
        %v1195 = vpop.xlane.xlu0 %1194
        %v1196 = vsel %vm1153, %v905, -inf
        %1197 = vmax.xlane.f32.xlu0 %v1196
        %v1198 = vpop.xlane.xlu0 %1197
        %v1199 = vsel %vm1153, %v910, -inf
        %1200 = vmax.xlane.f32.xlu0 %v1199
        %v1201 = vpop.xlane.xlu0 %1200
        %v1202 = vsel %vm1153, %v915, -inf
        %1203 = vmax.xlane.f32.xlu0 %v1202
        %v1204 = vpop.xlane.xlu0 %1203
        %v1205 = vsel %vm1153, %v920, -inf
        %1206 = vmax.xlane.f32.xlu0 %v1205
        %v1207 = vpop.xlane.xlu0 %1206
        %v1208 = vsel %vm1153, %v925, -inf
        %1209 = vmax.xlane.f32.xlu0 %v1208
        %v1210 = vpop.xlane.xlu0 %1209
        %v1211 = vsel %vm1153, %v930, -inf
        %1212 = vmax.xlane.f32.xlu0 %v1211
        %v1213 = vpop.xlane.xlu0 %1212
        %v1214 = vsel %vm1153, %v935, -inf
        %1215 = vmax.xlane.f32.xlu0 %v1214
        %v1216 = vpop.xlane.xlu0 %1215
        %v1217 = vsel %vm1153, %v940, -inf
        %1218 = vmax.xlane.f32.xlu0 %v1217
        %v1219 = vpop.xlane.xlu0 %1218
        %v1220 = vsel %vm1153, %v945, -inf
        %1221 = vmax.xlane.f32.xlu0 %v1220
        %v1222 = vpop.xlane.xlu0 %1221
        %v1223 = vsel %vm1153, %v950, -inf
        %1224 = vmax.xlane.f32.xlu0 %v1223
        %v1225 = vpop.xlane.xlu0 %1224
        %v1226 = vsel %vm1153, %v955, -inf
        %1227 = vmax.xlane.f32.xlu0 %v1226
        %v1228 = vpop.xlane.xlu0 %1227
        %v1229 = vsel %vm1153, %v960, -inf
        %1230 = vmax.xlane.f32.xlu0 %v1229
        %v1231 = vpop.xlane.xlu0 %1230
        %v1232 = vsel %vm1153, %v965, -inf
        %1233 = vmax.xlane.f32.xlu0 %v1232
        %v1234 = vpop.xlane.xlu0 %1233
        %v1235 = vsel %vm1153, %v970, -inf
        %1236 = vmax.xlane.f32.xlu0 %v1235
        %v1237 = vpop.xlane.xlu0 %1236
        %v1238 = vsel %vm1153, %v975, -inf
        %1239 = vmax.xlane.f32.xlu0 %v1238
        %v1240 = vpop.xlane.xlu0 %1239
        %v1241 = vsel %vm1153, %v980, -inf
        %1242 = vmax.xlane.f32.xlu0 %v1241
        %v1243 = vpop.xlane.xlu0 %1242
        %v1244 = vsel %vm1153, %v985, -inf
        %1245 = vmax.xlane.f32.xlu0 %v1244
        %v1246 = vpop.xlane.xlu0 %1245
        %v1247 = vsel %vm1153, %v990, -inf
        %1248 = vmax.xlane.f32.xlu0 %v1247
        %v1249 = vpop.xlane.xlu0 %1248
        %v1250 = vsel %vm1153, %v995, -inf
        %1251 = vmax.xlane.f32.xlu0 %v1250
        %v1252 = vpop.xlane.xlu0 %1251
        %v1253 = vsel %vm1153, %v1000, -inf
        %1254 = vmax.xlane.f32.xlu0 %v1253
        %v1255 = vpop.xlane.xlu0 %1254
        %v1256 = vsel %vm1153, %v1005, -inf
        %1257 = vmax.xlane.f32.xlu0 %v1256
        %v1258 = vpop.xlane.xlu0 %1257
        %v1259 = vsel %vm1153, %v1010, -inf
        %1260 = vmax.xlane.f32.xlu0 %v1259
        %v1261 = vpop.xlane.xlu0 %1260
        %v1262 = vsel %vm1153, %v1015, -inf
        %1263 = vmax.xlane.f32.xlu0 %v1262
        %v1264 = vpop.xlane.xlu0 %1263
        %v1265 = vsel %vm1153, %v1020, -inf
        %1266 = vmax.xlane.f32.xlu0 %v1265
        %v1267 = vpop.xlane.xlu0 %1266
        %v1268 = vsel %vm1153, %v1025, -inf
        %1269 = vmax.xlane.f32.xlu0 %v1268
        %v1270 = vpop.xlane.xlu0 %1269
        %v1271 = vsel %vm1153, %v1030, -inf
        %1272 = vmax.xlane.f32.xlu0 %v1271
        %v1273 = vpop.xlane.xlu0 %1272
        %v1274 = vsel %vm1153, %v1035, -inf
        %1275 = vmax.xlane.f32.xlu0 %v1274
        %v1276 = vpop.xlane.xlu0 %1275
        %v1277 = vsel %vm1153, %v1040, -inf
        %1278 = vmax.xlane.f32.xlu0 %v1277
        %v1279 = vpop.xlane.xlu0 %1278
        %v1280 = vsel %vm1153, %v1045, -inf
        %1281 = vmax.xlane.f32.xlu0 %v1280
        %v1282 = vpop.xlane.xlu0 %1281
        %v1283 = vsel %vm1153, %v1050, -inf
        %1284 = vmax.xlane.f32.xlu0 %v1283
        %v1285 = vpop.xlane.xlu0 %1284
        %v1286 = vsel %vm1153, %v1055, -inf
        %1287 = vmax.xlane.f32.xlu0 %v1286
        %v1288 = vpop.xlane.xlu0 %1287
        %v1289 = vsel %vm1153, %v1060, -inf
        %1290 = vmax.xlane.f32.xlu0 %v1289
        %v1291 = vpop.xlane.xlu0 %1290
        %v1292 = vsel %vm1153, %v1065, -inf
        %1293 = vmax.xlane.f32.xlu0 %v1292
        %v1294 = vpop.xlane.xlu0 %1293
        %v1295 = vsel %vm1153, %v1070, -inf
        %1296 = vmax.xlane.f32.xlu0 %v1295
        %v1297 = vpop.xlane.xlu0 %1296
        %v1298 = vsel %vm1153, %v1075, -inf
        %1299 = vmax.xlane.f32.xlu0 %v1298
        %v1300 = vpop.xlane.xlu0 %1299
        %v1301 = vsel %vm1153, %v1080, -inf
        %1302 = vmax.xlane.f32.xlu0 %v1301
        %v1303 = vpop.xlane.xlu0 %1302
        %v1304 = vsel %vm1153, %v1085, -inf
        %1305 = vmax.xlane.f32.xlu0 %v1304
        %v1306 = vpop.xlane.xlu0 %1305
        %v1307 = vsel %vm1153, %v1090, -inf
        %1308 = vmax.xlane.f32.xlu0 %v1307
        %v1309 = vpop.xlane.xlu0 %1308
        %v1310 = vsel %vm1153, %v1095, -inf
        %1311 = vmax.xlane.f32.xlu0 %v1310
        %v1312 = vpop.xlane.xlu0 %1311
        %v1313 = vsel %vm1153, %v1100, -inf
        %1314 = vmax.xlane.f32.xlu0 %v1313
        %v1315 = vpop.xlane.xlu0 %1314
        %v1316 = vsel %vm1153, %v1105, -inf
        %1317 = vmax.xlane.f32.xlu0 %v1316
        %v1318 = vpop.xlane.xlu0 %1317
        %v1319 = vsel %vm1153, %v1110, -inf
        %1320 = vmax.xlane.f32.xlu0 %v1319
        %v1321 = vpop.xlane.xlu0 %1320
        %v1322 = vsel %vm1153, %v1115, -inf
        %1323 = vmax.xlane.f32.xlu0 %v1322
        %v1324 = vpop.xlane.xlu0 %1323
        %v1325 = vsel %vm1153, %v1120, -inf
        %1326 = vmax.xlane.f32.xlu0 %v1325
        %v1327 = vpop.xlane.xlu0 %1326
        %v1328 = vsel %vm1153, %v1125, -inf
        %1329 = vmax.xlane.f32.xlu0 %v1328
        %v1330 = vpop.xlane.xlu0 %1329
        %v1331 = vsel %vm1153, %v1130, -inf
        %1332 = vmax.xlane.f32.xlu0 %v1331
        %v1333 = vpop.xlane.xlu0 %1332
        %v1334 = vsel %vm1153, %v1135, -inf
        %1335 = vmax.xlane.f32.xlu0 %v1334
        %v1336 = vpop.xlane.xlu0 %1335
        %v1337 = vsel %vm1153, %v1140, -inf
        %1338 = vmax.xlane.f32.xlu0 %v1337
        %v1339 = vpop.xlane.xlu0 %1338
        %v1340 = vsel %vm1153, %v1145, -inf
        %1341 = vmax.xlane.f32.xlu0 %v1340
        %v1342 = vpop.xlane.xlu0 %1341
        %v1343 = vsel %vm1153, %v1150, -inf
        %1344 = vmax.xlane.f32.xlu0 %v1343
        %v1345 = vpop.xlane.xlu0 %1344
        %v1346 = vsub.f32 %v835, %v1156
        %v1347 = vsub.f32 %v840, %v1159
        %v1348 = vsub.f32 %v845, %v1162
        %v1349 = vsub.f32 %v850, %v1165
        %v1350 = vsub.f32 %v855, %v1168
        %v1351 = vsub.f32 %v860, %v1171
        %v1352 = vsub.f32 %v865, %v1174
        %v1353 = vsub.f32 %v870, %v1177
        %v1354 = vsub.f32 %v875, %v1180
        %v1355 = vsub.f32 %v880, %v1183
        %v1356 = vsub.f32 %v885, %v1186
        %v1357 = vsub.f32 %v890, %v1189
        %v1358 = vsub.f32 %v895, %v1192
        %v1359 = vsub.f32 %v900, %v1195
        %v1360 = vsub.f32 %v905, %v1198
        %v1361 = vsub.f32 %v910, %v1201
        %v1362 = vsub.f32 %v915, %v1204
        %v1363 = vsub.f32 %v920, %v1207
        %v1364 = vsub.f32 %v925, %v1210
        %v1365 = vsub.f32 %v930, %v1213
        %v1366 = vsub.f32 %v935, %v1216
        %v1367 = vsub.f32 %v940, %v1219
        %v1368 = vsub.f32 %v945, %v1222
        %v1369 = vsub.f32 %v950, %v1225
        %v1370 = vsub.f32 %v955, %v1228
        %v1371 = vsub.f32 %v960, %v1231
        %v1372 = vsub.f32 %v965, %v1234
        %v1373 = vsub.f32 %v970, %v1237
        %v1374 = vsub.f32 %v975, %v1240
        %v1375 = vsub.f32 %v980, %v1243
        %v1376 = vsub.f32 %v985, %v1246
        %v1377 = vsub.f32 %v990, %v1249
        %v1378 = vsub.f32 %v995, %v1252
        %v1379 = vsub.f32 %v1000, %v1255
        %v1380 = vsub.f32 %v1005, %v1258
        %v1381 = vsub.f32 %v1010, %v1261
        %v1382 = vsub.f32 %v1015, %v1264
        %v1383 = vsub.f32 %v1020, %v1267
        %v1384 = vsub.f32 %v1025, %v1270
        %v1385 = vsub.f32 %v1030, %v1273
        %v1386 = vsub.f32 %v1035, %v1276
        %v1387 = vsub.f32 %v1040, %v1279
        %v1388 = vsub.f32 %v1045, %v1282
        %v1389 = vsub.f32 %v1050, %v1285
        %v1390 = vsub.f32 %v1055, %v1288
        %v1391 = vsub.f32 %v1060, %v1291
        %v1392 = vsub.f32 %v1065, %v1294
        %v1393 = vsub.f32 %v1070, %v1297
        %v1394 = vsub.f32 %v1075, %v1300
        %v1395 = vsub.f32 %v1080, %v1303
        %v1396 = vsub.f32 %v1085, %v1306
        %v1397 = vsub.f32 %v1090, %v1309
        %v1398 = vsub.f32 %v1095, %v1312
        %v1399 = vsub.f32 %v1100, %v1315
        %v1400 = vsub.f32 %v1105, %v1318
        %v1401 = vsub.f32 %v1110, %v1321
        %v1402 = vsub.f32 %v1115, %v1324
        %v1403 = vsub.f32 %v1120, %v1327
        %v1404 = vsub.f32 %v1125, %v1330
        %v1405 = vsub.f32 %v1130, %v1333
        %v1406 = vsub.f32 %v1135, %v1336
        %v1407 = vsub.f32 %v1140, %v1339
        %v1408 = vsub.f32 %v1145, %v1342
        %v1409 = vsub.f32 %v1150, %v1345
        %v1410 = vmul.f32 %v1346, 1.442695
        %v1411 = vpow.pop %v1410
        %v1412 = vmul.f32 %v1347, 1.442695
        %v1413 = vpow.pop %v1412
        %v1414 = vmul.f32 %v1348, 1.442695
        %v1415 = vpow.pop %v1414
        %v1416 = vmul.f32 %v1349, 1.442695
        %v1417 = vpow.pop %v1416
        %v1418 = vmul.f32 %v1350, 1.442695
        %v1419 = vpow.pop %v1418
        %v1420 = vmul.f32 %v1351, 1.442695
        %v1421 = vpow.pop %v1420
        %v1422 = vmul.f32 %v1352, 1.442695
        %v1423 = vpow.pop %v1422
        %v1424 = vmul.f32 %v1353, 1.442695
        %v1425 = vpow.pop %v1424
        %v1426 = vmul.f32 %v1354, 1.442695
        %v1427 = vpow.pop %v1426
        %v1428 = vmul.f32 %v1355, 1.442695
        %v1429 = vpow.pop %v1428
        %v1430 = vmul.f32 %v1356, 1.442695
        %v1431 = vpow.pop %v1430
        %v1432 = vmul.f32 %v1357, 1.442695
        %v1433 = vpow.pop %v1432
        %v1434 = vmul.f32 %v1358, 1.442695
        %v1435 = vpow.pop %v1434
        %v1436 = vmul.f32 %v1359, 1.442695
        %v1437 = vpow.pop %v1436
        %v1438 = vmul.f32 %v1360, 1.442695
        %v1439 = vpow.pop %v1438
        %v1440 = vmul.f32 %v1361, 1.442695
        %v1441 = vpow.pop %v1440
        %v1442 = vmul.f32 %v1362, 1.442695
        %v1443 = vpow.pop %v1442
        %v1444 = vmul.f32 %v1363, 1.442695
        %v1445 = vpow.pop %v1444
        %v1446 = vmul.f32 %v1364, 1.442695
        %v1447 = vpow.pop %v1446
        %v1448 = vmul.f32 %v1365, 1.442695
        %v1449 = vpow.pop %v1448
        %v1450 = vmul.f32 %v1366, 1.442695
        %v1451 = vpow.pop %v1450
        %v1452 = vmul.f32 %v1367, 1.442695
        %v1453 = vpow.pop %v1452
        %v1454 = vmul.f32 %v1368, 1.442695
        %v1455 = vpow.pop %v1454
        %v1456 = vmul.f32 %v1369, 1.442695
        %v1457 = vpow.pop %v1456
        %v1458 = vmul.f32 %v1370, 1.442695
        %v1459 = vpow.pop %v1458
        %v1460 = vmul.f32 %v1371, 1.442695
        %v1461 = vpow.pop %v1460
        %v1462 = vmul.f32 %v1372, 1.442695
        %v1463 = vpow.pop %v1462
        %v1464 = vmul.f32 %v1373, 1.442695
        %v1465 = vpow.pop %v1464
        %v1466 = vmul.f32 %v1374, 1.442695
        %v1467 = vpow.pop %v1466
        %v1468 = vmul.f32 %v1375, 1.442695
        %v1469 = vpow.pop %v1468
        %v1470 = vmul.f32 %v1376, 1.442695
        %v1471 = vpow.pop %v1470
        %v1472 = vmul.f32 %v1377, 1.442695
        %v1473 = vpow.pop %v1472
        %v1474 = vmul.f32 %v1378, 1.442695
        %v1475 = vpow.pop %v1474
        %v1476 = vmul.f32 %v1379, 1.442695
        %v1477 = vpow.pop %v1476
        %v1478 = vmul.f32 %v1380, 1.442695
        %v1479 = vpow.pop %v1478
        %v1480 = vmul.f32 %v1381, 1.442695
        %v1481 = vpow.pop %v1480
        %v1482 = vmul.f32 %v1382, 1.442695
        %v1483 = vpow.pop %v1482
        %v1484 = vmul.f32 %v1383, 1.442695
        %v1485 = vpow.pop %v1484
        %v1486 = vmul.f32 %v1384, 1.442695
        %v1487 = vpow.pop %v1486
        %v1488 = vmul.f32 %v1385, 1.442695
        %v1489 = vpow.pop %v1488
        %v1490 = vmul.f32 %v1386, 1.442695
        %v1491 = vpow.pop %v1490
        %v1492 = vmul.f32 %v1387, 1.442695
        %v1493 = vpow.pop %v1492
        %v1494 = vmul.f32 %v1388, 1.442695
        %v1495 = vpow.pop %v1494
        %v1496 = vmul.f32 %v1389, 1.442695
        %v1497 = vpow.pop %v1496
        %v1498 = vmul.f32 %v1390, 1.442695
        %v1499 = vpow.pop %v1498
        %v1500 = vmul.f32 %v1391, 1.442695
        %v1501 = vpow.pop %v1500
        %v1502 = vmul.f32 %v1392, 1.442695
        %v1503 = vpow.pop %v1502
        %v1504 = vmul.f32 %v1393, 1.442695
        %v1505 = vpow.pop %v1504
        %v1506 = vmul.f32 %v1394, 1.442695
        %v1507 = vpow.pop %v1506
        %v1508 = vmul.f32 %v1395, 1.442695
        %v1509 = vpow.pop %v1508
        %v1510 = vmul.f32 %v1396, 1.442695
        %v1511 = vpow.pop %v1510
        %v1512 = vmul.f32 %v1397, 1.442695
        %v1513 = vpow.pop %v1512
        %v1514 = vmul.f32 %v1398, 1.442695
        %v1515 = vpow.pop %v1514
        %v1516 = vmul.f32 %v1399, 1.442695
        %v1517 = vpow.pop %v1516
        %v1518 = vmul.f32 %v1400, 1.442695
        %v1519 = vpow.pop %v1518
        %v1520 = vmul.f32 %v1401, 1.442695
        %v1521 = vpow.pop %v1520
        %v1522 = vmul.f32 %v1402, 1.442695
        %v1523 = vpow.pop %v1522
        %v1524 = vmul.f32 %v1403, 1.442695
        %v1525 = vpow.pop %v1524
        %v1526 = vmul.f32 %v1404, 1.442695
        %v1527 = vpow.pop %v1526
        %v1528 = vmul.f32 %v1405, 1.442695
        %v1529 = vpow.pop %v1528
        %v1530 = vmul.f32 %v1406, 1.442695
        %v1531 = vpow.pop %v1530
        %v1532 = vmul.f32 %v1407, 1.442695
        %v1533 = vpow.pop %v1532
        %v1534 = vmul.f32 %v1408, 1.442695
        %v1535 = vpow.pop %v1534
        %v1536 = vmul.f32 %v1409, 1.442695
        %v1537 = vpow.pop %v1536
        %v1538 = vsel %vm1153, %v1411, 0.0
        %1539 = vadd.xlane.f32.xlu0 %v1538
        %v1540 = vpop.xlane.xlu0 %1539
        %v1541 = vsel %vm1153, %v1413, 0.0
        %1542 = vadd.xlane.f32.xlu0 %v1541
        %v1543 = vpop.xlane.xlu0 %1542
        %v1544 = vsel %vm1153, %v1415, 0.0
        %1545 = vadd.xlane.f32.xlu0 %v1544
        %v1546 = vpop.xlane.xlu0 %1545
        %v1547 = vsel %vm1153, %v1417, 0.0
        %1548 = vadd.xlane.f32.xlu0 %v1547
        %v1549 = vpop.xlane.xlu0 %1548
        %v1550 = vsel %vm1153, %v1419, 0.0
        %1551 = vadd.xlane.f32.xlu0 %v1550
        %v1552 = vpop.xlane.xlu0 %1551
        %v1553 = vsel %vm1153, %v1421, 0.0
        %1554 = vadd.xlane.f32.xlu0 %v1553
        %v1555 = vpop.xlane.xlu0 %1554
        %v1556 = vsel %vm1153, %v1423, 0.0
        %1557 = vadd.xlane.f32.xlu0 %v1556
        %v1558 = vpop.xlane.xlu0 %1557
        %v1559 = vsel %vm1153, %v1425, 0.0
        %1560 = vadd.xlane.f32.xlu0 %v1559
        %v1561 = vpop.xlane.xlu0 %1560
        %v1562 = vsel %vm1153, %v1427, 0.0
        %1563 = vadd.xlane.f32.xlu0 %v1562
        %v1564 = vpop.xlane.xlu0 %1563
        %v1565 = vsel %vm1153, %v1429, 0.0
        %1566 = vadd.xlane.f32.xlu0 %v1565
        %v1567 = vpop.xlane.xlu0 %1566
        %v1568 = vsel %vm1153, %v1431, 0.0
        %1569 = vadd.xlane.f32.xlu0 %v1568
        %v1570 = vpop.xlane.xlu0 %1569
        %v1571 = vsel %vm1153, %v1433, 0.0
        %1572 = vadd.xlane.f32.xlu0 %v1571
        %v1573 = vpop.xlane.xlu0 %1572
        %v1574 = vsel %vm1153, %v1435, 0.0
        %1575 = vadd.xlane.f32.xlu0 %v1574
        %v1576 = vpop.xlane.xlu0 %1575
        %v1577 = vsel %vm1153, %v1437, 0.0
        %1578 = vadd.xlane.f32.xlu0 %v1577
        %v1579 = vpop.xlane.xlu0 %1578
        %v1580 = vsel %vm1153, %v1439, 0.0
        %1581 = vadd.xlane.f32.xlu0 %v1580
        %v1582 = vpop.xlane.xlu0 %1581
        %v1583 = vsel %vm1153, %v1441, 0.0
        %1584 = vadd.xlane.f32.xlu0 %v1583
        %v1585 = vpop.xlane.xlu0 %1584
        %v1586 = vsel %vm1153, %v1443, 0.0
        %1587 = vadd.xlane.f32.xlu0 %v1586
        %v1588 = vpop.xlane.xlu0 %1587
        %v1589 = vsel %vm1153, %v1445, 0.0
        %1590 = vadd.xlane.f32.xlu0 %v1589
        %v1591 = vpop.xlane.xlu0 %1590
        %v1592 = vsel %vm1153, %v1447, 0.0
        %1593 = vadd.xlane.f32.xlu0 %v1592
        %v1594 = vpop.xlane.xlu0 %1593
        %v1595 = vsel %vm1153, %v1449, 0.0
        %1596 = vadd.xlane.f32.xlu0 %v1595
        %v1597 = vpop.xlane.xlu0 %1596
        %v1598 = vsel %vm1153, %v1451, 0.0
        %1599 = vadd.xlane.f32.xlu0 %v1598
        %v1600 = vpop.xlane.xlu0 %1599
        %v1601 = vsel %vm1153, %v1453, 0.0
        %1602 = vadd.xlane.f32.xlu0 %v1601
        %v1603 = vpop.xlane.xlu0 %1602
        %v1604 = vsel %vm1153, %v1455, 0.0
        %1605 = vadd.xlane.f32.xlu0 %v1604
        %v1606 = vpop.xlane.xlu0 %1605
        %v1607 = vsel %vm1153, %v1457, 0.0
        %1608 = vadd.xlane.f32.xlu0 %v1607
        %v1609 = vpop.xlane.xlu0 %1608
        %v1610 = vsel %vm1153, %v1459, 0.0
        %1611 = vadd.xlane.f32.xlu0 %v1610
        %v1612 = vpop.xlane.xlu0 %1611
        %v1613 = vsel %vm1153, %v1461, 0.0
        %1614 = vadd.xlane.f32.xlu0 %v1613
        %v1615 = vpop.xlane.xlu0 %1614
        %v1616 = vsel %vm1153, %v1463, 0.0
        %1617 = vadd.xlane.f32.xlu0 %v1616
        %v1618 = vpop.xlane.xlu0 %1617
        %v1619 = vsel %vm1153, %v1465, 0.0
        %1620 = vadd.xlane.f32.xlu0 %v1619
        %v1621 = vpop.xlane.xlu0 %1620
        %v1622 = vsel %vm1153, %v1467, 0.0
        %1623 = vadd.xlane.f32.xlu0 %v1622
        %v1624 = vpop.xlane.xlu0 %1623
        %v1625 = vsel %vm1153, %v1469, 0.0
        %1626 = vadd.xlane.f32.xlu0 %v1625
        %v1627 = vpop.xlane.xlu0 %1626
        %v1628 = vsel %vm1153, %v1471, 0.0
        %1629 = vadd.xlane.f32.xlu0 %v1628
        %v1630 = vpop.xlane.xlu0 %1629
        %v1631 = vsel %vm1153, %v1473, 0.0
        %1632 = vadd.xlane.f32.xlu0 %v1631
        %v1633 = vpop.xlane.xlu0 %1632
        %v1634 = vsel %vm1153, %v1475, 0.0
        %1635 = vadd.xlane.f32.xlu0 %v1634
        %v1636 = vpop.xlane.xlu0 %1635
        %v1637 = vsel %vm1153, %v1477, 0.0
        %1638 = vadd.xlane.f32.xlu0 %v1637
        %v1639 = vpop.xlane.xlu0 %1638
        %v1640 = vsel %vm1153, %v1479, 0.0
        %1641 = vadd.xlane.f32.xlu0 %v1640
        %v1642 = vpop.xlane.xlu0 %1641
        %v1643 = vsel %vm1153, %v1481, 0.0
        %1644 = vadd.xlane.f32.xlu0 %v1643
        %v1645 = vpop.xlane.xlu0 %1644
        %v1646 = vsel %vm1153, %v1483, 0.0
        %1647 = vadd.xlane.f32.xlu0 %v1646
        %v1648 = vpop.xlane.xlu0 %1647
        %v1649 = vsel %vm1153, %v1485, 0.0
        %1650 = vadd.xlane.f32.xlu0 %v1649
        %v1651 = vpop.xlane.xlu0 %1650
        %v1652 = vsel %vm1153, %v1487, 0.0
        %1653 = vadd.xlane.f32.xlu0 %v1652
        %v1654 = vpop.xlane.xlu0 %1653
        %v1655 = vsel %vm1153, %v1489, 0.0
        %1656 = vadd.xlane.f32.xlu0 %v1655
        %v1657 = vpop.xlane.xlu0 %1656
        %v1658 = vsel %vm1153, %v1491, 0.0
        %1659 = vadd.xlane.f32.xlu0 %v1658
        %v1660 = vpop.xlane.xlu0 %1659
        %v1661 = vsel %vm1153, %v1493, 0.0
        %1662 = vadd.xlane.f32.xlu0 %v1661
        %v1663 = vpop.xlane.xlu0 %1662
        %v1664 = vsel %vm1153, %v1495, 0.0
        %1665 = vadd.xlane.f32.xlu0 %v1664
        %v1666 = vpop.xlane.xlu0 %1665
        %v1667 = vsel %vm1153, %v1497, 0.0
        %1668 = vadd.xlane.f32.xlu0 %v1667
        %v1669 = vpop.xlane.xlu0 %1668
        %v1670 = vsel %vm1153, %v1499, 0.0
        %1671 = vadd.xlane.f32.xlu0 %v1670
        %v1672 = vpop.xlane.xlu0 %1671
        %v1673 = vsel %vm1153, %v1501, 0.0
        %1674 = vadd.xlane.f32.xlu0 %v1673
        %v1675 = vpop.xlane.xlu0 %1674
        %v1676 = vsel %vm1153, %v1503, 0.0
        %1677 = vadd.xlane.f32.xlu0 %v1676
        %v1678 = vpop.xlane.xlu0 %1677
        %v1679 = vsel %vm1153, %v1505, 0.0
        %1680 = vadd.xlane.f32.xlu0 %v1679
        %v1681 = vpop.xlane.xlu0 %1680
        %v1682 = vsel %vm1153, %v1507, 0.0
        %1683 = vadd.xlane.f32.xlu0 %v1682
        %v1684 = vpop.xlane.xlu0 %1683
        %v1685 = vsel %vm1153, %v1509, 0.0
        %1686 = vadd.xlane.f32.xlu0 %v1685
        %v1687 = vpop.xlane.xlu0 %1686
        %v1688 = vsel %vm1153, %v1511, 0.0
        %1689 = vadd.xlane.f32.xlu0 %v1688
        %v1690 = vpop.xlane.xlu0 %1689
        %v1691 = vsel %vm1153, %v1513, 0.0
        %1692 = vadd.xlane.f32.xlu0 %v1691
        %v1693 = vpop.xlane.xlu0 %1692
        %v1694 = vsel %vm1153, %v1515, 0.0
        %1695 = vadd.xlane.f32.xlu0 %v1694
        %v1696 = vpop.xlane.xlu0 %1695
        %v1697 = vsel %vm1153, %v1517, 0.0
        %1698 = vadd.xlane.f32.xlu0 %v1697
        %v1699 = vpop.xlane.xlu0 %1698
        %v1700 = vsel %vm1153, %v1519, 0.0
        %1701 = vadd.xlane.f32.xlu0 %v1700
        %v1702 = vpop.xlane.xlu0 %1701
        %v1703 = vsel %vm1153, %v1521, 0.0
        %1704 = vadd.xlane.f32.xlu0 %v1703
        %v1705 = vpop.xlane.xlu0 %1704
        %v1706 = vsel %vm1153, %v1523, 0.0
        %1707 = vadd.xlane.f32.xlu0 %v1706
        %v1708 = vpop.xlane.xlu0 %1707
        %v1709 = vsel %vm1153, %v1525, 0.0
        %1710 = vadd.xlane.f32.xlu0 %v1709
        %v1711 = vpop.xlane.xlu0 %1710
        %v1712 = vsel %vm1153, %v1527, 0.0
        %1713 = vadd.xlane.f32.xlu0 %v1712
        %v1714 = vpop.xlane.xlu0 %1713
        %v1715 = vsel %vm1153, %v1529, 0.0
        %1716 = vadd.xlane.f32.xlu0 %v1715
        %v1717 = vpop.xlane.xlu0 %1716
        %v1718 = vsel %vm1153, %v1531, 0.0
        %1719 = vadd.xlane.f32.xlu0 %v1718
        %v1720 = vpop.xlane.xlu0 %1719
        %v1721 = vsel %vm1153, %v1533, 0.0
        %1722 = vadd.xlane.f32.xlu0 %v1721
        %v1723 = vpop.xlane.xlu0 %1722
        %v1724 = vsel %vm1153, %v1535, 0.0
        %1725 = vadd.xlane.f32.xlu0 %v1724
        %v1726 = vpop.xlane.xlu0 %1725
        %v1727 = vsel %vm1153, %v1537, 0.0
        %1728 = vadd.xlane.f32.xlu0 %v1727
        %v1729 = vpop.xlane.xlu0 %1728
        %v1730 = vrcp.pop %v1540
        %v1731 = vmul.f32 %v1411, %v1730
        %v1732 = vrcp.pop %v1543
        %v1733 = vmul.f32 %v1413, %v1732
        %v1734 = vrcp.pop %v1546
        %v1735 = vmul.f32 %v1415, %v1734
        %v1736 = vrcp.pop %v1549
        %v1737 = vmul.f32 %v1417, %v1736
        %v1738 = vrcp.pop %v1552
        %v1739 = vmul.f32 %v1419, %v1738
        %v1740 = vrcp.pop %v1555
        %v1741 = vmul.f32 %v1421, %v1740
        %v1742 = vrcp.pop %v1558
        %v1743 = vmul.f32 %v1423, %v1742
        %v1744 = vrcp.pop %v1561
        %v1745 = vmul.f32 %v1425, %v1744
        %v1746 = vrcp.pop %v1564
        %v1747 = vmul.f32 %v1427, %v1746
        %v1748 = vrcp.pop %v1567
        %v1749 = vmul.f32 %v1429, %v1748
        %v1750 = vrcp.pop %v1570
        %v1751 = vmul.f32 %v1431, %v1750
        %v1752 = vrcp.pop %v1573
        %v1753 = vmul.f32 %v1433, %v1752
        %v1754 = vrcp.pop %v1576
        %v1755 = vmul.f32 %v1435, %v1754
        %v1756 = vrcp.pop %v1579
        %v1757 = vmul.f32 %v1437, %v1756
        %v1758 = vrcp.pop %v1582
        %v1759 = vmul.f32 %v1439, %v1758
        %v1760 = vrcp.pop %v1585
        %v1761 = vmul.f32 %v1441, %v1760
        %v1762 = vrcp.pop %v1588
        %v1763 = vmul.f32 %v1443, %v1762
        %v1764 = vrcp.pop %v1591
        %v1765 = vmul.f32 %v1445, %v1764
        %v1766 = vrcp.pop %v1594
        %v1767 = vmul.f32 %v1447, %v1766
        %v1768 = vrcp.pop %v1597
        %v1769 = vmul.f32 %v1449, %v1768
        %v1770 = vrcp.pop %v1600
        %v1771 = vmul.f32 %v1451, %v1770
        %v1772 = vrcp.pop %v1603
        %v1773 = vmul.f32 %v1453, %v1772
        %v1774 = vrcp.pop %v1606
        %v1775 = vmul.f32 %v1455, %v1774
        %v1776 = vrcp.pop %v1609
        %v1777 = vmul.f32 %v1457, %v1776
        %v1778 = vrcp.pop %v1612
        %v1779 = vmul.f32 %v1459, %v1778
        %v1780 = vrcp.pop %v1615
        %v1781 = vmul.f32 %v1461, %v1780
        %v1782 = vrcp.pop %v1618
        %v1783 = vmul.f32 %v1463, %v1782
        %v1784 = vrcp.pop %v1621
        %v1785 = vmul.f32 %v1465, %v1784
        %v1786 = vrcp.pop %v1624
        %v1787 = vmul.f32 %v1467, %v1786
        %v1788 = vrcp.pop %v1627
        %v1789 = vmul.f32 %v1469, %v1788
        %v1790 = vrcp.pop %v1630
        %v1791 = vmul.f32 %v1471, %v1790
        %v1792 = vrcp.pop %v1633
        %v1793 = vmul.f32 %v1473, %v1792
        %v1794 = vrcp.pop %v1636
        %v1795 = vmul.f32 %v1475, %v1794
        %v1796 = vrcp.pop %v1639
        %v1797 = vmul.f32 %v1477, %v1796
        %v1798 = vrcp.pop %v1642
        %v1799 = vmul.f32 %v1479, %v1798
        %v1800 = vrcp.pop %v1645
        %v1801 = vmul.f32 %v1481, %v1800
        %v1802 = vrcp.pop %v1648
        %v1803 = vmul.f32 %v1483, %v1802
        %v1804 = vrcp.pop %v1651
        %v1805 = vmul.f32 %v1485, %v1804
        %v1806 = vrcp.pop %v1654
        %v1807 = vmul.f32 %v1487, %v1806
        %v1808 = vrcp.pop %v1657
        %v1809 = vmul.f32 %v1489, %v1808
        %v1810 = vrcp.pop %v1660
        %v1811 = vmul.f32 %v1491, %v1810
        %v1812 = vrcp.pop %v1663
        %v1813 = vmul.f32 %v1493, %v1812
        %v1814 = vrcp.pop %v1666
        %v1815 = vmul.f32 %v1495, %v1814
        %v1816 = vrcp.pop %v1669
        %v1817 = vmul.f32 %v1497, %v1816
        %v1818 = vrcp.pop %v1672
        %v1819 = vmul.f32 %v1499, %v1818
        %v1820 = vrcp.pop %v1675
        %v1821 = vmul.f32 %v1501, %v1820
        %v1822 = vrcp.pop %v1678
        %v1823 = vmul.f32 %v1503, %v1822
        %v1824 = vrcp.pop %v1681
        %v1825 = vmul.f32 %v1505, %v1824
        %v1826 = vrcp.pop %v1684
        %v1827 = vmul.f32 %v1507, %v1826
        %v1828 = vrcp.pop %v1687
        %v1829 = vmul.f32 %v1509, %v1828
        %v1830 = vrcp.pop %v1690
        %v1831 = vmul.f32 %v1511, %v1830
        %v1832 = vrcp.pop %v1693
        %v1833 = vmul.f32 %v1513, %v1832
        %v1834 = vrcp.pop %v1696
        %v1835 = vmul.f32 %v1515, %v1834
        %v1836 = vrcp.pop %v1699
        %v1837 = vmul.f32 %v1517, %v1836
        %v1838 = vrcp.pop %v1702
        %v1839 = vmul.f32 %v1519, %v1838
        %v1840 = vrcp.pop %v1705
        %v1841 = vmul.f32 %v1521, %v1840
        %v1842 = vrcp.pop %v1708
        %v1843 = vmul.f32 %v1523, %v1842
        %v1844 = vrcp.pop %v1711
        %v1845 = vmul.f32 %v1525, %v1844
        %v1846 = vrcp.pop %v1714
        %v1847 = vmul.f32 %v1527, %v1846
        %v1848 = vrcp.pop %v1717
        %v1849 = vmul.f32 %v1529, %v1848
        %v1850 = vrcp.pop %v1720
        %v1851 = vmul.f32 %v1531, %v1850
        %v1852 = vrcp.pop %v1723
        %v1853 = vmul.f32 %v1533, %v1852
        %v1854 = vrcp.pop %v1726
        %v1855 = vmul.f32 %v1535, %v1854
        %v1856 = vrcp.pop %v1729
        %v1857 = vmul.f32 %v1537, %v1856
        %vm1858 = vcmask 261248
        %v1859 = vsel %vm1858, %v835, -inf
        %1860 = vmax.xlane.f32.xlu0 %v1859
        %v1861 = vpop.xlane.xlu0 %1860
        %v1862 = vsel %vm1858, %v840, -inf
        %1863 = vmax.xlane.f32.xlu0 %v1862
        %v1864 = vpop.xlane.xlu0 %1863
        %v1865 = vsel %vm1858, %v845, -inf
        %1866 = vmax.xlane.f32.xlu0 %v1865
        %v1867 = vpop.xlane.xlu0 %1866
        %v1868 = vsel %vm1858, %v850, -inf
        %1869 = vmax.xlane.f32.xlu0 %v1868
        %v1870 = vpop.xlane.xlu0 %1869
        %v1871 = vsel %vm1858, %v855, -inf
        %1872 = vmax.xlane.f32.xlu0 %v1871
        %v1873 = vpop.xlane.xlu0 %1872
        %v1874 = vsel %vm1858, %v860, -inf
        %1875 = vmax.xlane.f32.xlu0 %v1874
        %v1876 = vpop.xlane.xlu0 %1875
        %v1877 = vsel %vm1858, %v865, -inf
        %1878 = vmax.xlane.f32.xlu0 %v1877
        %v1879 = vpop.xlane.xlu0 %1878
        %v1880 = vsel %vm1858, %v870, -inf
        %1881 = vmax.xlane.f32.xlu0 %v1880
        %v1882 = vpop.xlane.xlu0 %1881
        %v1883 = vsel %vm1858, %v875, -inf
        %1884 = vmax.xlane.f32.xlu0 %v1883
        %v1885 = vpop.xlane.xlu0 %1884
        %v1886 = vsel %vm1858, %v880, -inf
        %1887 = vmax.xlane.f32.xlu0 %v1886
        %v1888 = vpop.xlane.xlu0 %1887
        %v1889 = vsel %vm1858, %v885, -inf
        %1890 = vmax.xlane.f32.xlu0 %v1889
        %v1891 = vpop.xlane.xlu0 %1890
        %v1892 = vsel %vm1858, %v890, -inf
        %1893 = vmax.xlane.f32.xlu0 %v1892
        %v1894 = vpop.xlane.xlu0 %1893
        %v1895 = vsel %vm1858, %v895, -inf
        %1896 = vmax.xlane.f32.xlu0 %v1895
        %v1897 = vpop.xlane.xlu0 %1896
        %v1898 = vsel %vm1858, %v900, -inf
        %1899 = vmax.xlane.f32.xlu0 %v1898
        %v1900 = vpop.xlane.xlu0 %1899
        %v1901 = vsel %vm1858, %v905, -inf
        %1902 = vmax.xlane.f32.xlu0 %v1901
        %v1903 = vpop.xlane.xlu0 %1902
        %v1904 = vsel %vm1858, %v910, -inf
        %1905 = vmax.xlane.f32.xlu0 %v1904
        %v1906 = vpop.xlane.xlu0 %1905
        %v1907 = vsel %vm1858, %v915, -inf
        %1908 = vmax.xlane.f32.xlu0 %v1907
        %v1909 = vpop.xlane.xlu0 %1908
        %v1910 = vsel %vm1858, %v920, -inf
        %1911 = vmax.xlane.f32.xlu0 %v1910
        %v1912 = vpop.xlane.xlu0 %1911
        %v1913 = vsel %vm1858, %v925, -inf
        %1914 = vmax.xlane.f32.xlu0 %v1913
        %v1915 = vpop.xlane.xlu0 %1914
        %v1916 = vsel %vm1858, %v930, -inf
        %1917 = vmax.xlane.f32.xlu0 %v1916
        %v1918 = vpop.xlane.xlu0 %1917
        %v1919 = vsel %vm1858, %v935, -inf
        %1920 = vmax.xlane.f32.xlu0 %v1919
        %v1921 = vpop.xlane.xlu0 %1920
        %v1922 = vsel %vm1858, %v940, -inf
        %1923 = vmax.xlane.f32.xlu0 %v1922
        %v1924 = vpop.xlane.xlu0 %1923
        %v1925 = vsel %vm1858, %v945, -inf
        %1926 = vmax.xlane.f32.xlu0 %v1925
        %v1927 = vpop.xlane.xlu0 %1926
        %v1928 = vsel %vm1858, %v950, -inf
        %1929 = vmax.xlane.f32.xlu0 %v1928
        %v1930 = vpop.xlane.xlu0 %1929
        %v1931 = vsel %vm1858, %v955, -inf
        %1932 = vmax.xlane.f32.xlu0 %v1931
        %v1933 = vpop.xlane.xlu0 %1932
        %v1934 = vsel %vm1858, %v960, -inf
        %1935 = vmax.xlane.f32.xlu0 %v1934
        %v1936 = vpop.xlane.xlu0 %1935
        %v1937 = vsel %vm1858, %v965, -inf
        %1938 = vmax.xlane.f32.xlu0 %v1937
        %v1939 = vpop.xlane.xlu0 %1938
        %v1940 = vsel %vm1858, %v970, -inf
        %1941 = vmax.xlane.f32.xlu0 %v1940
        %v1942 = vpop.xlane.xlu0 %1941
        %v1943 = vsel %vm1858, %v975, -inf
        %1944 = vmax.xlane.f32.xlu0 %v1943
        %v1945 = vpop.xlane.xlu0 %1944
        %v1946 = vsel %vm1858, %v980, -inf
        %1947 = vmax.xlane.f32.xlu0 %v1946
        %v1948 = vpop.xlane.xlu0 %1947
        %v1949 = vsel %vm1858, %v985, -inf
        %1950 = vmax.xlane.f32.xlu0 %v1949
        %v1951 = vpop.xlane.xlu0 %1950
        %v1952 = vsel %vm1858, %v990, -inf
        %1953 = vmax.xlane.f32.xlu0 %v1952
        %v1954 = vpop.xlane.xlu0 %1953
        %v1955 = vsel %vm1858, %v995, -inf
        %1956 = vmax.xlane.f32.xlu0 %v1955
        %v1957 = vpop.xlane.xlu0 %1956
        %v1958 = vsel %vm1858, %v1000, -inf
        %1959 = vmax.xlane.f32.xlu0 %v1958
        %v1960 = vpop.xlane.xlu0 %1959
        %v1961 = vsel %vm1858, %v1005, -inf
        %1962 = vmax.xlane.f32.xlu0 %v1961
        %v1963 = vpop.xlane.xlu0 %1962
        %v1964 = vsel %vm1858, %v1010, -inf
        %1965 = vmax.xlane.f32.xlu0 %v1964
        %v1966 = vpop.xlane.xlu0 %1965
        %v1967 = vsel %vm1858, %v1015, -inf
        %1968 = vmax.xlane.f32.xlu0 %v1967
        %v1969 = vpop.xlane.xlu0 %1968
        %v1970 = vsel %vm1858, %v1020, -inf
        %1971 = vmax.xlane.f32.xlu0 %v1970
        %v1972 = vpop.xlane.xlu0 %1971
        %v1973 = vsel %vm1858, %v1025, -inf
        %1974 = vmax.xlane.f32.xlu0 %v1973
        %v1975 = vpop.xlane.xlu0 %1974
        %v1976 = vsel %vm1858, %v1030, -inf
        %1977 = vmax.xlane.f32.xlu0 %v1976
        %v1978 = vpop.xlane.xlu0 %1977
        %v1979 = vsel %vm1858, %v1035, -inf
        %1980 = vmax.xlane.f32.xlu0 %v1979
        %v1981 = vpop.xlane.xlu0 %1980
        %v1982 = vsel %vm1858, %v1040, -inf
        %1983 = vmax.xlane.f32.xlu0 %v1982
        %v1984 = vpop.xlane.xlu0 %1983
        %v1985 = vsel %vm1858, %v1045, -inf
        %1986 = vmax.xlane.f32.xlu0 %v1985
        %v1987 = vpop.xlane.xlu0 %1986
        %v1988 = vsel %vm1858, %v1050, -inf
        %1989 = vmax.xlane.f32.xlu0 %v1988
        %v1990 = vpop.xlane.xlu0 %1989
        %v1991 = vsel %vm1858, %v1055, -inf
        %1992 = vmax.xlane.f32.xlu0 %v1991
        %v1993 = vpop.xlane.xlu0 %1992
        %v1994 = vsel %vm1858, %v1060, -inf
        %1995 = vmax.xlane.f32.xlu0 %v1994
        %v1996 = vpop.xlane.xlu0 %1995
        %v1997 = vsel %vm1858, %v1065, -inf
        %1998 = vmax.xlane.f32.xlu0 %v1997
        %v1999 = vpop.xlane.xlu0 %1998
        %v2000 = vsel %vm1858, %v1070, -inf
        %2001 = vmax.xlane.f32.xlu0 %v2000
        %v2002 = vpop.xlane.xlu0 %2001
        %v2003 = vsel %vm1858, %v1075, -inf
        %2004 = vmax.xlane.f32.xlu0 %v2003
        %v2005 = vpop.xlane.xlu0 %2004
        %v2006 = vsel %vm1858, %v1080, -inf
        %2007 = vmax.xlane.f32.xlu0 %v2006
        %v2008 = vpop.xlane.xlu0 %2007
        %v2009 = vsel %vm1858, %v1085, -inf
        %2010 = vmax.xlane.f32.xlu0 %v2009
        %v2011 = vpop.xlane.xlu0 %2010
        %v2012 = vsel %vm1858, %v1090, -inf
        %2013 = vmax.xlane.f32.xlu0 %v2012
        %v2014 = vpop.xlane.xlu0 %2013
        %v2015 = vsel %vm1858, %v1095, -inf
        %2016 = vmax.xlane.f32.xlu0 %v2015
        %v2017 = vpop.xlane.xlu0 %2016
        %v2018 = vsel %vm1858, %v1100, -inf
        %2019 = vmax.xlane.f32.xlu0 %v2018
        %v2020 = vpop.xlane.xlu0 %2019
        %v2021 = vsel %vm1858, %v1105, -inf
        %2022 = vmax.xlane.f32.xlu0 %v2021
        %v2023 = vpop.xlane.xlu0 %2022
        %v2024 = vsel %vm1858, %v1110, -inf
        %2025 = vmax.xlane.f32.xlu0 %v2024
        %v2026 = vpop.xlane.xlu0 %2025
        %v2027 = vsel %vm1858, %v1115, -inf
        %2028 = vmax.xlane.f32.xlu0 %v2027
        %v2029 = vpop.xlane.xlu0 %2028
        %v2030 = vsel %vm1858, %v1120, -inf
        %2031 = vmax.xlane.f32.xlu0 %v2030
        %v2032 = vpop.xlane.xlu0 %2031
        %v2033 = vsel %vm1858, %v1125, -inf
        %2034 = vmax.xlane.f32.xlu0 %v2033
        %v2035 = vpop.xlane.xlu0 %2034
        %v2036 = vsel %vm1858, %v1130, -inf
        %2037 = vmax.xlane.f32.xlu0 %v2036
        %v2038 = vpop.xlane.xlu0 %2037
        %v2039 = vsel %vm1858, %v1135, -inf
        %2040 = vmax.xlane.f32.xlu0 %v2039
        %v2041 = vpop.xlane.xlu0 %2040
        %v2042 = vsel %vm1858, %v1140, -inf
        %2043 = vmax.xlane.f32.xlu0 %v2042
        %v2044 = vpop.xlane.xlu0 %2043
        %v2045 = vsel %vm1858, %v1145, -inf
        %2046 = vmax.xlane.f32.xlu0 %v2045
        %v2047 = vpop.xlane.xlu0 %2046
        %v2048 = vsel %vm1858, %v1150, -inf
        %2049 = vmax.xlane.f32.xlu0 %v2048
        %v2050 = vpop.xlane.xlu0 %2049
        %v2051 = vsub.f32 %v835, %v1861
        %v2052 = vsub.f32 %v840, %v1864
        %v2053 = vsub.f32 %v845, %v1867
        %v2054 = vsub.f32 %v850, %v1870
        %v2055 = vsub.f32 %v855, %v1873
        %v2056 = vsub.f32 %v860, %v1876
        %v2057 = vsub.f32 %v865, %v1879
        %v2058 = vsub.f32 %v870, %v1882
        %v2059 = vsub.f32 %v875, %v1885
        %v2060 = vsub.f32 %v880, %v1888
        %v2061 = vsub.f32 %v885, %v1891
        %v2062 = vsub.f32 %v890, %v1894
        %v2063 = vsub.f32 %v895, %v1897
        %v2064 = vsub.f32 %v900, %v1900
        %v2065 = vsub.f32 %v905, %v1903
        %v2066 = vsub.f32 %v910, %v1906
        %v2067 = vsub.f32 %v915, %v1909
        %v2068 = vsub.f32 %v920, %v1912
        %v2069 = vsub.f32 %v925, %v1915
        %v2070 = vsub.f32 %v930, %v1918
        %v2071 = vsub.f32 %v935, %v1921
        %v2072 = vsub.f32 %v940, %v1924
        %v2073 = vsub.f32 %v945, %v1927
        %v2074 = vsub.f32 %v950, %v1930
        %v2075 = vsub.f32 %v955, %v1933
        %v2076 = vsub.f32 %v960, %v1936
        %v2077 = vsub.f32 %v965, %v1939
        %v2078 = vsub.f32 %v970, %v1942
        %v2079 = vsub.f32 %v975, %v1945
        %v2080 = vsub.f32 %v980, %v1948
        %v2081 = vsub.f32 %v985, %v1951
        %v2082 = vsub.f32 %v990, %v1954
        %v2083 = vsub.f32 %v995, %v1957
        %v2084 = vsub.f32 %v1000, %v1960
        %v2085 = vsub.f32 %v1005, %v1963
        %v2086 = vsub.f32 %v1010, %v1966
        %v2087 = vsub.f32 %v1015, %v1969
        %v2088 = vsub.f32 %v1020, %v1972
        %v2089 = vsub.f32 %v1025, %v1975
        %v2090 = vsub.f32 %v1030, %v1978
        %v2091 = vsub.f32 %v1035, %v1981
        %v2092 = vsub.f32 %v1040, %v1984
        %v2093 = vsub.f32 %v1045, %v1987
        %v2094 = vsub.f32 %v1050, %v1990
        %v2095 = vsub.f32 %v1055, %v1993
        %v2096 = vsub.f32 %v1060, %v1996
        %v2097 = vsub.f32 %v1065, %v1999
        %v2098 = vsub.f32 %v1070, %v2002
        %v2099 = vsub.f32 %v1075, %v2005
        %v2100 = vsub.f32 %v1080, %v2008
        %v2101 = vsub.f32 %v1085, %v2011
        %v2102 = vsub.f32 %v1090, %v2014
        %v2103 = vsub.f32 %v1095, %v2017
        %v2104 = vsub.f32 %v1100, %v2020
        %v2105 = vsub.f32 %v1105, %v2023
        %v2106 = vsub.f32 %v1110, %v2026
        %v2107 = vsub.f32 %v1115, %v2029
        %v2108 = vsub.f32 %v1120, %v2032
        %v2109 = vsub.f32 %v1125, %v2035
        %v2110 = vsub.f32 %v1130, %v2038
        %v2111 = vsub.f32 %v1135, %v2041
        %v2112 = vsub.f32 %v1140, %v2044
        %v2113 = vsub.f32 %v1145, %v2047
        %v2114 = vsub.f32 %v1150, %v2050
        %v2115 = vmul.f32 %v2051, 1.442695
        %v2116 = vpow.pop %v2115
        %v2117 = vmul.f32 %v2052, 1.442695
        %v2118 = vpow.pop %v2117
        %v2119 = vmul.f32 %v2053, 1.442695
        %v2120 = vpow.pop %v2119
        %v2121 = vmul.f32 %v2054, 1.442695
        %v2122 = vpow.pop %v2121
        %v2123 = vmul.f32 %v2055, 1.442695
        %v2124 = vpow.pop %v2123
        %v2125 = vmul.f32 %v2056, 1.442695
        %v2126 = vpow.pop %v2125
        %v2127 = vmul.f32 %v2057, 1.442695
        %v2128 = vpow.pop %v2127
        %v2129 = vmul.f32 %v2058, 1.442695
        %v2130 = vpow.pop %v2129
        %v2131 = vmul.f32 %v2059, 1.442695
        %v2132 = vpow.pop %v2131
        %v2133 = vmul.f32 %v2060, 1.442695
        %v2134 = vpow.pop %v2133
        %v2135 = vmul.f32 %v2061, 1.442695
        %v2136 = vpow.pop %v2135
        %v2137 = vmul.f32 %v2062, 1.442695
        %v2138 = vpow.pop %v2137
        %v2139 = vmul.f32 %v2063, 1.442695
        %v2140 = vpow.pop %v2139
        %v2141 = vmul.f32 %v2064, 1.442695
        %v2142 = vpow.pop %v2141
        %v2143 = vmul.f32 %v2065, 1.442695
        %v2144 = vpow.pop %v2143
        %v2145 = vmul.f32 %v2066, 1.442695
        %v2146 = vpow.pop %v2145
        %v2147 = vmul.f32 %v2067, 1.442695
        %v2148 = vpow.pop %v2147
        %v2149 = vmul.f32 %v2068, 1.442695
        %v2150 = vpow.pop %v2149
        %v2151 = vmul.f32 %v2069, 1.442695
        %v2152 = vpow.pop %v2151
        %v2153 = vmul.f32 %v2070, 1.442695
        %v2154 = vpow.pop %v2153
        %v2155 = vmul.f32 %v2071, 1.442695
        %v2156 = vpow.pop %v2155
        %v2157 = vmul.f32 %v2072, 1.442695
        %v2158 = vpow.pop %v2157
        %v2159 = vmul.f32 %v2073, 1.442695
        %v2160 = vpow.pop %v2159
        %v2161 = vmul.f32 %v2074, 1.442695
        %v2162 = vpow.pop %v2161
        %v2163 = vmul.f32 %v2075, 1.442695
        %v2164 = vpow.pop %v2163
        %v2165 = vmul.f32 %v2076, 1.442695
        %v2166 = vpow.pop %v2165
        %v2167 = vmul.f32 %v2077, 1.442695
        %v2168 = vpow.pop %v2167
        %v2169 = vmul.f32 %v2078, 1.442695
        %v2170 = vpow.pop %v2169
        %v2171 = vmul.f32 %v2079, 1.442695
        %v2172 = vpow.pop %v2171
        %v2173 = vmul.f32 %v2080, 1.442695
        %v2174 = vpow.pop %v2173
        %v2175 = vmul.f32 %v2081, 1.442695
        %v2176 = vpow.pop %v2175
        %v2177 = vmul.f32 %v2082, 1.442695
        %v2178 = vpow.pop %v2177
        %v2179 = vmul.f32 %v2083, 1.442695
        %v2180 = vpow.pop %v2179
        %v2181 = vmul.f32 %v2084, 1.442695
        %v2182 = vpow.pop %v2181
        %v2183 = vmul.f32 %v2085, 1.442695
        %v2184 = vpow.pop %v2183
        %v2185 = vmul.f32 %v2086, 1.442695
        %v2186 = vpow.pop %v2185
        %v2187 = vmul.f32 %v2087, 1.442695
        %v2188 = vpow.pop %v2187
        %v2189 = vmul.f32 %v2088, 1.442695
        %v2190 = vpow.pop %v2189
        %v2191 = vmul.f32 %v2089, 1.442695
        %v2192 = vpow.pop %v2191
        %v2193 = vmul.f32 %v2090, 1.442695
        %v2194 = vpow.pop %v2193
        %v2195 = vmul.f32 %v2091, 1.442695
        %v2196 = vpow.pop %v2195
        %v2197 = vmul.f32 %v2092, 1.442695
        %v2198 = vpow.pop %v2197
        %v2199 = vmul.f32 %v2093, 1.442695
        %v2200 = vpow.pop %v2199
        %v2201 = vmul.f32 %v2094, 1.442695
        %v2202 = vpow.pop %v2201
        %v2203 = vmul.f32 %v2095, 1.442695
        %v2204 = vpow.pop %v2203
        %v2205 = vmul.f32 %v2096, 1.442695
        %v2206 = vpow.pop %v2205
        %v2207 = vmul.f32 %v2097, 1.442695
        %v2208 = vpow.pop %v2207
        %v2209 = vmul.f32 %v2098, 1.442695
        %v2210 = vpow.pop %v2209
        %v2211 = vmul.f32 %v2099, 1.442695
        %v2212 = vpow.pop %v2211
        %v2213 = vmul.f32 %v2100, 1.442695
        %v2214 = vpow.pop %v2213
        %v2215 = vmul.f32 %v2101, 1.442695
        %v2216 = vpow.pop %v2215
        %v2217 = vmul.f32 %v2102, 1.442695
        %v2218 = vpow.pop %v2217
        %v2219 = vmul.f32 %v2103, 1.442695
        %v2220 = vpow.pop %v2219
        %v2221 = vmul.f32 %v2104, 1.442695
        %v2222 = vpow.pop %v2221
        %v2223 = vmul.f32 %v2105, 1.442695
        %v2224 = vpow.pop %v2223
        %v2225 = vmul.f32 %v2106, 1.442695
        %v2226 = vpow.pop %v2225
        %v2227 = vmul.f32 %v2107, 1.442695
        %v2228 = vpow.pop %v2227
        %v2229 = vmul.f32 %v2108, 1.442695
        %v2230 = vpow.pop %v2229
        %v2231 = vmul.f32 %v2109, 1.442695
        %v2232 = vpow.pop %v2231
        %v2233 = vmul.f32 %v2110, 1.442695
        %v2234 = vpow.pop %v2233
        %v2235 = vmul.f32 %v2111, 1.442695
        %v2236 = vpow.pop %v2235
        %v2237 = vmul.f32 %v2112, 1.442695
        %v2238 = vpow.pop %v2237
        %v2239 = vmul.f32 %v2113, 1.442695
        %v2240 = vpow.pop %v2239
        %v2241 = vmul.f32 %v2114, 1.442695
        %v2242 = vpow.pop %v2241
        %2307 = vrot.lane.b32.xlu0 %v2116, 112
        %v2308 = vpop.permute.xlu0 %2307
        %2309 = vrot.lane.b32.xlu0 %v2118, 112
        %v2310 = vpop.permute.xlu0 %2309
        %2311 = vrot.lane.b32.xlu0 %v2120, 112
        %v2312 = vpop.permute.xlu0 %2311
        %2313 = vrot.lane.b32.xlu0 %v2122, 112
        %v2314 = vpop.permute.xlu0 %2313
        %2315 = vrot.lane.b32.xlu0 %v2124, 112
        %v2316 = vpop.permute.xlu0 %2315
        %2317 = vrot.lane.b32.xlu0 %v2126, 112
        %v2318 = vpop.permute.xlu0 %2317
        %2319 = vrot.lane.b32.xlu0 %v2128, 112
        %v2320 = vpop.permute.xlu0 %2319
        %2321 = vrot.lane.b32.xlu0 %v2130, 112
        %v2322 = vpop.permute.xlu0 %2321
        %2323 = vrot.lane.b32.xlu0 %v2132, 112
        %v2324 = vpop.permute.xlu0 %2323
        %2325 = vrot.lane.b32.xlu0 %v2134, 112
        %v2326 = vpop.permute.xlu0 %2325
        %2327 = vrot.lane.b32.xlu0 %v2136, 112
        %v2328 = vpop.permute.xlu0 %2327
        %2329 = vrot.lane.b32.xlu0 %v2138, 112
        %v2330 = vpop.permute.xlu0 %2329
        %2331 = vrot.lane.b32.xlu0 %v2140, 112
        %v2332 = vpop.permute.xlu0 %2331
        %2333 = vrot.lane.b32.xlu0 %v2142, 112
        %v2334 = vpop.permute.xlu0 %2333
        %2335 = vrot.lane.b32.xlu0 %v2144, 112
        %v2336 = vpop.permute.xlu0 %2335
        %2337 = vrot.lane.b32.xlu0 %v2146, 112
        %v2338 = vpop.permute.xlu0 %2337
        %2339 = vrot.lane.b32.xlu0 %v2148, 112
        %v2340 = vpop.permute.xlu0 %2339
        %2341 = vrot.lane.b32.xlu0 %v2150, 112
        %v2342 = vpop.permute.xlu0 %2341
        %2343 = vrot.lane.b32.xlu0 %v2152, 112
        %v2344 = vpop.permute.xlu0 %2343
        %2345 = vrot.lane.b32.xlu0 %v2154, 112
        %v2346 = vpop.permute.xlu0 %2345
        %2347 = vrot.lane.b32.xlu0 %v2156, 112
        %v2348 = vpop.permute.xlu0 %2347
        %2349 = vrot.lane.b32.xlu0 %v2158, 112
        %v2350 = vpop.permute.xlu0 %2349
        %2351 = vrot.lane.b32.xlu0 %v2160, 112
        %v2352 = vpop.permute.xlu0 %2351
        %2353 = vrot.lane.b32.xlu0 %v2162, 112
        %v2354 = vpop.permute.xlu0 %2353
        %2355 = vrot.lane.b32.xlu0 %v2164, 112
        %v2356 = vpop.permute.xlu0 %2355
        %2357 = vrot.lane.b32.xlu0 %v2166, 112
        %v2358 = vpop.permute.xlu0 %2357
        %2359 = vrot.lane.b32.xlu0 %v2168, 112
        %v2360 = vpop.permute.xlu0 %2359
        %2361 = vrot.lane.b32.xlu0 %v2170, 112
        %v2362 = vpop.permute.xlu0 %2361
        %2363 = vrot.lane.b32.xlu0 %v2172, 112
        %v2364 = vpop.permute.xlu0 %2363
        %2365 = vrot.lane.b32.xlu0 %v2174, 112
        %v2366 = vpop.permute.xlu0 %2365
        %2367 = vrot.lane.b32.xlu0 %v2176, 112
        %v2368 = vpop.permute.xlu0 %2367
        %2369 = vrot.lane.b32.xlu0 %v2178, 112
        %v2370 = vpop.permute.xlu0 %2369
        %2371 = vrot.lane.b32.xlu0 %v2180, 112
        %v2372 = vpop.permute.xlu0 %2371
        %2373 = vrot.lane.b32.xlu0 %v2182, 112
        %v2374 = vpop.permute.xlu0 %2373
        %2375 = vrot.lane.b32.xlu0 %v2184, 112
        %v2376 = vpop.permute.xlu0 %2375
        %2377 = vrot.lane.b32.xlu0 %v2186, 112
        %v2378 = vpop.permute.xlu0 %2377
        %2379 = vrot.lane.b32.xlu0 %v2188, 112
        %v2380 = vpop.permute.xlu0 %2379
        %2381 = vrot.lane.b32.xlu0 %v2190, 112
        %v2382 = vpop.permute.xlu0 %2381
        %2383 = vrot.lane.b32.xlu0 %v2192, 112
        %v2384 = vpop.permute.xlu0 %2383
        %2385 = vrot.lane.b32.xlu0 %v2194, 112
        %v2386 = vpop.permute.xlu0 %2385
        %2387 = vrot.lane.b32.xlu0 %v2196, 112
        %v2388 = vpop.permute.xlu0 %2387
        %2389 = vrot.lane.b32.xlu0 %v2198, 112
        %v2390 = vpop.permute.xlu0 %2389
        %2391 = vrot.lane.b32.xlu0 %v2200, 112
        %v2392 = vpop.permute.xlu0 %2391
        %2393 = vrot.lane.b32.xlu0 %v2202, 112
        %v2394 = vpop.permute.xlu0 %2393
        %2395 = vrot.lane.b32.xlu0 %v2204, 112
        %v2396 = vpop.permute.xlu0 %2395
        %2397 = vrot.lane.b32.xlu0 %v2206, 112
        %v2398 = vpop.permute.xlu0 %2397
        %2399 = vrot.lane.b32.xlu0 %v2208, 112
        %v2400 = vpop.permute.xlu0 %2399
        %2401 = vrot.lane.b32.xlu0 %v2210, 112
        %v2402 = vpop.permute.xlu0 %2401
        %2403 = vrot.lane.b32.xlu0 %v2212, 112
        %v2404 = vpop.permute.xlu0 %2403
        %2405 = vrot.lane.b32.xlu0 %v2214, 112
        %v2406 = vpop.permute.xlu0 %2405
        %2407 = vrot.lane.b32.xlu0 %v2216, 112
        %v2408 = vpop.permute.xlu0 %2407
        %2409 = vrot.lane.b32.xlu0 %v2218, 112
        %v2410 = vpop.permute.xlu0 %2409
        %2411 = vrot.lane.b32.xlu0 %v2220, 112
        %v2412 = vpop.permute.xlu0 %2411
        %2413 = vrot.lane.b32.xlu0 %v2222, 112
        %v2414 = vpop.permute.xlu0 %2413
        %2415 = vrot.lane.b32.xlu0 %v2224, 112
        %v2416 = vpop.permute.xlu0 %2415
        %2417 = vrot.lane.b32.xlu0 %v2226, 112
        %v2418 = vpop.permute.xlu0 %2417
        %2419 = vrot.lane.b32.xlu0 %v2228, 112
        %v2420 = vpop.permute.xlu0 %2419
        %2421 = vrot.lane.b32.xlu0 %v2230, 112
        %v2422 = vpop.permute.xlu0 %2421
        %2423 = vrot.lane.b32.xlu0 %v2232, 112
        %v2424 = vpop.permute.xlu0 %2423
        %2425 = vrot.lane.b32.xlu0 %v2234, 112
        %v2426 = vpop.permute.xlu0 %2425
        %2427 = vrot.lane.b32.xlu0 %v2236, 112
        %v2428 = vpop.permute.xlu0 %2427
        %2429 = vrot.lane.b32.xlu0 %v2238, 112
        %v2430 = vpop.permute.xlu0 %2429
        %2431 = vrot.lane.b32.xlu0 %v2240, 112
        %v2432 = vpop.permute.xlu0 %2431
        %2433 = vrot.lane.b32.xlu0 %v2242, 112
        %v2434 = vpop.permute.xlu0 %2433
        %v2499 = vsel %vm1153, %v2308, 0.0
        %2500 = vadd.xlane.f32.xlu0 %v2499
        %v2501 = vpop.xlane.xlu0 %2500
        %v2502 = vsel %vm1153, %v2310, 0.0
        %2503 = vadd.xlane.f32.xlu0 %v2502
        %v2504 = vpop.xlane.xlu0 %2503
        %v2505 = vsel %vm1153, %v2312, 0.0
        %2506 = vadd.xlane.f32.xlu0 %v2505
        %v2507 = vpop.xlane.xlu0 %2506
        %v2508 = vsel %vm1153, %v2314, 0.0
        %2509 = vadd.xlane.f32.xlu0 %v2508
        %v2510 = vpop.xlane.xlu0 %2509
        %v2511 = vsel %vm1153, %v2316, 0.0
        %2512 = vadd.xlane.f32.xlu0 %v2511
        %v2513 = vpop.xlane.xlu0 %2512
        %v2514 = vsel %vm1153, %v2318, 0.0
        %2515 = vadd.xlane.f32.xlu0 %v2514
        %v2516 = vpop.xlane.xlu0 %2515
        %v2517 = vsel %vm1153, %v2320, 0.0
        %2518 = vadd.xlane.f32.xlu0 %v2517
        %v2519 = vpop.xlane.xlu0 %2518
        %v2520 = vsel %vm1153, %v2322, 0.0
        %2521 = vadd.xlane.f32.xlu0 %v2520
        %v2522 = vpop.xlane.xlu0 %2521
        %v2523 = vsel %vm1153, %v2324, 0.0
        %2524 = vadd.xlane.f32.xlu0 %v2523
        %v2525 = vpop.xlane.xlu0 %2524
        %v2526 = vsel %vm1153, %v2326, 0.0
        %2527 = vadd.xlane.f32.xlu0 %v2526
        %v2528 = vpop.xlane.xlu0 %2527
        %v2529 = vsel %vm1153, %v2328, 0.0
        %2530 = vadd.xlane.f32.xlu0 %v2529
        %v2531 = vpop.xlane.xlu0 %2530
        %v2532 = vsel %vm1153, %v2330, 0.0
        %2533 = vadd.xlane.f32.xlu0 %v2532
        %v2534 = vpop.xlane.xlu0 %2533
        %v2535 = vsel %vm1153, %v2332, 0.0
        %2536 = vadd.xlane.f32.xlu0 %v2535
        %v2537 = vpop.xlane.xlu0 %2536
        %v2538 = vsel %vm1153, %v2334, 0.0
        %2539 = vadd.xlane.f32.xlu0 %v2538
        %v2540 = vpop.xlane.xlu0 %2539
        %v2541 = vsel %vm1153, %v2336, 0.0
        %2542 = vadd.xlane.f32.xlu0 %v2541
        %v2543 = vpop.xlane.xlu0 %2542
        %v2544 = vsel %vm1153, %v2338, 0.0
        %2545 = vadd.xlane.f32.xlu0 %v2544
        %v2546 = vpop.xlane.xlu0 %2545
        %v2547 = vsel %vm1153, %v2340, 0.0
        %2548 = vadd.xlane.f32.xlu0 %v2547
        %v2549 = vpop.xlane.xlu0 %2548
        %v2550 = vsel %vm1153, %v2342, 0.0
        %2551 = vadd.xlane.f32.xlu0 %v2550
        %v2552 = vpop.xlane.xlu0 %2551
        %v2553 = vsel %vm1153, %v2344, 0.0
        %2554 = vadd.xlane.f32.xlu0 %v2553
        %v2555 = vpop.xlane.xlu0 %2554
        %v2556 = vsel %vm1153, %v2346, 0.0
        %2557 = vadd.xlane.f32.xlu0 %v2556
        %v2558 = vpop.xlane.xlu0 %2557
        %v2559 = vsel %vm1153, %v2348, 0.0
        %2560 = vadd.xlane.f32.xlu0 %v2559
        %v2561 = vpop.xlane.xlu0 %2560
        %v2562 = vsel %vm1153, %v2350, 0.0
        %2563 = vadd.xlane.f32.xlu0 %v2562
        %v2564 = vpop.xlane.xlu0 %2563
        %v2565 = vsel %vm1153, %v2352, 0.0
        %2566 = vadd.xlane.f32.xlu0 %v2565
        %v2567 = vpop.xlane.xlu0 %2566
        %v2568 = vsel %vm1153, %v2354, 0.0
        %2569 = vadd.xlane.f32.xlu0 %v2568
        %v2570 = vpop.xlane.xlu0 %2569
        %v2571 = vsel %vm1153, %v2356, 0.0
        %2572 = vadd.xlane.f32.xlu0 %v2571
        %v2573 = vpop.xlane.xlu0 %2572
        %v2574 = vsel %vm1153, %v2358, 0.0
        %2575 = vadd.xlane.f32.xlu0 %v2574
        %v2576 = vpop.xlane.xlu0 %2575
        %v2577 = vsel %vm1153, %v2360, 0.0
        %2578 = vadd.xlane.f32.xlu0 %v2577
        %v2579 = vpop.xlane.xlu0 %2578
        %v2580 = vsel %vm1153, %v2362, 0.0
        %2581 = vadd.xlane.f32.xlu0 %v2580
        %v2582 = vpop.xlane.xlu0 %2581
        %v2583 = vsel %vm1153, %v2364, 0.0
        %2584 = vadd.xlane.f32.xlu0 %v2583
        %v2585 = vpop.xlane.xlu0 %2584
        %v2586 = vsel %vm1153, %v2366, 0.0
        %2587 = vadd.xlane.f32.xlu0 %v2586
        %v2588 = vpop.xlane.xlu0 %2587
        %v2589 = vsel %vm1153, %v2368, 0.0
        %2590 = vadd.xlane.f32.xlu0 %v2589
        %v2591 = vpop.xlane.xlu0 %2590
        %v2592 = vsel %vm1153, %v2370, 0.0
        %2593 = vadd.xlane.f32.xlu0 %v2592
        %v2594 = vpop.xlane.xlu0 %2593
        %v2595 = vsel %vm1153, %v2372, 0.0
        %2596 = vadd.xlane.f32.xlu0 %v2595
        %v2597 = vpop.xlane.xlu0 %2596
        %v2598 = vsel %vm1153, %v2374, 0.0
        %2599 = vadd.xlane.f32.xlu0 %v2598
        %v2600 = vpop.xlane.xlu0 %2599
        %v2601 = vsel %vm1153, %v2376, 0.0
        %2602 = vadd.xlane.f32.xlu0 %v2601
        %v2603 = vpop.xlane.xlu0 %2602
        %v2604 = vsel %vm1153, %v2378, 0.0
        %2605 = vadd.xlane.f32.xlu0 %v2604
        %v2606 = vpop.xlane.xlu0 %2605
        %v2607 = vsel %vm1153, %v2380, 0.0
        %2608 = vadd.xlane.f32.xlu0 %v2607
        %v2609 = vpop.xlane.xlu0 %2608
        %v2610 = vsel %vm1153, %v2382, 0.0
        %2611 = vadd.xlane.f32.xlu0 %v2610
        %v2612 = vpop.xlane.xlu0 %2611
        %v2613 = vsel %vm1153, %v2384, 0.0
        %2614 = vadd.xlane.f32.xlu0 %v2613
        %v2615 = vpop.xlane.xlu0 %2614
        %v2616 = vsel %vm1153, %v2386, 0.0
        %2617 = vadd.xlane.f32.xlu0 %v2616
        %v2618 = vpop.xlane.xlu0 %2617
        %v2619 = vsel %vm1153, %v2388, 0.0
        %2620 = vadd.xlane.f32.xlu0 %v2619
        %v2621 = vpop.xlane.xlu0 %2620
        %v2622 = vsel %vm1153, %v2390, 0.0
        %2623 = vadd.xlane.f32.xlu0 %v2622
        %v2624 = vpop.xlane.xlu0 %2623
        %v2625 = vsel %vm1153, %v2392, 0.0
        %2626 = vadd.xlane.f32.xlu0 %v2625
        %v2627 = vpop.xlane.xlu0 %2626
        %v2628 = vsel %vm1153, %v2394, 0.0
        %2629 = vadd.xlane.f32.xlu0 %v2628
        %v2630 = vpop.xlane.xlu0 %2629
        %v2631 = vsel %vm1153, %v2396, 0.0
        %2632 = vadd.xlane.f32.xlu0 %v2631
        %v2633 = vpop.xlane.xlu0 %2632
        %v2634 = vsel %vm1153, %v2398, 0.0
        %2635 = vadd.xlane.f32.xlu0 %v2634
        %v2636 = vpop.xlane.xlu0 %2635
        %v2637 = vsel %vm1153, %v2400, 0.0
        %2638 = vadd.xlane.f32.xlu0 %v2637
        %v2639 = vpop.xlane.xlu0 %2638
        %v2640 = vsel %vm1153, %v2402, 0.0
        %2641 = vadd.xlane.f32.xlu0 %v2640
        %v2642 = vpop.xlane.xlu0 %2641
        %v2643 = vsel %vm1153, %v2404, 0.0
        %2644 = vadd.xlane.f32.xlu0 %v2643
        %v2645 = vpop.xlane.xlu0 %2644
        %v2646 = vsel %vm1153, %v2406, 0.0
        %2647 = vadd.xlane.f32.xlu0 %v2646
        %v2648 = vpop.xlane.xlu0 %2647
        %v2649 = vsel %vm1153, %v2408, 0.0
        %2650 = vadd.xlane.f32.xlu0 %v2649
        %v2651 = vpop.xlane.xlu0 %2650
        %v2652 = vsel %vm1153, %v2410, 0.0
        %2653 = vadd.xlane.f32.xlu0 %v2652
        %v2654 = vpop.xlane.xlu0 %2653
        %v2655 = vsel %vm1153, %v2412, 0.0
        %2656 = vadd.xlane.f32.xlu0 %v2655
        %v2657 = vpop.xlane.xlu0 %2656
        %v2658 = vsel %vm1153, %v2414, 0.0
        %2659 = vadd.xlane.f32.xlu0 %v2658
        %v2660 = vpop.xlane.xlu0 %2659
        %v2661 = vsel %vm1153, %v2416, 0.0
        %2662 = vadd.xlane.f32.xlu0 %v2661
        %v2663 = vpop.xlane.xlu0 %2662
        %v2664 = vsel %vm1153, %v2418, 0.0
        %2665 = vadd.xlane.f32.xlu0 %v2664
        %v2666 = vpop.xlane.xlu0 %2665
        %v2667 = vsel %vm1153, %v2420, 0.0
        %2668 = vadd.xlane.f32.xlu0 %v2667
        %v2669 = vpop.xlane.xlu0 %2668
        %v2670 = vsel %vm1153, %v2422, 0.0
        %2671 = vadd.xlane.f32.xlu0 %v2670
        %v2672 = vpop.xlane.xlu0 %2671
        %v2673 = vsel %vm1153, %v2424, 0.0
        %2674 = vadd.xlane.f32.xlu0 %v2673
        %v2675 = vpop.xlane.xlu0 %2674
        %v2676 = vsel %vm1153, %v2426, 0.0
        %2677 = vadd.xlane.f32.xlu0 %v2676
        %v2678 = vpop.xlane.xlu0 %2677
        %v2679 = vsel %vm1153, %v2428, 0.0
        %2680 = vadd.xlane.f32.xlu0 %v2679
        %v2681 = vpop.xlane.xlu0 %2680
        %v2682 = vsel %vm1153, %v2430, 0.0
        %2683 = vadd.xlane.f32.xlu0 %v2682
        %v2684 = vpop.xlane.xlu0 %2683
        %v2685 = vsel %vm1153, %v2432, 0.0
        %2686 = vadd.xlane.f32.xlu0 %v2685
        %v2687 = vpop.xlane.xlu0 %2686
        %v2688 = vsel %vm1153, %v2434, 0.0
        %2689 = vadd.xlane.f32.xlu0 %v2688
        %v2690 = vpop.xlane.xlu0 %2689
        %v2691 = vrcp.pop %v2501
        %v2692 = vmul.f32 %v2116, %v2691
        %v2693 = vrcp.pop %v2504
        %v2694 = vmul.f32 %v2118, %v2693
        %v2695 = vrcp.pop %v2507
        %v2696 = vmul.f32 %v2120, %v2695
        %v2697 = vrcp.pop %v2510
        %v2698 = vmul.f32 %v2122, %v2697
        %v2699 = vrcp.pop %v2513
        %v2700 = vmul.f32 %v2124, %v2699
        %v2701 = vrcp.pop %v2516
        %v2702 = vmul.f32 %v2126, %v2701
        %v2703 = vrcp.pop %v2519
        %v2704 = vmul.f32 %v2128, %v2703
        %v2705 = vrcp.pop %v2522
        %v2706 = vmul.f32 %v2130, %v2705
        %v2707 = vrcp.pop %v2525
        %v2708 = vmul.f32 %v2132, %v2707
        %v2709 = vrcp.pop %v2528
        %v2710 = vmul.f32 %v2134, %v2709
        %v2711 = vrcp.pop %v2531
        %v2712 = vmul.f32 %v2136, %v2711
        %v2713 = vrcp.pop %v2534
        %v2714 = vmul.f32 %v2138, %v2713
        %v2715 = vrcp.pop %v2537
        %v2716 = vmul.f32 %v2140, %v2715
        %v2717 = vrcp.pop %v2540
        %v2718 = vmul.f32 %v2142, %v2717
        %v2719 = vrcp.pop %v2543
        %v2720 = vmul.f32 %v2144, %v2719
        %v2721 = vrcp.pop %v2546
        %v2722 = vmul.f32 %v2146, %v2721
        %v2723 = vrcp.pop %v2549
        %v2724 = vmul.f32 %v2148, %v2723
        %v2725 = vrcp.pop %v2552
        %v2726 = vmul.f32 %v2150, %v2725
        %v2727 = vrcp.pop %v2555
        %v2728 = vmul.f32 %v2152, %v2727
        %v2729 = vrcp.pop %v2558
        %v2730 = vmul.f32 %v2154, %v2729
        %v2731 = vrcp.pop %v2561
        %v2732 = vmul.f32 %v2156, %v2731
        %v2733 = vrcp.pop %v2564
        %v2734 = vmul.f32 %v2158, %v2733
        %v2735 = vrcp.pop %v2567
        %v2736 = vmul.f32 %v2160, %v2735
        %v2737 = vrcp.pop %v2570
        %v2738 = vmul.f32 %v2162, %v2737
        %v2739 = vrcp.pop %v2573
        %v2740 = vmul.f32 %v2164, %v2739
        %v2741 = vrcp.pop %v2576
        %v2742 = vmul.f32 %v2166, %v2741
        %v2743 = vrcp.pop %v2579
        %v2744 = vmul.f32 %v2168, %v2743
        %v2745 = vrcp.pop %v2582
        %v2746 = vmul.f32 %v2170, %v2745
        %v2747 = vrcp.pop %v2585
        %v2748 = vmul.f32 %v2172, %v2747
        %v2749 = vrcp.pop %v2588
        %v2750 = vmul.f32 %v2174, %v2749
        %v2751 = vrcp.pop %v2591
        %v2752 = vmul.f32 %v2176, %v2751
        %v2753 = vrcp.pop %v2594
        %v2754 = vmul.f32 %v2178, %v2753
        %v2755 = vrcp.pop %v2597
        %v2756 = vmul.f32 %v2180, %v2755
        %v2757 = vrcp.pop %v2600
        %v2758 = vmul.f32 %v2182, %v2757
        %v2759 = vrcp.pop %v2603
        %v2760 = vmul.f32 %v2184, %v2759
        %v2761 = vrcp.pop %v2606
        %v2762 = vmul.f32 %v2186, %v2761
        %v2763 = vrcp.pop %v2609
        %v2764 = vmul.f32 %v2188, %v2763
        %v2765 = vrcp.pop %v2612
        %v2766 = vmul.f32 %v2190, %v2765
        %v2767 = vrcp.pop %v2615
        %v2768 = vmul.f32 %v2192, %v2767
        %v2769 = vrcp.pop %v2618
        %v2770 = vmul.f32 %v2194, %v2769
        %v2771 = vrcp.pop %v2621
        %v2772 = vmul.f32 %v2196, %v2771
        %v2773 = vrcp.pop %v2624
        %v2774 = vmul.f32 %v2198, %v2773
        %v2775 = vrcp.pop %v2627
        %v2776 = vmul.f32 %v2200, %v2775
        %v2777 = vrcp.pop %v2630
        %v2778 = vmul.f32 %v2202, %v2777
        %v2779 = vrcp.pop %v2633
        %v2780 = vmul.f32 %v2204, %v2779
        %v2781 = vrcp.pop %v2636
        %v2782 = vmul.f32 %v2206, %v2781
        %v2783 = vrcp.pop %v2639
        %v2784 = vmul.f32 %v2208, %v2783
        %v2785 = vrcp.pop %v2642
        %v2786 = vmul.f32 %v2210, %v2785
        %v2787 = vrcp.pop %v2645
        %v2788 = vmul.f32 %v2212, %v2787
        %v2789 = vrcp.pop %v2648
        %v2790 = vmul.f32 %v2214, %v2789
        %v2791 = vrcp.pop %v2651
        %v2792 = vmul.f32 %v2216, %v2791
        %v2793 = vrcp.pop %v2654
        %v2794 = vmul.f32 %v2218, %v2793
        %v2795 = vrcp.pop %v2657
        %v2796 = vmul.f32 %v2220, %v2795
        %v2797 = vrcp.pop %v2660
        %v2798 = vmul.f32 %v2222, %v2797
        %v2799 = vrcp.pop %v2663
        %v2800 = vmul.f32 %v2224, %v2799
        %v2801 = vrcp.pop %v2666
        %v2802 = vmul.f32 %v2226, %v2801
        %v2803 = vrcp.pop %v2669
        %v2804 = vmul.f32 %v2228, %v2803
        %v2805 = vrcp.pop %v2672
        %v2806 = vmul.f32 %v2230, %v2805
        %v2807 = vrcp.pop %v2675
        %v2808 = vmul.f32 %v2232, %v2807
        %v2809 = vrcp.pop %v2678
        %v2810 = vmul.f32 %v2234, %v2809
        %v2811 = vrcp.pop %v2681
        %v2812 = vmul.f32 %v2236, %v2811
        %v2813 = vrcp.pop %v2684
        %v2814 = vmul.f32 %v2238, %v2813
        %v2815 = vrcp.pop %v2687
        %v2816 = vmul.f32 %v2240, %v2815
        %v2817 = vrcp.pop %v2690
        %v2818 = vmul.f32 %v2242, %v2817
        %vm2819 = vcmask 392448
        %v2820 = vsel %vm2819, %v835, -inf
        %2821 = vmax.xlane.f32.xlu0 %v2820
        %v2822 = vpop.xlane.xlu0 %2821
        %v2823 = vsel %vm2819, %v840, -inf
        %2824 = vmax.xlane.f32.xlu0 %v2823
        %v2825 = vpop.xlane.xlu0 %2824
        %v2826 = vsel %vm2819, %v845, -inf
        %2827 = vmax.xlane.f32.xlu0 %v2826
        %v2828 = vpop.xlane.xlu0 %2827
        %v2829 = vsel %vm2819, %v850, -inf
        %2830 = vmax.xlane.f32.xlu0 %v2829
        %v2831 = vpop.xlane.xlu0 %2830
        %v2832 = vsel %vm2819, %v855, -inf
        %2833 = vmax.xlane.f32.xlu0 %v2832
        %v2834 = vpop.xlane.xlu0 %2833
        %v2835 = vsel %vm2819, %v860, -inf
        %2836 = vmax.xlane.f32.xlu0 %v2835
        %v2837 = vpop.xlane.xlu0 %2836
        %v2838 = vsel %vm2819, %v865, -inf
        %2839 = vmax.xlane.f32.xlu0 %v2838
        %v2840 = vpop.xlane.xlu0 %2839
        %v2841 = vsel %vm2819, %v870, -inf
        %2842 = vmax.xlane.f32.xlu0 %v2841
        %v2843 = vpop.xlane.xlu0 %2842
        %v2844 = vsel %vm2819, %v875, -inf
        %2845 = vmax.xlane.f32.xlu0 %v2844
        %v2846 = vpop.xlane.xlu0 %2845
        %v2847 = vsel %vm2819, %v880, -inf
        %2848 = vmax.xlane.f32.xlu0 %v2847
        %v2849 = vpop.xlane.xlu0 %2848
        %v2850 = vsel %vm2819, %v885, -inf
        %2851 = vmax.xlane.f32.xlu0 %v2850
        %v2852 = vpop.xlane.xlu0 %2851
        %v2853 = vsel %vm2819, %v890, -inf
        %2854 = vmax.xlane.f32.xlu0 %v2853
        %v2855 = vpop.xlane.xlu0 %2854
        %v2856 = vsel %vm2819, %v895, -inf
        %2857 = vmax.xlane.f32.xlu0 %v2856
        %v2858 = vpop.xlane.xlu0 %2857
        %v2859 = vsel %vm2819, %v900, -inf
        %2860 = vmax.xlane.f32.xlu0 %v2859
        %v2861 = vpop.xlane.xlu0 %2860
        %v2862 = vsel %vm2819, %v905, -inf
        %2863 = vmax.xlane.f32.xlu0 %v2862
        %v2864 = vpop.xlane.xlu0 %2863
        %v2865 = vsel %vm2819, %v910, -inf
        %2866 = vmax.xlane.f32.xlu0 %v2865
        %v2867 = vpop.xlane.xlu0 %2866
        %v2868 = vsel %vm2819, %v915, -inf
        %2869 = vmax.xlane.f32.xlu0 %v2868
        %v2870 = vpop.xlane.xlu0 %2869
        %v2871 = vsel %vm2819, %v920, -inf
        %2872 = vmax.xlane.f32.xlu0 %v2871
        %v2873 = vpop.xlane.xlu0 %2872
        %v2874 = vsel %vm2819, %v925, -inf
        %2875 = vmax.xlane.f32.xlu0 %v2874
        %v2876 = vpop.xlane.xlu0 %2875
        %v2877 = vsel %vm2819, %v930, -inf
        %2878 = vmax.xlane.f32.xlu0 %v2877
        %v2879 = vpop.xlane.xlu0 %2878
        %v2880 = vsel %vm2819, %v935, -inf
        %2881 = vmax.xlane.f32.xlu0 %v2880
        %v2882 = vpop.xlane.xlu0 %2881
        %v2883 = vsel %vm2819, %v940, -inf
        %2884 = vmax.xlane.f32.xlu0 %v2883
        %v2885 = vpop.xlane.xlu0 %2884
        %v2886 = vsel %vm2819, %v945, -inf
        %2887 = vmax.xlane.f32.xlu0 %v2886
        %v2888 = vpop.xlane.xlu0 %2887
        %v2889 = vsel %vm2819, %v950, -inf
        %2890 = vmax.xlane.f32.xlu0 %v2889
        %v2891 = vpop.xlane.xlu0 %2890
        %v2892 = vsel %vm2819, %v955, -inf
        %2893 = vmax.xlane.f32.xlu0 %v2892
        %v2894 = vpop.xlane.xlu0 %2893
        %v2895 = vsel %vm2819, %v960, -inf
        %2896 = vmax.xlane.f32.xlu0 %v2895
        %v2897 = vpop.xlane.xlu0 %2896
        %v2898 = vsel %vm2819, %v965, -inf
        %2899 = vmax.xlane.f32.xlu0 %v2898
        %v2900 = vpop.xlane.xlu0 %2899
        %v2901 = vsel %vm2819, %v970, -inf
        %2902 = vmax.xlane.f32.xlu0 %v2901
        %v2903 = vpop.xlane.xlu0 %2902
        %v2904 = vsel %vm2819, %v975, -inf
        %2905 = vmax.xlane.f32.xlu0 %v2904
        %v2906 = vpop.xlane.xlu0 %2905
        %v2907 = vsel %vm2819, %v980, -inf
        %2908 = vmax.xlane.f32.xlu0 %v2907
        %v2909 = vpop.xlane.xlu0 %2908
        %v2910 = vsel %vm2819, %v985, -inf
        %2911 = vmax.xlane.f32.xlu0 %v2910
        %v2912 = vpop.xlane.xlu0 %2911
        %v2913 = vsel %vm2819, %v990, -inf
        %2914 = vmax.xlane.f32.xlu0 %v2913
        %v2915 = vpop.xlane.xlu0 %2914
        %v2916 = vsel %vm2819, %v995, -inf
        %2917 = vmax.xlane.f32.xlu0 %v2916
        %v2918 = vpop.xlane.xlu0 %2917
        %v2919 = vsel %vm2819, %v1000, -inf
        %2920 = vmax.xlane.f32.xlu0 %v2919
        %v2921 = vpop.xlane.xlu0 %2920
        %v2922 = vsel %vm2819, %v1005, -inf
        %2923 = vmax.xlane.f32.xlu0 %v2922
        %v2924 = vpop.xlane.xlu0 %2923
        %v2925 = vsel %vm2819, %v1010, -inf
        %2926 = vmax.xlane.f32.xlu0 %v2925
        %v2927 = vpop.xlane.xlu0 %2926
        %v2928 = vsel %vm2819, %v1015, -inf
        %2929 = vmax.xlane.f32.xlu0 %v2928
        %v2930 = vpop.xlane.xlu0 %2929
        %v2931 = vsel %vm2819, %v1020, -inf
        %2932 = vmax.xlane.f32.xlu0 %v2931
        %v2933 = vpop.xlane.xlu0 %2932
        %v2934 = vsel %vm2819, %v1025, -inf
        %2935 = vmax.xlane.f32.xlu0 %v2934
        %v2936 = vpop.xlane.xlu0 %2935
        %v2937 = vsel %vm2819, %v1030, -inf
        %2938 = vmax.xlane.f32.xlu0 %v2937
        %v2939 = vpop.xlane.xlu0 %2938
        %v2940 = vsel %vm2819, %v1035, -inf
        %2941 = vmax.xlane.f32.xlu0 %v2940
        %v2942 = vpop.xlane.xlu0 %2941
        %v2943 = vsel %vm2819, %v1040, -inf
        %2944 = vmax.xlane.f32.xlu0 %v2943
        %v2945 = vpop.xlane.xlu0 %2944
        %v2946 = vsel %vm2819, %v1045, -inf
        %2947 = vmax.xlane.f32.xlu0 %v2946
        %v2948 = vpop.xlane.xlu0 %2947
        %v2949 = vsel %vm2819, %v1050, -inf
        %2950 = vmax.xlane.f32.xlu0 %v2949
        %v2951 = vpop.xlane.xlu0 %2950
        %v2952 = vsel %vm2819, %v1055, -inf
        %2953 = vmax.xlane.f32.xlu0 %v2952
        %v2954 = vpop.xlane.xlu0 %2953
        %v2955 = vsel %vm2819, %v1060, -inf
        %2956 = vmax.xlane.f32.xlu0 %v2955
        %v2957 = vpop.xlane.xlu0 %2956
        %v2958 = vsel %vm2819, %v1065, -inf
        %2959 = vmax.xlane.f32.xlu0 %v2958
        %v2960 = vpop.xlane.xlu0 %2959
        %v2961 = vsel %vm2819, %v1070, -inf
        %2962 = vmax.xlane.f32.xlu0 %v2961
        %v2963 = vpop.xlane.xlu0 %2962
        %v2964 = vsel %vm2819, %v1075, -inf
        %2965 = vmax.xlane.f32.xlu0 %v2964
        %v2966 = vpop.xlane.xlu0 %2965
        %v2967 = vsel %vm2819, %v1080, -inf
        %2968 = vmax.xlane.f32.xlu0 %v2967
        %v2969 = vpop.xlane.xlu0 %2968
        %v2970 = vsel %vm2819, %v1085, -inf
        %2971 = vmax.xlane.f32.xlu0 %v2970
        %v2972 = vpop.xlane.xlu0 %2971
        %v2973 = vsel %vm2819, %v1090, -inf
        %2974 = vmax.xlane.f32.xlu0 %v2973
        %v2975 = vpop.xlane.xlu0 %2974
        %v2976 = vsel %vm2819, %v1095, -inf
        %2977 = vmax.xlane.f32.xlu0 %v2976
        %v2978 = vpop.xlane.xlu0 %2977
        %v2979 = vsel %vm2819, %v1100, -inf
        %2980 = vmax.xlane.f32.xlu0 %v2979
        %v2981 = vpop.xlane.xlu0 %2980
        %v2982 = vsel %vm2819, %v1105, -inf
        %2983 = vmax.xlane.f32.xlu0 %v2982
        %v2984 = vpop.xlane.xlu0 %2983
        %v2985 = vsel %vm2819, %v1110, -inf
        %2986 = vmax.xlane.f32.xlu0 %v2985
        %v2987 = vpop.xlane.xlu0 %2986
        %v2988 = vsel %vm2819, %v1115, -inf
        %2989 = vmax.xlane.f32.xlu0 %v2988
        %v2990 = vpop.xlane.xlu0 %2989
        %v2991 = vsel %vm2819, %v1120, -inf
        %2992 = vmax.xlane.f32.xlu0 %v2991
        %v2993 = vpop.xlane.xlu0 %2992
        %v2994 = vsel %vm2819, %v1125, -inf
        %2995 = vmax.xlane.f32.xlu0 %v2994
        %v2996 = vpop.xlane.xlu0 %2995
        %v2997 = vsel %vm2819, %v1130, -inf
        %2998 = vmax.xlane.f32.xlu0 %v2997
        %v2999 = vpop.xlane.xlu0 %2998
        %v3000 = vsel %vm2819, %v1135, -inf
        %3001 = vmax.xlane.f32.xlu0 %v3000
        %v3002 = vpop.xlane.xlu0 %3001
        %v3003 = vsel %vm2819, %v1140, -inf
        %3004 = vmax.xlane.f32.xlu0 %v3003
        %v3005 = vpop.xlane.xlu0 %3004
        %v3006 = vsel %vm2819, %v1145, -inf
        %3007 = vmax.xlane.f32.xlu0 %v3006
        %v3008 = vpop.xlane.xlu0 %3007
        %v3009 = vsel %vm2819, %v1150, -inf
        %3010 = vmax.xlane.f32.xlu0 %v3009
        %v3011 = vpop.xlane.xlu0 %3010
        %v3012 = vsub.f32 %v835, %v2822
        %v3013 = vsub.f32 %v840, %v2825
        %v3014 = vsub.f32 %v845, %v2828
        %v3015 = vsub.f32 %v850, %v2831
        %v3016 = vsub.f32 %v855, %v2834
        %v3017 = vsub.f32 %v860, %v2837
        %v3018 = vsub.f32 %v865, %v2840
        %v3019 = vsub.f32 %v870, %v2843
        %v3020 = vsub.f32 %v875, %v2846
        %v3021 = vsub.f32 %v880, %v2849
        %v3022 = vsub.f32 %v885, %v2852
        %v3023 = vsub.f32 %v890, %v2855
        %v3024 = vsub.f32 %v895, %v2858
        %v3025 = vsub.f32 %v900, %v2861
        %v3026 = vsub.f32 %v905, %v2864
        %v3027 = vsub.f32 %v910, %v2867
        %v3028 = vsub.f32 %v915, %v2870
        %v3029 = vsub.f32 %v920, %v2873
        %v3030 = vsub.f32 %v925, %v2876
        %v3031 = vsub.f32 %v930, %v2879
        %v3032 = vsub.f32 %v935, %v2882
        %v3033 = vsub.f32 %v940, %v2885
        %v3034 = vsub.f32 %v945, %v2888
        %v3035 = vsub.f32 %v950, %v2891
        %v3036 = vsub.f32 %v955, %v2894
        %v3037 = vsub.f32 %v960, %v2897
        %v3038 = vsub.f32 %v965, %v2900
        %v3039 = vsub.f32 %v970, %v2903
        %v3040 = vsub.f32 %v975, %v2906
        %v3041 = vsub.f32 %v980, %v2909
        %v3042 = vsub.f32 %v985, %v2912
        %v3043 = vsub.f32 %v990, %v2915
        %v3044 = vsub.f32 %v995, %v2918
        %v3045 = vsub.f32 %v1000, %v2921
        %v3046 = vsub.f32 %v1005, %v2924
        %v3047 = vsub.f32 %v1010, %v2927
        %v3048 = vsub.f32 %v1015, %v2930
        %v3049 = vsub.f32 %v1020, %v2933
        %v3050 = vsub.f32 %v1025, %v2936
        %v3051 = vsub.f32 %v1030, %v2939
        %v3052 = vsub.f32 %v1035, %v2942
        %v3053 = vsub.f32 %v1040, %v2945
        %v3054 = vsub.f32 %v1045, %v2948
        %v3055 = vsub.f32 %v1050, %v2951
        %v3056 = vsub.f32 %v1055, %v2954
        %v3057 = vsub.f32 %v1060, %v2957
        %v3058 = vsub.f32 %v1065, %v2960
        %v3059 = vsub.f32 %v1070, %v2963
        %v3060 = vsub.f32 %v1075, %v2966
        %v3061 = vsub.f32 %v1080, %v2969
        %v3062 = vsub.f32 %v1085, %v2972
        %v3063 = vsub.f32 %v1090, %v2975
        %v3064 = vsub.f32 %v1095, %v2978
        %v3065 = vsub.f32 %v1100, %v2981
        %v3066 = vsub.f32 %v1105, %v2984
        %v3067 = vsub.f32 %v1110, %v2987
        %v3068 = vsub.f32 %v1115, %v2990
        %v3069 = vsub.f32 %v1120, %v2993
        %v3070 = vsub.f32 %v1125, %v2996
        %v3071 = vsub.f32 %v1130, %v2999
        %v3072 = vsub.f32 %v1135, %v3002
        %v3073 = vsub.f32 %v1140, %v3005
        %v3074 = vsub.f32 %v1145, %v3008
        %v3075 = vsub.f32 %v1150, %v3011
        %v3076 = vmul.f32 %v3012, 1.442695
        %v3077 = vpow.pop %v3076
        %v3078 = vmul.f32 %v3013, 1.442695
        %v3079 = vpow.pop %v3078
        %v3080 = vmul.f32 %v3014, 1.442695
        %v3081 = vpow.pop %v3080
        %v3082 = vmul.f32 %v3015, 1.442695
        %v3083 = vpow.pop %v3082
        %v3084 = vmul.f32 %v3016, 1.442695
        %v3085 = vpow.pop %v3084
        %v3086 = vmul.f32 %v3017, 1.442695
        %v3087 = vpow.pop %v3086
        %v3088 = vmul.f32 %v3018, 1.442695
        %v3089 = vpow.pop %v3088
        %v3090 = vmul.f32 %v3019, 1.442695
        %v3091 = vpow.pop %v3090
        %v3092 = vmul.f32 %v3020, 1.442695
        %v3093 = vpow.pop %v3092
        %v3094 = vmul.f32 %v3021, 1.442695
        %v3095 = vpow.pop %v3094
        %v3096 = vmul.f32 %v3022, 1.442695
        %v3097 = vpow.pop %v3096
        %v3098 = vmul.f32 %v3023, 1.442695
        %v3099 = vpow.pop %v3098
        %v3100 = vmul.f32 %v3024, 1.442695
        %v3101 = vpow.pop %v3100
        %v3102 = vmul.f32 %v3025, 1.442695
        %v3103 = vpow.pop %v3102
        %v3104 = vmul.f32 %v3026, 1.442695
        %v3105 = vpow.pop %v3104
        %v3106 = vmul.f32 %v3027, 1.442695
        %v3107 = vpow.pop %v3106
        %v3108 = vmul.f32 %v3028, 1.442695
        %v3109 = vpow.pop %v3108
        %v3110 = vmul.f32 %v3029, 1.442695
        %v3111 = vpow.pop %v3110
        %v3112 = vmul.f32 %v3030, 1.442695
        %v3113 = vpow.pop %v3112
        %v3114 = vmul.f32 %v3031, 1.442695
        %v3115 = vpow.pop %v3114
        %v3116 = vmul.f32 %v3032, 1.442695
        %v3117 = vpow.pop %v3116
        %v3118 = vmul.f32 %v3033, 1.442695
        %v3119 = vpow.pop %v3118
        %v3120 = vmul.f32 %v3034, 1.442695
        %v3121 = vpow.pop %v3120
        %v3122 = vmul.f32 %v3035, 1.442695
        %v3123 = vpow.pop %v3122
        %v3124 = vmul.f32 %v3036, 1.442695
        %v3125 = vpow.pop %v3124
        %v3126 = vmul.f32 %v3037, 1.442695
        %v3127 = vpow.pop %v3126
        %v3128 = vmul.f32 %v3038, 1.442695
        %v3129 = vpow.pop %v3128
        %v3130 = vmul.f32 %v3039, 1.442695
        %v3131 = vpow.pop %v3130
        %v3132 = vmul.f32 %v3040, 1.442695
        %v3133 = vpow.pop %v3132
        %v3134 = vmul.f32 %v3041, 1.442695
        %v3135 = vpow.pop %v3134
        %v3136 = vmul.f32 %v3042, 1.442695
        %v3137 = vpow.pop %v3136
        %v3138 = vmul.f32 %v3043, 1.442695
        %v3139 = vpow.pop %v3138
        %v3140 = vmul.f32 %v3044, 1.442695
        %v3141 = vpow.pop %v3140
        %v3142 = vmul.f32 %v3045, 1.442695
        %v3143 = vpow.pop %v3142
        %v3144 = vmul.f32 %v3046, 1.442695
        %v3145 = vpow.pop %v3144
        %v3146 = vmul.f32 %v3047, 1.442695
        %v3147 = vpow.pop %v3146
        %v3148 = vmul.f32 %v3048, 1.442695
        %v3149 = vpow.pop %v3148
        %v3150 = vmul.f32 %v3049, 1.442695
        %v3151 = vpow.pop %v3150
        %v3152 = vmul.f32 %v3050, 1.442695
        %v3153 = vpow.pop %v3152
        %v3154 = vmul.f32 %v3051, 1.442695
        %v3155 = vpow.pop %v3154
        %v3156 = vmul.f32 %v3052, 1.442695
        %v3157 = vpow.pop %v3156
        %v3158 = vmul.f32 %v3053, 1.442695
        %v3159 = vpow.pop %v3158
        %v3160 = vmul.f32 %v3054, 1.442695
        %v3161 = vpow.pop %v3160
        %v3162 = vmul.f32 %v3055, 1.442695
        %v3163 = vpow.pop %v3162
        %v3164 = vmul.f32 %v3056, 1.442695
        %v3165 = vpow.pop %v3164
        %v3166 = vmul.f32 %v3057, 1.442695
        %v3167 = vpow.pop %v3166
        %v3168 = vmul.f32 %v3058, 1.442695
        %v3169 = vpow.pop %v3168
        %v3170 = vmul.f32 %v3059, 1.442695
        %v3171 = vpow.pop %v3170
        %v3172 = vmul.f32 %v3060, 1.442695
        %v3173 = vpow.pop %v3172
        %v3174 = vmul.f32 %v3061, 1.442695
        %v3175 = vpow.pop %v3174
        %v3176 = vmul.f32 %v3062, 1.442695
        %v3177 = vpow.pop %v3176
        %v3178 = vmul.f32 %v3063, 1.442695
        %v3179 = vpow.pop %v3178
        %v3180 = vmul.f32 %v3064, 1.442695
        %v3181 = vpow.pop %v3180
        %v3182 = vmul.f32 %v3065, 1.442695
        %v3183 = vpow.pop %v3182
        %v3184 = vmul.f32 %v3066, 1.442695
        %v3185 = vpow.pop %v3184
        %v3186 = vmul.f32 %v3067, 1.442695
        %v3187 = vpow.pop %v3186
        %v3188 = vmul.f32 %v3068, 1.442695
        %v3189 = vpow.pop %v3188
        %v3190 = vmul.f32 %v3069, 1.442695
        %v3191 = vpow.pop %v3190
        %v3192 = vmul.f32 %v3070, 1.442695
        %v3193 = vpow.pop %v3192
        %v3194 = vmul.f32 %v3071, 1.442695
        %v3195 = vpow.pop %v3194
        %v3196 = vmul.f32 %v3072, 1.442695
        %v3197 = vpow.pop %v3196
        %v3198 = vmul.f32 %v3073, 1.442695
        %v3199 = vpow.pop %v3198
        %v3200 = vmul.f32 %v3074, 1.442695
        %v3201 = vpow.pop %v3200
        %v3202 = vmul.f32 %v3075, 1.442695
        %v3203 = vpow.pop %v3202
        %3268 = vrot.lane.b32.xlu0 %v3077, 96
        %v3269 = vpop.permute.xlu0 %3268
        %3270 = vrot.lane.b32.xlu0 %v3079, 96
        %v3271 = vpop.permute.xlu0 %3270
        %3272 = vrot.lane.b32.xlu0 %v3081, 96
        %v3273 = vpop.permute.xlu0 %3272
        %3274 = vrot.lane.b32.xlu0 %v3083, 96
        %v3275 = vpop.permute.xlu0 %3274
        %3276 = vrot.lane.b32.xlu0 %v3085, 96
        %v3277 = vpop.permute.xlu0 %3276
        %3278 = vrot.lane.b32.xlu0 %v3087, 96
        %v3279 = vpop.permute.xlu0 %3278
        %3280 = vrot.lane.b32.xlu0 %v3089, 96
        %v3281 = vpop.permute.xlu0 %3280
        %3282 = vrot.lane.b32.xlu0 %v3091, 96
        %v3283 = vpop.permute.xlu0 %3282
        %3284 = vrot.lane.b32.xlu0 %v3093, 96
        %v3285 = vpop.permute.xlu0 %3284
        %3286 = vrot.lane.b32.xlu0 %v3095, 96
        %v3287 = vpop.permute.xlu0 %3286
        %3288 = vrot.lane.b32.xlu0 %v3097, 96
        %v3289 = vpop.permute.xlu0 %3288
        %3290 = vrot.lane.b32.xlu0 %v3099, 96
        %v3291 = vpop.permute.xlu0 %3290
        %3292 = vrot.lane.b32.xlu0 %v3101, 96
        %v3293 = vpop.permute.xlu0 %3292
        %3294 = vrot.lane.b32.xlu0 %v3103, 96
        %v3295 = vpop.permute.xlu0 %3294
        %3296 = vrot.lane.b32.xlu0 %v3105, 96
        %v3297 = vpop.permute.xlu0 %3296
        %3298 = vrot.lane.b32.xlu0 %v3107, 96
        %v3299 = vpop.permute.xlu0 %3298
        %3300 = vrot.lane.b32.xlu0 %v3109, 96
        %v3301 = vpop.permute.xlu0 %3300
        %3302 = vrot.lane.b32.xlu0 %v3111, 96
        %v3303 = vpop.permute.xlu0 %3302
        %3304 = vrot.lane.b32.xlu0 %v3113, 96
        %v3305 = vpop.permute.xlu0 %3304
        %3306 = vrot.lane.b32.xlu0 %v3115, 96
        %v3307 = vpop.permute.xlu0 %3306
        %3308 = vrot.lane.b32.xlu0 %v3117, 96
        %v3309 = vpop.permute.xlu0 %3308
        %3310 = vrot.lane.b32.xlu0 %v3119, 96
        %v3311 = vpop.permute.xlu0 %3310
        %3312 = vrot.lane.b32.xlu0 %v3121, 96
        %v3313 = vpop.permute.xlu0 %3312
        %3314 = vrot.lane.b32.xlu0 %v3123, 96
        %v3315 = vpop.permute.xlu0 %3314
        %3316 = vrot.lane.b32.xlu0 %v3125, 96
        %v3317 = vpop.permute.xlu0 %3316
        %3318 = vrot.lane.b32.xlu0 %v3127, 96
        %v3319 = vpop.permute.xlu0 %3318
        %3320 = vrot.lane.b32.xlu0 %v3129, 96
        %v3321 = vpop.permute.xlu0 %3320
        %3322 = vrot.lane.b32.xlu0 %v3131, 96
        %v3323 = vpop.permute.xlu0 %3322
        %3324 = vrot.lane.b32.xlu0 %v3133, 96
        %v3325 = vpop.permute.xlu0 %3324
        %3326 = vrot.lane.b32.xlu0 %v3135, 96
        %v3327 = vpop.permute.xlu0 %3326
        %3328 = vrot.lane.b32.xlu0 %v3137, 96
        %v3329 = vpop.permute.xlu0 %3328
        %3330 = vrot.lane.b32.xlu0 %v3139, 96
        %v3331 = vpop.permute.xlu0 %3330
        %3332 = vrot.lane.b32.xlu0 %v3141, 96
        %v3333 = vpop.permute.xlu0 %3332
        %3334 = vrot.lane.b32.xlu0 %v3143, 96
        %v3335 = vpop.permute.xlu0 %3334
        %3336 = vrot.lane.b32.xlu0 %v3145, 96
        %v3337 = vpop.permute.xlu0 %3336
        %3338 = vrot.lane.b32.xlu0 %v3147, 96
        %v3339 = vpop.permute.xlu0 %3338
        %3340 = vrot.lane.b32.xlu0 %v3149, 96
        %v3341 = vpop.permute.xlu0 %3340
        %3342 = vrot.lane.b32.xlu0 %v3151, 96
        %v3343 = vpop.permute.xlu0 %3342
        %3344 = vrot.lane.b32.xlu0 %v3153, 96
        %v3345 = vpop.permute.xlu0 %3344
        %3346 = vrot.lane.b32.xlu0 %v3155, 96
        %v3347 = vpop.permute.xlu0 %3346
        %3348 = vrot.lane.b32.xlu0 %v3157, 96
        %v3349 = vpop.permute.xlu0 %3348
        %3350 = vrot.lane.b32.xlu0 %v3159, 96
        %v3351 = vpop.permute.xlu0 %3350
        %3352 = vrot.lane.b32.xlu0 %v3161, 96
        %v3353 = vpop.permute.xlu0 %3352
        %3354 = vrot.lane.b32.xlu0 %v3163, 96
        %v3355 = vpop.permute.xlu0 %3354
        %3356 = vrot.lane.b32.xlu0 %v3165, 96
        %v3357 = vpop.permute.xlu0 %3356
        %3358 = vrot.lane.b32.xlu0 %v3167, 96
        %v3359 = vpop.permute.xlu0 %3358
        %3360 = vrot.lane.b32.xlu0 %v3169, 96
        %v3361 = vpop.permute.xlu0 %3360
        %3362 = vrot.lane.b32.xlu0 %v3171, 96
        %v3363 = vpop.permute.xlu0 %3362
        %3364 = vrot.lane.b32.xlu0 %v3173, 96
        %v3365 = vpop.permute.xlu0 %3364
        %3366 = vrot.lane.b32.xlu0 %v3175, 96
        %v3367 = vpop.permute.xlu0 %3366
        %3368 = vrot.lane.b32.xlu0 %v3177, 96
        %v3369 = vpop.permute.xlu0 %3368
        %3370 = vrot.lane.b32.xlu0 %v3179, 96
        %v3371 = vpop.permute.xlu0 %3370
        %3372 = vrot.lane.b32.xlu0 %v3181, 96
        %v3373 = vpop.permute.xlu0 %3372
        %3374 = vrot.lane.b32.xlu0 %v3183, 96
        %v3375 = vpop.permute.xlu0 %3374
        %3376 = vrot.lane.b32.xlu0 %v3185, 96
        %v3377 = vpop.permute.xlu0 %3376
        %3378 = vrot.lane.b32.xlu0 %v3187, 96
        %v3379 = vpop.permute.xlu0 %3378
        %3380 = vrot.lane.b32.xlu0 %v3189, 96
        %v3381 = vpop.permute.xlu0 %3380
        %3382 = vrot.lane.b32.xlu0 %v3191, 96
        %v3383 = vpop.permute.xlu0 %3382
        %3384 = vrot.lane.b32.xlu0 %v3193, 96
        %v3385 = vpop.permute.xlu0 %3384
        %3386 = vrot.lane.b32.xlu0 %v3195, 96
        %v3387 = vpop.permute.xlu0 %3386
        %3388 = vrot.lane.b32.xlu0 %v3197, 96
        %v3389 = vpop.permute.xlu0 %3388
        %3390 = vrot.lane.b32.xlu0 %v3199, 96
        %v3391 = vpop.permute.xlu0 %3390
        %3392 = vrot.lane.b32.xlu0 %v3201, 96
        %v3393 = vpop.permute.xlu0 %3392
        %3394 = vrot.lane.b32.xlu0 %v3203, 96
        %v3395 = vpop.permute.xlu0 %3394
        %v3460 = vsel %vm1153, %v3269, 0.0
        %3461 = vadd.xlane.f32.xlu0 %v3460
        %v3462 = vpop.xlane.xlu0 %3461
        %v3463 = vsel %vm1153, %v3271, 0.0
        %3464 = vadd.xlane.f32.xlu0 %v3463
        %v3465 = vpop.xlane.xlu0 %3464
        %v3466 = vsel %vm1153, %v3273, 0.0
        %3467 = vadd.xlane.f32.xlu0 %v3466
        %v3468 = vpop.xlane.xlu0 %3467
        %v3469 = vsel %vm1153, %v3275, 0.0
        %3470 = vadd.xlane.f32.xlu0 %v3469
        %v3471 = vpop.xlane.xlu0 %3470
        %v3472 = vsel %vm1153, %v3277, 0.0
        %3473 = vadd.xlane.f32.xlu0 %v3472
        %v3474 = vpop.xlane.xlu0 %3473
        %v3475 = vsel %vm1153, %v3279, 0.0
        %3476 = vadd.xlane.f32.xlu0 %v3475
        %v3477 = vpop.xlane.xlu0 %3476
        %v3478 = vsel %vm1153, %v3281, 0.0
        %3479 = vadd.xlane.f32.xlu0 %v3478
        %v3480 = vpop.xlane.xlu0 %3479
        %v3481 = vsel %vm1153, %v3283, 0.0
        %3482 = vadd.xlane.f32.xlu0 %v3481
        %v3483 = vpop.xlane.xlu0 %3482
        %v3484 = vsel %vm1153, %v3285, 0.0
        %3485 = vadd.xlane.f32.xlu0 %v3484
        %v3486 = vpop.xlane.xlu0 %3485
        %v3487 = vsel %vm1153, %v3287, 0.0
        %3488 = vadd.xlane.f32.xlu0 %v3487
        %v3489 = vpop.xlane.xlu0 %3488
        %v3490 = vsel %vm1153, %v3289, 0.0
        %3491 = vadd.xlane.f32.xlu0 %v3490
        %v3492 = vpop.xlane.xlu0 %3491
        %v3493 = vsel %vm1153, %v3291, 0.0
        %3494 = vadd.xlane.f32.xlu0 %v3493
        %v3495 = vpop.xlane.xlu0 %3494
        %v3496 = vsel %vm1153, %v3293, 0.0
        %3497 = vadd.xlane.f32.xlu0 %v3496
        %v3498 = vpop.xlane.xlu0 %3497
        %v3499 = vsel %vm1153, %v3295, 0.0
        %3500 = vadd.xlane.f32.xlu0 %v3499
        %v3501 = vpop.xlane.xlu0 %3500
        %v3502 = vsel %vm1153, %v3297, 0.0
        %3503 = vadd.xlane.f32.xlu0 %v3502
        %v3504 = vpop.xlane.xlu0 %3503
        %v3505 = vsel %vm1153, %v3299, 0.0
        %3506 = vadd.xlane.f32.xlu0 %v3505
        %v3507 = vpop.xlane.xlu0 %3506
        %v3508 = vsel %vm1153, %v3301, 0.0
        %3509 = vadd.xlane.f32.xlu0 %v3508
        %v3510 = vpop.xlane.xlu0 %3509
        %v3511 = vsel %vm1153, %v3303, 0.0
        %3512 = vadd.xlane.f32.xlu0 %v3511
        %v3513 = vpop.xlane.xlu0 %3512
        %v3514 = vsel %vm1153, %v3305, 0.0
        %3515 = vadd.xlane.f32.xlu0 %v3514
        %v3516 = vpop.xlane.xlu0 %3515
        %v3517 = vsel %vm1153, %v3307, 0.0
        %3518 = vadd.xlane.f32.xlu0 %v3517
        %v3519 = vpop.xlane.xlu0 %3518
        %v3520 = vsel %vm1153, %v3309, 0.0
        %3521 = vadd.xlane.f32.xlu0 %v3520
        %v3522 = vpop.xlane.xlu0 %3521
        %v3523 = vsel %vm1153, %v3311, 0.0
        %3524 = vadd.xlane.f32.xlu0 %v3523
        %v3525 = vpop.xlane.xlu0 %3524
        %v3526 = vsel %vm1153, %v3313, 0.0
        %3527 = vadd.xlane.f32.xlu0 %v3526
        %v3528 = vpop.xlane.xlu0 %3527
        %v3529 = vsel %vm1153, %v3315, 0.0
        %3530 = vadd.xlane.f32.xlu0 %v3529
        %v3531 = vpop.xlane.xlu0 %3530
        %v3532 = vsel %vm1153, %v3317, 0.0
        %3533 = vadd.xlane.f32.xlu0 %v3532
        %v3534 = vpop.xlane.xlu0 %3533
        %v3535 = vsel %vm1153, %v3319, 0.0
        %3536 = vadd.xlane.f32.xlu0 %v3535
        %v3537 = vpop.xlane.xlu0 %3536
        %v3538 = vsel %vm1153, %v3321, 0.0
        %3539 = vadd.xlane.f32.xlu0 %v3538
        %v3540 = vpop.xlane.xlu0 %3539
        %v3541 = vsel %vm1153, %v3323, 0.0
        %3542 = vadd.xlane.f32.xlu0 %v3541
        %v3543 = vpop.xlane.xlu0 %3542
        %v3544 = vsel %vm1153, %v3325, 0.0
        %3545 = vadd.xlane.f32.xlu0 %v3544
        %v3546 = vpop.xlane.xlu0 %3545
        %v3547 = vsel %vm1153, %v3327, 0.0
        %3548 = vadd.xlane.f32.xlu0 %v3547
        %v3549 = vpop.xlane.xlu0 %3548
        %v3550 = vsel %vm1153, %v3329, 0.0
        %3551 = vadd.xlane.f32.xlu0 %v3550
        %v3552 = vpop.xlane.xlu0 %3551
        %v3553 = vsel %vm1153, %v3331, 0.0
        %3554 = vadd.xlane.f32.xlu0 %v3553
        %v3555 = vpop.xlane.xlu0 %3554
        %v3556 = vsel %vm1153, %v3333, 0.0
        %3557 = vadd.xlane.f32.xlu0 %v3556
        %v3558 = vpop.xlane.xlu0 %3557
        %v3559 = vsel %vm1153, %v3335, 0.0
        %3560 = vadd.xlane.f32.xlu0 %v3559
        %v3561 = vpop.xlane.xlu0 %3560
        %v3562 = vsel %vm1153, %v3337, 0.0
        %3563 = vadd.xlane.f32.xlu0 %v3562
        %v3564 = vpop.xlane.xlu0 %3563
        %v3565 = vsel %vm1153, %v3339, 0.0
        %3566 = vadd.xlane.f32.xlu0 %v3565
        %v3567 = vpop.xlane.xlu0 %3566
        %v3568 = vsel %vm1153, %v3341, 0.0
        %3569 = vadd.xlane.f32.xlu0 %v3568
        %v3570 = vpop.xlane.xlu0 %3569
        %v3571 = vsel %vm1153, %v3343, 0.0
        %3572 = vadd.xlane.f32.xlu0 %v3571
        %v3573 = vpop.xlane.xlu0 %3572
        %v3574 = vsel %vm1153, %v3345, 0.0
        %3575 = vadd.xlane.f32.xlu0 %v3574
        %v3576 = vpop.xlane.xlu0 %3575
        %v3577 = vsel %vm1153, %v3347, 0.0
        %3578 = vadd.xlane.f32.xlu0 %v3577
        %v3579 = vpop.xlane.xlu0 %3578
        %v3580 = vsel %vm1153, %v3349, 0.0
        %3581 = vadd.xlane.f32.xlu0 %v3580
        %v3582 = vpop.xlane.xlu0 %3581
        %v3583 = vsel %vm1153, %v3351, 0.0
        %3584 = vadd.xlane.f32.xlu0 %v3583
        %v3585 = vpop.xlane.xlu0 %3584
        %v3586 = vsel %vm1153, %v3353, 0.0
        %3587 = vadd.xlane.f32.xlu0 %v3586
        %v3588 = vpop.xlane.xlu0 %3587
        %v3589 = vsel %vm1153, %v3355, 0.0
        %3590 = vadd.xlane.f32.xlu0 %v3589
        %v3591 = vpop.xlane.xlu0 %3590
        %v3592 = vsel %vm1153, %v3357, 0.0
        %3593 = vadd.xlane.f32.xlu0 %v3592
        %v3594 = vpop.xlane.xlu0 %3593
        %v3595 = vsel %vm1153, %v3359, 0.0
        %3596 = vadd.xlane.f32.xlu0 %v3595
        %v3597 = vpop.xlane.xlu0 %3596
        %v3598 = vsel %vm1153, %v3361, 0.0
        %3599 = vadd.xlane.f32.xlu0 %v3598
        %v3600 = vpop.xlane.xlu0 %3599
        %v3601 = vsel %vm1153, %v3363, 0.0
        %3602 = vadd.xlane.f32.xlu0 %v3601
        %v3603 = vpop.xlane.xlu0 %3602
        %v3604 = vsel %vm1153, %v3365, 0.0
        %3605 = vadd.xlane.f32.xlu0 %v3604
        %v3606 = vpop.xlane.xlu0 %3605
        %v3607 = vsel %vm1153, %v3367, 0.0
        %3608 = vadd.xlane.f32.xlu0 %v3607
        %v3609 = vpop.xlane.xlu0 %3608
        %v3610 = vsel %vm1153, %v3369, 0.0
        %3611 = vadd.xlane.f32.xlu0 %v3610
        %v3612 = vpop.xlane.xlu0 %3611
        %v3613 = vsel %vm1153, %v3371, 0.0
        %3614 = vadd.xlane.f32.xlu0 %v3613
        %v3615 = vpop.xlane.xlu0 %3614
        %v3616 = vsel %vm1153, %v3373, 0.0
        %3617 = vadd.xlane.f32.xlu0 %v3616
        %v3618 = vpop.xlane.xlu0 %3617
        %v3619 = vsel %vm1153, %v3375, 0.0
        %3620 = vadd.xlane.f32.xlu0 %v3619
        %v3621 = vpop.xlane.xlu0 %3620
        %v3622 = vsel %vm1153, %v3377, 0.0
        %3623 = vadd.xlane.f32.xlu0 %v3622
        %v3624 = vpop.xlane.xlu0 %3623
        %v3625 = vsel %vm1153, %v3379, 0.0
        %3626 = vadd.xlane.f32.xlu0 %v3625
        %v3627 = vpop.xlane.xlu0 %3626
        %v3628 = vsel %vm1153, %v3381, 0.0
        %3629 = vadd.xlane.f32.xlu0 %v3628
        %v3630 = vpop.xlane.xlu0 %3629
        %v3631 = vsel %vm1153, %v3383, 0.0
        %3632 = vadd.xlane.f32.xlu0 %v3631
        %v3633 = vpop.xlane.xlu0 %3632
        %v3634 = vsel %vm1153, %v3385, 0.0
        %3635 = vadd.xlane.f32.xlu0 %v3634
        %v3636 = vpop.xlane.xlu0 %3635
        %v3637 = vsel %vm1153, %v3387, 0.0
        %3638 = vadd.xlane.f32.xlu0 %v3637
        %v3639 = vpop.xlane.xlu0 %3638
        %v3640 = vsel %vm1153, %v3389, 0.0
        %3641 = vadd.xlane.f32.xlu0 %v3640
        %v3642 = vpop.xlane.xlu0 %3641
        %v3643 = vsel %vm1153, %v3391, 0.0
        %3644 = vadd.xlane.f32.xlu0 %v3643
        %v3645 = vpop.xlane.xlu0 %3644
        %v3646 = vsel %vm1153, %v3393, 0.0
        %3647 = vadd.xlane.f32.xlu0 %v3646
        %v3648 = vpop.xlane.xlu0 %3647
        %v3649 = vsel %vm1153, %v3395, 0.0
        %3650 = vadd.xlane.f32.xlu0 %v3649
        %v3651 = vpop.xlane.xlu0 %3650
        %v3652 = vrcp.pop %v3462
        %v3653 = vmul.f32 %v3077, %v3652
        %v3654 = vrcp.pop %v3465
        %v3655 = vmul.f32 %v3079, %v3654
        %v3656 = vrcp.pop %v3468
        %v3657 = vmul.f32 %v3081, %v3656
        %v3658 = vrcp.pop %v3471
        %v3659 = vmul.f32 %v3083, %v3658
        %v3660 = vrcp.pop %v3474
        %v3661 = vmul.f32 %v3085, %v3660
        %v3662 = vrcp.pop %v3477
        %v3663 = vmul.f32 %v3087, %v3662
        %v3664 = vrcp.pop %v3480
        %v3665 = vmul.f32 %v3089, %v3664
        %v3666 = vrcp.pop %v3483
        %v3667 = vmul.f32 %v3091, %v3666
        %v3668 = vrcp.pop %v3486
        %v3669 = vmul.f32 %v3093, %v3668
        %v3670 = vrcp.pop %v3489
        %v3671 = vmul.f32 %v3095, %v3670
        %v3672 = vrcp.pop %v3492
        %v3673 = vmul.f32 %v3097, %v3672
        %v3674 = vrcp.pop %v3495
        %v3675 = vmul.f32 %v3099, %v3674
        %v3676 = vrcp.pop %v3498
        %v3677 = vmul.f32 %v3101, %v3676
        %v3678 = vrcp.pop %v3501
        %v3679 = vmul.f32 %v3103, %v3678
        %v3680 = vrcp.pop %v3504
        %v3681 = vmul.f32 %v3105, %v3680
        %v3682 = vrcp.pop %v3507
        %v3683 = vmul.f32 %v3107, %v3682
        %v3684 = vrcp.pop %v3510
        %v3685 = vmul.f32 %v3109, %v3684
        %v3686 = vrcp.pop %v3513
        %v3687 = vmul.f32 %v3111, %v3686
        %v3688 = vrcp.pop %v3516
        %v3689 = vmul.f32 %v3113, %v3688
        %v3690 = vrcp.pop %v3519
        %v3691 = vmul.f32 %v3115, %v3690
        %v3692 = vrcp.pop %v3522
        %v3693 = vmul.f32 %v3117, %v3692
        %v3694 = vrcp.pop %v3525
        %v3695 = vmul.f32 %v3119, %v3694
        %v3696 = vrcp.pop %v3528
        %v3697 = vmul.f32 %v3121, %v3696
        %v3698 = vrcp.pop %v3531
        %v3699 = vmul.f32 %v3123, %v3698
        %v3700 = vrcp.pop %v3534
        %v3701 = vmul.f32 %v3125, %v3700
        %v3702 = vrcp.pop %v3537
        %v3703 = vmul.f32 %v3127, %v3702
        %v3704 = vrcp.pop %v3540
        %v3705 = vmul.f32 %v3129, %v3704
        %v3706 = vrcp.pop %v3543
        %v3707 = vmul.f32 %v3131, %v3706
        %v3708 = vrcp.pop %v3546
        %v3709 = vmul.f32 %v3133, %v3708
        %v3710 = vrcp.pop %v3549
        %v3711 = vmul.f32 %v3135, %v3710
        %v3712 = vrcp.pop %v3552
        %v3713 = vmul.f32 %v3137, %v3712
        %v3714 = vrcp.pop %v3555
        %v3715 = vmul.f32 %v3139, %v3714
        %v3716 = vrcp.pop %v3558
        %v3717 = vmul.f32 %v3141, %v3716
        %v3718 = vrcp.pop %v3561
        %v3719 = vmul.f32 %v3143, %v3718
        %v3720 = vrcp.pop %v3564
        %v3721 = vmul.f32 %v3145, %v3720
        %v3722 = vrcp.pop %v3567
        %v3723 = vmul.f32 %v3147, %v3722
        %v3724 = vrcp.pop %v3570
        %v3725 = vmul.f32 %v3149, %v3724
        %v3726 = vrcp.pop %v3573
        %v3727 = vmul.f32 %v3151, %v3726
        %v3728 = vrcp.pop %v3576
        %v3729 = vmul.f32 %v3153, %v3728
        %v3730 = vrcp.pop %v3579
        %v3731 = vmul.f32 %v3155, %v3730
        %v3732 = vrcp.pop %v3582
        %v3733 = vmul.f32 %v3157, %v3732
        %v3734 = vrcp.pop %v3585
        %v3735 = vmul.f32 %v3159, %v3734
        %v3736 = vrcp.pop %v3588
        %v3737 = vmul.f32 %v3161, %v3736
        %v3738 = vrcp.pop %v3591
        %v3739 = vmul.f32 %v3163, %v3738
        %v3740 = vrcp.pop %v3594
        %v3741 = vmul.f32 %v3165, %v3740
        %v3742 = vrcp.pop %v3597
        %v3743 = vmul.f32 %v3167, %v3742
        %v3744 = vrcp.pop %v3600
        %v3745 = vmul.f32 %v3169, %v3744
        %v3746 = vrcp.pop %v3603
        %v3747 = vmul.f32 %v3171, %v3746
        %v3748 = vrcp.pop %v3606
        %v3749 = vmul.f32 %v3173, %v3748
        %v3750 = vrcp.pop %v3609
        %v3751 = vmul.f32 %v3175, %v3750
        %v3752 = vrcp.pop %v3612
        %v3753 = vmul.f32 %v3177, %v3752
        %v3754 = vrcp.pop %v3615
        %v3755 = vmul.f32 %v3179, %v3754
        %v3756 = vrcp.pop %v3618
        %v3757 = vmul.f32 %v3181, %v3756
        %v3758 = vrcp.pop %v3621
        %v3759 = vmul.f32 %v3183, %v3758
        %v3760 = vrcp.pop %v3624
        %v3761 = vmul.f32 %v3185, %v3760
        %v3762 = vrcp.pop %v3627
        %v3763 = vmul.f32 %v3187, %v3762
        %v3764 = vrcp.pop %v3630
        %v3765 = vmul.f32 %v3189, %v3764
        %v3766 = vrcp.pop %v3633
        %v3767 = vmul.f32 %v3191, %v3766
        %v3768 = vrcp.pop %v3636
        %v3769 = vmul.f32 %v3193, %v3768
        %v3770 = vrcp.pop %v3639
        %v3771 = vmul.f32 %v3195, %v3770
        %v3772 = vrcp.pop %v3642
        %v3773 = vmul.f32 %v3197, %v3772
        %v3774 = vrcp.pop %v3645
        %v3775 = vmul.f32 %v3199, %v3774
        %v3776 = vrcp.pop %v3648
        %v3777 = vmul.f32 %v3201, %v3776
        %v3778 = vrcp.pop %v3651
        %v3779 = vmul.f32 %v3203, %v3778
        %vm3780 = vcmask 523648
        %v3781 = vsel %vm3780, %v835, -inf
        %3782 = vmax.xlane.f32.xlu0 %v3781
        %v3783 = vpop.xlane.xlu0 %3782
        %v3784 = vsel %vm3780, %v840, -inf
        %3785 = vmax.xlane.f32.xlu0 %v3784
        %v3786 = vpop.xlane.xlu0 %3785
        %v3787 = vsel %vm3780, %v845, -inf
        %3788 = vmax.xlane.f32.xlu0 %v3787
        %v3789 = vpop.xlane.xlu0 %3788
        %v3790 = vsel %vm3780, %v850, -inf
        %3791 = vmax.xlane.f32.xlu0 %v3790
        %v3792 = vpop.xlane.xlu0 %3791
        %v3793 = vsel %vm3780, %v855, -inf
        %3794 = vmax.xlane.f32.xlu0 %v3793
        %v3795 = vpop.xlane.xlu0 %3794
        %v3796 = vsel %vm3780, %v860, -inf
        %3797 = vmax.xlane.f32.xlu0 %v3796
        %v3798 = vpop.xlane.xlu0 %3797
        %v3799 = vsel %vm3780, %v865, -inf
        %3800 = vmax.xlane.f32.xlu0 %v3799
        %v3801 = vpop.xlane.xlu0 %3800
        %v3802 = vsel %vm3780, %v870, -inf
        %3803 = vmax.xlane.f32.xlu0 %v3802
        %v3804 = vpop.xlane.xlu0 %3803
        %v3805 = vsel %vm3780, %v875, -inf
        %3806 = vmax.xlane.f32.xlu0 %v3805
        %v3807 = vpop.xlane.xlu0 %3806
        %v3808 = vsel %vm3780, %v880, -inf
        %3809 = vmax.xlane.f32.xlu0 %v3808
        %v3810 = vpop.xlane.xlu0 %3809
        %v3811 = vsel %vm3780, %v885, -inf
        %3812 = vmax.xlane.f32.xlu0 %v3811
        %v3813 = vpop.xlane.xlu0 %3812
        %v3814 = vsel %vm3780, %v890, -inf
        %3815 = vmax.xlane.f32.xlu0 %v3814
        %v3816 = vpop.xlane.xlu0 %3815
        %v3817 = vsel %vm3780, %v895, -inf
        %3818 = vmax.xlane.f32.xlu0 %v3817
        %v3819 = vpop.xlane.xlu0 %3818
        %v3820 = vsel %vm3780, %v900, -inf
        %3821 = vmax.xlane.f32.xlu0 %v3820
        %v3822 = vpop.xlane.xlu0 %3821
        %v3823 = vsel %vm3780, %v905, -inf
        %3824 = vmax.xlane.f32.xlu0 %v3823
        %v3825 = vpop.xlane.xlu0 %3824
        %v3826 = vsel %vm3780, %v910, -inf
        %3827 = vmax.xlane.f32.xlu0 %v3826
        %v3828 = vpop.xlane.xlu0 %3827
        %v3829 = vsel %vm3780, %v915, -inf
        %3830 = vmax.xlane.f32.xlu0 %v3829
        %v3831 = vpop.xlane.xlu0 %3830
        %v3832 = vsel %vm3780, %v920, -inf
        %3833 = vmax.xlane.f32.xlu0 %v3832
        %v3834 = vpop.xlane.xlu0 %3833
        %v3835 = vsel %vm3780, %v925, -inf
        %3836 = vmax.xlane.f32.xlu0 %v3835
        %v3837 = vpop.xlane.xlu0 %3836
        %v3838 = vsel %vm3780, %v930, -inf
        %3839 = vmax.xlane.f32.xlu0 %v3838
        %v3840 = vpop.xlane.xlu0 %3839
        %v3841 = vsel %vm3780, %v935, -inf
        %3842 = vmax.xlane.f32.xlu0 %v3841
        %v3843 = vpop.xlane.xlu0 %3842
        %v3844 = vsel %vm3780, %v940, -inf
        %3845 = vmax.xlane.f32.xlu0 %v3844
        %v3846 = vpop.xlane.xlu0 %3845
        %v3847 = vsel %vm3780, %v945, -inf
        %3848 = vmax.xlane.f32.xlu0 %v3847
        %v3849 = vpop.xlane.xlu0 %3848
        %v3850 = vsel %vm3780, %v950, -inf
        %3851 = vmax.xlane.f32.xlu0 %v3850
        %v3852 = vpop.xlane.xlu0 %3851
        %v3853 = vsel %vm3780, %v955, -inf
        %3854 = vmax.xlane.f32.xlu0 %v3853
        %v3855 = vpop.xlane.xlu0 %3854
        %v3856 = vsel %vm3780, %v960, -inf
        %3857 = vmax.xlane.f32.xlu0 %v3856
        %v3858 = vpop.xlane.xlu0 %3857
        %v3859 = vsel %vm3780, %v965, -inf
        %3860 = vmax.xlane.f32.xlu0 %v3859
        %v3861 = vpop.xlane.xlu0 %3860
        %v3862 = vsel %vm3780, %v970, -inf
        %3863 = vmax.xlane.f32.xlu0 %v3862
        %v3864 = vpop.xlane.xlu0 %3863
        %v3865 = vsel %vm3780, %v975, -inf
        %3866 = vmax.xlane.f32.xlu0 %v3865
        %v3867 = vpop.xlane.xlu0 %3866
        %v3868 = vsel %vm3780, %v980, -inf
        %3869 = vmax.xlane.f32.xlu0 %v3868
        %v3870 = vpop.xlane.xlu0 %3869
        %v3871 = vsel %vm3780, %v985, -inf
        %3872 = vmax.xlane.f32.xlu0 %v3871
        %v3873 = vpop.xlane.xlu0 %3872
        %v3874 = vsel %vm3780, %v990, -inf
        %3875 = vmax.xlane.f32.xlu0 %v3874
        %v3876 = vpop.xlane.xlu0 %3875
        %v3877 = vsel %vm3780, %v995, -inf
        %3878 = vmax.xlane.f32.xlu0 %v3877
        %v3879 = vpop.xlane.xlu0 %3878
        %v3880 = vsel %vm3780, %v1000, -inf
        %3881 = vmax.xlane.f32.xlu0 %v3880
        %v3882 = vpop.xlane.xlu0 %3881
        %v3883 = vsel %vm3780, %v1005, -inf
        %3884 = vmax.xlane.f32.xlu0 %v3883
        %v3885 = vpop.xlane.xlu0 %3884
        %v3886 = vsel %vm3780, %v1010, -inf
        %3887 = vmax.xlane.f32.xlu0 %v3886
        %v3888 = vpop.xlane.xlu0 %3887
        %v3889 = vsel %vm3780, %v1015, -inf
        %3890 = vmax.xlane.f32.xlu0 %v3889
        %v3891 = vpop.xlane.xlu0 %3890
        %v3892 = vsel %vm3780, %v1020, -inf
        %3893 = vmax.xlane.f32.xlu0 %v3892
        %v3894 = vpop.xlane.xlu0 %3893
        %v3895 = vsel %vm3780, %v1025, -inf
        %3896 = vmax.xlane.f32.xlu0 %v3895
        %v3897 = vpop.xlane.xlu0 %3896
        %v3898 = vsel %vm3780, %v1030, -inf
        %3899 = vmax.xlane.f32.xlu0 %v3898
        %v3900 = vpop.xlane.xlu0 %3899
        %v3901 = vsel %vm3780, %v1035, -inf
        %3902 = vmax.xlane.f32.xlu0 %v3901
        %v3903 = vpop.xlane.xlu0 %3902
        %v3904 = vsel %vm3780, %v1040, -inf
        %3905 = vmax.xlane.f32.xlu0 %v3904
        %v3906 = vpop.xlane.xlu0 %3905
        %v3907 = vsel %vm3780, %v1045, -inf
        %3908 = vmax.xlane.f32.xlu0 %v3907
        %v3909 = vpop.xlane.xlu0 %3908
        %v3910 = vsel %vm3780, %v1050, -inf
        %3911 = vmax.xlane.f32.xlu0 %v3910
        %v3912 = vpop.xlane.xlu0 %3911
        %v3913 = vsel %vm3780, %v1055, -inf
        %3914 = vmax.xlane.f32.xlu0 %v3913
        %v3915 = vpop.xlane.xlu0 %3914
        %v3916 = vsel %vm3780, %v1060, -inf
        %3917 = vmax.xlane.f32.xlu0 %v3916
        %v3918 = vpop.xlane.xlu0 %3917
        %v3919 = vsel %vm3780, %v1065, -inf
        %3920 = vmax.xlane.f32.xlu0 %v3919
        %v3921 = vpop.xlane.xlu0 %3920
        %v3922 = vsel %vm3780, %v1070, -inf
        %3923 = vmax.xlane.f32.xlu0 %v3922
        %v3924 = vpop.xlane.xlu0 %3923
        %v3925 = vsel %vm3780, %v1075, -inf
        %3926 = vmax.xlane.f32.xlu0 %v3925
        %v3927 = vpop.xlane.xlu0 %3926
        %v3928 = vsel %vm3780, %v1080, -inf
        %3929 = vmax.xlane.f32.xlu0 %v3928
        %v3930 = vpop.xlane.xlu0 %3929
        %v3931 = vsel %vm3780, %v1085, -inf
        %3932 = vmax.xlane.f32.xlu0 %v3931
        %v3933 = vpop.xlane.xlu0 %3932
        %v3934 = vsel %vm3780, %v1090, -inf
        %3935 = vmax.xlane.f32.xlu0 %v3934
        %v3936 = vpop.xlane.xlu0 %3935
        %v3937 = vsel %vm3780, %v1095, -inf
        %3938 = vmax.xlane.f32.xlu0 %v3937
        %v3939 = vpop.xlane.xlu0 %3938
        %v3940 = vsel %vm3780, %v1100, -inf
        %3941 = vmax.xlane.f32.xlu0 %v3940
        %v3942 = vpop.xlane.xlu0 %3941
        %v3943 = vsel %vm3780, %v1105, -inf
        %3944 = vmax.xlane.f32.xlu0 %v3943
        %v3945 = vpop.xlane.xlu0 %3944
        %v3946 = vsel %vm3780, %v1110, -inf
        %3947 = vmax.xlane.f32.xlu0 %v3946
        %v3948 = vpop.xlane.xlu0 %3947
        %v3949 = vsel %vm3780, %v1115, -inf
        %3950 = vmax.xlane.f32.xlu0 %v3949
        %v3951 = vpop.xlane.xlu0 %3950
        %v3952 = vsel %vm3780, %v1120, -inf
        %3953 = vmax.xlane.f32.xlu0 %v3952
        %v3954 = vpop.xlane.xlu0 %3953
        %v3955 = vsel %vm3780, %v1125, -inf
        %3956 = vmax.xlane.f32.xlu0 %v3955
        %v3957 = vpop.xlane.xlu0 %3956
        %v3958 = vsel %vm3780, %v1130, -inf
        %3959 = vmax.xlane.f32.xlu0 %v3958
        %v3960 = vpop.xlane.xlu0 %3959
        %v3961 = vsel %vm3780, %v1135, -inf
        %3962 = vmax.xlane.f32.xlu0 %v3961
        %v3963 = vpop.xlane.xlu0 %3962
        %v3964 = vsel %vm3780, %v1140, -inf
        %3965 = vmax.xlane.f32.xlu0 %v3964
        %v3966 = vpop.xlane.xlu0 %3965
        %v3967 = vsel %vm3780, %v1145, -inf
        %3968 = vmax.xlane.f32.xlu0 %v3967
        %v3969 = vpop.xlane.xlu0 %3968
        %v3970 = vsel %vm3780, %v1150, -inf
        %3971 = vmax.xlane.f32.xlu0 %v3970
        %v3972 = vpop.xlane.xlu0 %3971
        %v3973 = vsub.f32 %v835, %v3783
        %v3974 = vsub.f32 %v840, %v3786
        %v3975 = vsub.f32 %v845, %v3789
        %v3976 = vsub.f32 %v850, %v3792
        %v3977 = vsub.f32 %v855, %v3795
        %v3978 = vsub.f32 %v860, %v3798
        %v3979 = vsub.f32 %v865, %v3801
        %v3980 = vsub.f32 %v870, %v3804
        %v3981 = vsub.f32 %v875, %v3807
        %v3982 = vsub.f32 %v880, %v3810
        %v3983 = vsub.f32 %v885, %v3813
        %v3984 = vsub.f32 %v890, %v3816
        %v3985 = vsub.f32 %v895, %v3819
        %v3986 = vsub.f32 %v900, %v3822
        %v3987 = vsub.f32 %v905, %v3825
        %v3988 = vsub.f32 %v910, %v3828
        %v3989 = vsub.f32 %v915, %v3831
        %v3990 = vsub.f32 %v920, %v3834
        %v3991 = vsub.f32 %v925, %v3837
        %v3992 = vsub.f32 %v930, %v3840
        %v3993 = vsub.f32 %v935, %v3843
        %v3994 = vsub.f32 %v940, %v3846
        %v3995 = vsub.f32 %v945, %v3849
        %v3996 = vsub.f32 %v950, %v3852
        %v3997 = vsub.f32 %v955, %v3855
        %v3998 = vsub.f32 %v960, %v3858
        %v3999 = vsub.f32 %v965, %v3861
        %v4000 = vsub.f32 %v970, %v3864
        %v4001 = vsub.f32 %v975, %v3867
        %v4002 = vsub.f32 %v980, %v3870
        %v4003 = vsub.f32 %v985, %v3873
        %v4004 = vsub.f32 %v990, %v3876
        %v4005 = vsub.f32 %v995, %v3879
        %v4006 = vsub.f32 %v1000, %v3882
        %v4007 = vsub.f32 %v1005, %v3885
        %v4008 = vsub.f32 %v1010, %v3888
        %v4009 = vsub.f32 %v1015, %v3891
        %v4010 = vsub.f32 %v1020, %v3894
        %v4011 = vsub.f32 %v1025, %v3897
        %v4012 = vsub.f32 %v1030, %v3900
        %v4013 = vsub.f32 %v1035, %v3903
        %v4014 = vsub.f32 %v1040, %v3906
        %v4015 = vsub.f32 %v1045, %v3909
        %v4016 = vsub.f32 %v1050, %v3912
        %v4017 = vsub.f32 %v1055, %v3915
        %v4018 = vsub.f32 %v1060, %v3918
        %v4019 = vsub.f32 %v1065, %v3921
        %v4020 = vsub.f32 %v1070, %v3924
        %v4021 = vsub.f32 %v1075, %v3927
        %v4022 = vsub.f32 %v1080, %v3930
        %v4023 = vsub.f32 %v1085, %v3933
        %v4024 = vsub.f32 %v1090, %v3936
        %v4025 = vsub.f32 %v1095, %v3939
        %v4026 = vsub.f32 %v1100, %v3942
        %v4027 = vsub.f32 %v1105, %v3945
        %v4028 = vsub.f32 %v1110, %v3948
        %v4029 = vsub.f32 %v1115, %v3951
        %v4030 = vsub.f32 %v1120, %v3954
        %v4031 = vsub.f32 %v1125, %v3957
        %v4032 = vsub.f32 %v1130, %v3960
        %v4033 = vsub.f32 %v1135, %v3963
        %v4034 = vsub.f32 %v1140, %v3966
        %v4035 = vsub.f32 %v1145, %v3969
        %v4036 = vsub.f32 %v1150, %v3972
        %v4037 = vmul.f32 %v3973, 1.442695
        %v4038 = vpow.pop %v4037
        %v4039 = vmul.f32 %v3974, 1.442695
        %v4040 = vpow.pop %v4039
        %v4041 = vmul.f32 %v3975, 1.442695
        %v4042 = vpow.pop %v4041
        %v4043 = vmul.f32 %v3976, 1.442695
        %v4044 = vpow.pop %v4043
        %v4045 = vmul.f32 %v3977, 1.442695
        %v4046 = vpow.pop %v4045
        %v4047 = vmul.f32 %v3978, 1.442695
        %v4048 = vpow.pop %v4047
        %v4049 = vmul.f32 %v3979, 1.442695
        %v4050 = vpow.pop %v4049
        %v4051 = vmul.f32 %v3980, 1.442695
        %v4052 = vpow.pop %v4051
        %v4053 = vmul.f32 %v3981, 1.442695
        %v4054 = vpow.pop %v4053
        %v4055 = vmul.f32 %v3982, 1.442695
        %v4056 = vpow.pop %v4055
        %v4057 = vmul.f32 %v3983, 1.442695
        %v4058 = vpow.pop %v4057
        %v4059 = vmul.f32 %v3984, 1.442695
        %v4060 = vpow.pop %v4059
        %v4061 = vmul.f32 %v3985, 1.442695
        %v4062 = vpow.pop %v4061
        %v4063 = vmul.f32 %v3986, 1.442695
        %v4064 = vpow.pop %v4063
        %v4065 = vmul.f32 %v3987, 1.442695
        %v4066 = vpow.pop %v4065
        %v4067 = vmul.f32 %v3988, 1.442695
        %v4068 = vpow.pop %v4067
        %v4069 = vmul.f32 %v3989, 1.442695
        %v4070 = vpow.pop %v4069
        %v4071 = vmul.f32 %v3990, 1.442695
        %v4072 = vpow.pop %v4071
        %v4073 = vmul.f32 %v3991, 1.442695
        %v4074 = vpow.pop %v4073
        %v4075 = vmul.f32 %v3992, 1.442695
        %v4076 = vpow.pop %v4075
        %v4077 = vmul.f32 %v3993, 1.442695
        %v4078 = vpow.pop %v4077
        %v4079 = vmul.f32 %v3994, 1.442695
        %v4080 = vpow.pop %v4079
        %v4081 = vmul.f32 %v3995, 1.442695
        %v4082 = vpow.pop %v4081
        %v4083 = vmul.f32 %v3996, 1.442695
        %v4084 = vpow.pop %v4083
        %v4085 = vmul.f32 %v3997, 1.442695
        %v4086 = vpow.pop %v4085
        %v4087 = vmul.f32 %v3998, 1.442695
        %v4088 = vpow.pop %v4087
        %v4089 = vmul.f32 %v3999, 1.442695
        %v4090 = vpow.pop %v4089
        %v4091 = vmul.f32 %v4000, 1.442695
        %v4092 = vpow.pop %v4091
        %v4093 = vmul.f32 %v4001, 1.442695
        %v4094 = vpow.pop %v4093
        %v4095 = vmul.f32 %v4002, 1.442695
        %v4096 = vpow.pop %v4095
        %v4097 = vmul.f32 %v4003, 1.442695
        %v4098 = vpow.pop %v4097
        %v4099 = vmul.f32 %v4004, 1.442695
        %v4100 = vpow.pop %v4099
        %v4101 = vmul.f32 %v4005, 1.442695
        %v4102 = vpow.pop %v4101
        %v4103 = vmul.f32 %v4006, 1.442695
        %v4104 = vpow.pop %v4103
        %v4105 = vmul.f32 %v4007, 1.442695
        %v4106 = vpow.pop %v4105
        %v4107 = vmul.f32 %v4008, 1.442695
        %v4108 = vpow.pop %v4107
        %v4109 = vmul.f32 %v4009, 1.442695
        %v4110 = vpow.pop %v4109
        %v4111 = vmul.f32 %v4010, 1.442695
        %v4112 = vpow.pop %v4111
        %v4113 = vmul.f32 %v4011, 1.442695
        %v4114 = vpow.pop %v4113
        %v4115 = vmul.f32 %v4012, 1.442695
        %v4116 = vpow.pop %v4115
        %v4117 = vmul.f32 %v4013, 1.442695
        %v4118 = vpow.pop %v4117
        %v4119 = vmul.f32 %v4014, 1.442695
        %v4120 = vpow.pop %v4119
        %v4121 = vmul.f32 %v4015, 1.442695
        %v4122 = vpow.pop %v4121
        %v4123 = vmul.f32 %v4016, 1.442695
        %v4124 = vpow.pop %v4123
        %v4125 = vmul.f32 %v4017, 1.442695
        %v4126 = vpow.pop %v4125
        %v4127 = vmul.f32 %v4018, 1.442695
        %v4128 = vpow.pop %v4127
        %v4129 = vmul.f32 %v4019, 1.442695
        %v4130 = vpow.pop %v4129
        %v4131 = vmul.f32 %v4020, 1.442695
        %v4132 = vpow.pop %v4131
        %v4133 = vmul.f32 %v4021, 1.442695
        %v4134 = vpow.pop %v4133
        %v4135 = vmul.f32 %v4022, 1.442695
        %v4136 = vpow.pop %v4135
        %v4137 = vmul.f32 %v4023, 1.442695
        %v4138 = vpow.pop %v4137
        %v4139 = vmul.f32 %v4024, 1.442695
        %v4140 = vpow.pop %v4139
        %v4141 = vmul.f32 %v4025, 1.442695
        %v4142 = vpow.pop %v4141
        %v4143 = vmul.f32 %v4026, 1.442695
        %v4144 = vpow.pop %v4143
        %v4145 = vmul.f32 %v4027, 1.442695
        %v4146 = vpow.pop %v4145
        %v4147 = vmul.f32 %v4028, 1.442695
        %v4148 = vpow.pop %v4147
        %v4149 = vmul.f32 %v4029, 1.442695
        %v4150 = vpow.pop %v4149
        %v4151 = vmul.f32 %v4030, 1.442695
        %v4152 = vpow.pop %v4151
        %v4153 = vmul.f32 %v4031, 1.442695
        %v4154 = vpow.pop %v4153
        %v4155 = vmul.f32 %v4032, 1.442695
        %v4156 = vpow.pop %v4155
        %v4157 = vmul.f32 %v4033, 1.442695
        %v4158 = vpow.pop %v4157
        %v4159 = vmul.f32 %v4034, 1.442695
        %v4160 = vpow.pop %v4159
        %v4161 = vmul.f32 %v4035, 1.442695
        %v4162 = vpow.pop %v4161
        %v4163 = vmul.f32 %v4036, 1.442695
        %v4164 = vpow.pop %v4163
        %4229 = vrot.lane.b32.xlu0 %v4038, 80
        %v4230 = vpop.permute.xlu0 %4229
        %4231 = vrot.lane.b32.xlu0 %v4040, 80
        %v4232 = vpop.permute.xlu0 %4231
        %4233 = vrot.lane.b32.xlu0 %v4042, 80
        %v4234 = vpop.permute.xlu0 %4233
        %4235 = vrot.lane.b32.xlu0 %v4044, 80
        %v4236 = vpop.permute.xlu0 %4235
        %4237 = vrot.lane.b32.xlu0 %v4046, 80
        %v4238 = vpop.permute.xlu0 %4237
        %4239 = vrot.lane.b32.xlu0 %v4048, 80
        %v4240 = vpop.permute.xlu0 %4239
        %4241 = vrot.lane.b32.xlu0 %v4050, 80
        %v4242 = vpop.permute.xlu0 %4241
        %4243 = vrot.lane.b32.xlu0 %v4052, 80
        %v4244 = vpop.permute.xlu0 %4243
        %4245 = vrot.lane.b32.xlu0 %v4054, 80
        %v4246 = vpop.permute.xlu0 %4245
        %4247 = vrot.lane.b32.xlu0 %v4056, 80
        %v4248 = vpop.permute.xlu0 %4247
        %4249 = vrot.lane.b32.xlu0 %v4058, 80
        %v4250 = vpop.permute.xlu0 %4249
        %4251 = vrot.lane.b32.xlu0 %v4060, 80
        %v4252 = vpop.permute.xlu0 %4251
        %4253 = vrot.lane.b32.xlu0 %v4062, 80
        %v4254 = vpop.permute.xlu0 %4253
        %4255 = vrot.lane.b32.xlu0 %v4064, 80
        %v4256 = vpop.permute.xlu0 %4255
        %4257 = vrot.lane.b32.xlu0 %v4066, 80
        %v4258 = vpop.permute.xlu0 %4257
        %4259 = vrot.lane.b32.xlu0 %v4068, 80
        %v4260 = vpop.permute.xlu0 %4259
        %4261 = vrot.lane.b32.xlu0 %v4070, 80
        %v4262 = vpop.permute.xlu0 %4261
        %4263 = vrot.lane.b32.xlu0 %v4072, 80
        %v4264 = vpop.permute.xlu0 %4263
        %4265 = vrot.lane.b32.xlu0 %v4074, 80
        %v4266 = vpop.permute.xlu0 %4265
        %4267 = vrot.lane.b32.xlu0 %v4076, 80
        %v4268 = vpop.permute.xlu0 %4267
        %4269 = vrot.lane.b32.xlu0 %v4078, 80
        %v4270 = vpop.permute.xlu0 %4269
        %4271 = vrot.lane.b32.xlu0 %v4080, 80
        %v4272 = vpop.permute.xlu0 %4271
        %4273 = vrot.lane.b32.xlu0 %v4082, 80
        %v4274 = vpop.permute.xlu0 %4273
        %4275 = vrot.lane.b32.xlu0 %v4084, 80
        %v4276 = vpop.permute.xlu0 %4275
        %4277 = vrot.lane.b32.xlu0 %v4086, 80
        %v4278 = vpop.permute.xlu0 %4277
        %4279 = vrot.lane.b32.xlu0 %v4088, 80
        %v4280 = vpop.permute.xlu0 %4279
        %4281 = vrot.lane.b32.xlu0 %v4090, 80
        %v4282 = vpop.permute.xlu0 %4281
        %4283 = vrot.lane.b32.xlu0 %v4092, 80
        %v4284 = vpop.permute.xlu0 %4283
        %4285 = vrot.lane.b32.xlu0 %v4094, 80
        %v4286 = vpop.permute.xlu0 %4285
        %4287 = vrot.lane.b32.xlu0 %v4096, 80
        %v4288 = vpop.permute.xlu0 %4287
        %4289 = vrot.lane.b32.xlu0 %v4098, 80
        %v4290 = vpop.permute.xlu0 %4289
        %4291 = vrot.lane.b32.xlu0 %v4100, 80
        %v4292 = vpop.permute.xlu0 %4291
        %4293 = vrot.lane.b32.xlu0 %v4102, 80
        %v4294 = vpop.permute.xlu0 %4293
        %4295 = vrot.lane.b32.xlu0 %v4104, 80
        %v4296 = vpop.permute.xlu0 %4295
        %4297 = vrot.lane.b32.xlu0 %v4106, 80
        %v4298 = vpop.permute.xlu0 %4297
        %4299 = vrot.lane.b32.xlu0 %v4108, 80
        %v4300 = vpop.permute.xlu0 %4299
        %4301 = vrot.lane.b32.xlu0 %v4110, 80
        %v4302 = vpop.permute.xlu0 %4301
        %4303 = vrot.lane.b32.xlu0 %v4112, 80
        %v4304 = vpop.permute.xlu0 %4303
        %4305 = vrot.lane.b32.xlu0 %v4114, 80
        %v4306 = vpop.permute.xlu0 %4305
        %4307 = vrot.lane.b32.xlu0 %v4116, 80
        %v4308 = vpop.permute.xlu0 %4307
        %4309 = vrot.lane.b32.xlu0 %v4118, 80
        %v4310 = vpop.permute.xlu0 %4309
        %4311 = vrot.lane.b32.xlu0 %v4120, 80
        %v4312 = vpop.permute.xlu0 %4311
        %4313 = vrot.lane.b32.xlu0 %v4122, 80
        %v4314 = vpop.permute.xlu0 %4313
        %4315 = vrot.lane.b32.xlu0 %v4124, 80
        %v4316 = vpop.permute.xlu0 %4315
        %4317 = vrot.lane.b32.xlu0 %v4126, 80
        %v4318 = vpop.permute.xlu0 %4317
        %4319 = vrot.lane.b32.xlu0 %v4128, 80
        %v4320 = vpop.permute.xlu0 %4319
        %4321 = vrot.lane.b32.xlu0 %v4130, 80
        %v4322 = vpop.permute.xlu0 %4321
        %4323 = vrot.lane.b32.xlu0 %v4132, 80
        %v4324 = vpop.permute.xlu0 %4323
        %4325 = vrot.lane.b32.xlu0 %v4134, 80
        %v4326 = vpop.permute.xlu0 %4325
        %4327 = vrot.lane.b32.xlu0 %v4136, 80
        %v4328 = vpop.permute.xlu0 %4327
        %4329 = vrot.lane.b32.xlu0 %v4138, 80
        %v4330 = vpop.permute.xlu0 %4329
        %4331 = vrot.lane.b32.xlu0 %v4140, 80
        %v4332 = vpop.permute.xlu0 %4331
        %4333 = vrot.lane.b32.xlu0 %v4142, 80
        %v4334 = vpop.permute.xlu0 %4333
        %4335 = vrot.lane.b32.xlu0 %v4144, 80
        %v4336 = vpop.permute.xlu0 %4335
        %4337 = vrot.lane.b32.xlu0 %v4146, 80
        %v4338 = vpop.permute.xlu0 %4337
        %4339 = vrot.lane.b32.xlu0 %v4148, 80
        %v4340 = vpop.permute.xlu0 %4339
        %4341 = vrot.lane.b32.xlu0 %v4150, 80
        %v4342 = vpop.permute.xlu0 %4341
        %4343 = vrot.lane.b32.xlu0 %v4152, 80
        %v4344 = vpop.permute.xlu0 %4343
        %4345 = vrot.lane.b32.xlu0 %v4154, 80
        %v4346 = vpop.permute.xlu0 %4345
        %4347 = vrot.lane.b32.xlu0 %v4156, 80
        %v4348 = vpop.permute.xlu0 %4347
        %4349 = vrot.lane.b32.xlu0 %v4158, 80
        %v4350 = vpop.permute.xlu0 %4349
        %4351 = vrot.lane.b32.xlu0 %v4160, 80
        %v4352 = vpop.permute.xlu0 %4351
        %4353 = vrot.lane.b32.xlu0 %v4162, 80
        %v4354 = vpop.permute.xlu0 %4353
        %4355 = vrot.lane.b32.xlu0 %v4164, 80
        %v4356 = vpop.permute.xlu0 %4355
        %v4421 = vsel %vm1153, %v4230, 0.0
        %4422 = vadd.xlane.f32.xlu0 %v4421
        %v4423 = vpop.xlane.xlu0 %4422
        %v4424 = vsel %vm1153, %v4232, 0.0
        %4425 = vadd.xlane.f32.xlu0 %v4424
        %v4426 = vpop.xlane.xlu0 %4425
        %v4427 = vsel %vm1153, %v4234, 0.0
        %4428 = vadd.xlane.f32.xlu0 %v4427
        %v4429 = vpop.xlane.xlu0 %4428
        %v4430 = vsel %vm1153, %v4236, 0.0
        %4431 = vadd.xlane.f32.xlu0 %v4430
        %v4432 = vpop.xlane.xlu0 %4431
        %v4433 = vsel %vm1153, %v4238, 0.0
        %4434 = vadd.xlane.f32.xlu0 %v4433
        %v4435 = vpop.xlane.xlu0 %4434
        %v4436 = vsel %vm1153, %v4240, 0.0
        %4437 = vadd.xlane.f32.xlu0 %v4436
        %v4438 = vpop.xlane.xlu0 %4437
        %v4439 = vsel %vm1153, %v4242, 0.0
        %4440 = vadd.xlane.f32.xlu0 %v4439
        %v4441 = vpop.xlane.xlu0 %4440
        %v4442 = vsel %vm1153, %v4244, 0.0
        %4443 = vadd.xlane.f32.xlu0 %v4442
        %v4444 = vpop.xlane.xlu0 %4443
        %v4445 = vsel %vm1153, %v4246, 0.0
        %4446 = vadd.xlane.f32.xlu0 %v4445
        %v4447 = vpop.xlane.xlu0 %4446
        %v4448 = vsel %vm1153, %v4248, 0.0
        %4449 = vadd.xlane.f32.xlu0 %v4448
        %v4450 = vpop.xlane.xlu0 %4449
        %v4451 = vsel %vm1153, %v4250, 0.0
        %4452 = vadd.xlane.f32.xlu0 %v4451
        %v4453 = vpop.xlane.xlu0 %4452
        %v4454 = vsel %vm1153, %v4252, 0.0
        %4455 = vadd.xlane.f32.xlu0 %v4454
        %v4456 = vpop.xlane.xlu0 %4455
        %v4457 = vsel %vm1153, %v4254, 0.0
        %4458 = vadd.xlane.f32.xlu0 %v4457
        %v4459 = vpop.xlane.xlu0 %4458
        %v4460 = vsel %vm1153, %v4256, 0.0
        %4461 = vadd.xlane.f32.xlu0 %v4460
        %v4462 = vpop.xlane.xlu0 %4461
        %v4463 = vsel %vm1153, %v4258, 0.0
        %4464 = vadd.xlane.f32.xlu0 %v4463
        %v4465 = vpop.xlane.xlu0 %4464
        %v4466 = vsel %vm1153, %v4260, 0.0
        %4467 = vadd.xlane.f32.xlu0 %v4466
        %v4468 = vpop.xlane.xlu0 %4467
        %v4469 = vsel %vm1153, %v4262, 0.0
        %4470 = vadd.xlane.f32.xlu0 %v4469
        %v4471 = vpop.xlane.xlu0 %4470
        %v4472 = vsel %vm1153, %v4264, 0.0
        %4473 = vadd.xlane.f32.xlu0 %v4472
        %v4474 = vpop.xlane.xlu0 %4473
        %v4475 = vsel %vm1153, %v4266, 0.0
        %4476 = vadd.xlane.f32.xlu0 %v4475
        %v4477 = vpop.xlane.xlu0 %4476
        %v4478 = vsel %vm1153, %v4268, 0.0
        %4479 = vadd.xlane.f32.xlu0 %v4478
        %v4480 = vpop.xlane.xlu0 %4479
        %v4481 = vsel %vm1153, %v4270, 0.0
        %4482 = vadd.xlane.f32.xlu0 %v4481
        %v4483 = vpop.xlane.xlu0 %4482
        %v4484 = vsel %vm1153, %v4272, 0.0
        %4485 = vadd.xlane.f32.xlu0 %v4484
        %v4486 = vpop.xlane.xlu0 %4485
        %v4487 = vsel %vm1153, %v4274, 0.0
        %4488 = vadd.xlane.f32.xlu0 %v4487
        %v4489 = vpop.xlane.xlu0 %4488
        %v4490 = vsel %vm1153, %v4276, 0.0
        %4491 = vadd.xlane.f32.xlu0 %v4490
        %v4492 = vpop.xlane.xlu0 %4491
        %v4493 = vsel %vm1153, %v4278, 0.0
        %4494 = vadd.xlane.f32.xlu0 %v4493
        %v4495 = vpop.xlane.xlu0 %4494
        %v4496 = vsel %vm1153, %v4280, 0.0
        %4497 = vadd.xlane.f32.xlu0 %v4496
        %v4498 = vpop.xlane.xlu0 %4497
        %v4499 = vsel %vm1153, %v4282, 0.0
        %4500 = vadd.xlane.f32.xlu0 %v4499
        %v4501 = vpop.xlane.xlu0 %4500
        %v4502 = vsel %vm1153, %v4284, 0.0
        %4503 = vadd.xlane.f32.xlu0 %v4502
        %v4504 = vpop.xlane.xlu0 %4503
        %v4505 = vsel %vm1153, %v4286, 0.0
        %4506 = vadd.xlane.f32.xlu0 %v4505
        %v4507 = vpop.xlane.xlu0 %4506
        %v4508 = vsel %vm1153, %v4288, 0.0
        %4509 = vadd.xlane.f32.xlu0 %v4508
        %v4510 = vpop.xlane.xlu0 %4509
        %v4511 = vsel %vm1153, %v4290, 0.0
        %4512 = vadd.xlane.f32.xlu0 %v4511
        %v4513 = vpop.xlane.xlu0 %4512
        %v4514 = vsel %vm1153, %v4292, 0.0
        %4515 = vadd.xlane.f32.xlu0 %v4514
        %v4516 = vpop.xlane.xlu0 %4515
        %v4517 = vsel %vm1153, %v4294, 0.0
        %4518 = vadd.xlane.f32.xlu0 %v4517
        %v4519 = vpop.xlane.xlu0 %4518
        %v4520 = vsel %vm1153, %v4296, 0.0
        %4521 = vadd.xlane.f32.xlu0 %v4520
        %v4522 = vpop.xlane.xlu0 %4521
        %v4523 = vsel %vm1153, %v4298, 0.0
        %4524 = vadd.xlane.f32.xlu0 %v4523
        %v4525 = vpop.xlane.xlu0 %4524
        %v4526 = vsel %vm1153, %v4300, 0.0
        %4527 = vadd.xlane.f32.xlu0 %v4526
        %v4528 = vpop.xlane.xlu0 %4527
        %v4529 = vsel %vm1153, %v4302, 0.0
        %4530 = vadd.xlane.f32.xlu0 %v4529
        %v4531 = vpop.xlane.xlu0 %4530
        %v4532 = vsel %vm1153, %v4304, 0.0
        %4533 = vadd.xlane.f32.xlu0 %v4532
        %v4534 = vpop.xlane.xlu0 %4533
        %v4535 = vsel %vm1153, %v4306, 0.0
        %4536 = vadd.xlane.f32.xlu0 %v4535
        %v4537 = vpop.xlane.xlu0 %4536
        %v4538 = vsel %vm1153, %v4308, 0.0
        %4539 = vadd.xlane.f32.xlu0 %v4538
        %v4540 = vpop.xlane.xlu0 %4539
        %v4541 = vsel %vm1153, %v4310, 0.0
        %4542 = vadd.xlane.f32.xlu0 %v4541
        %v4543 = vpop.xlane.xlu0 %4542
        %v4544 = vsel %vm1153, %v4312, 0.0
        %4545 = vadd.xlane.f32.xlu0 %v4544
        %v4546 = vpop.xlane.xlu0 %4545
        %v4547 = vsel %vm1153, %v4314, 0.0
        %4548 = vadd.xlane.f32.xlu0 %v4547
        %v4549 = vpop.xlane.xlu0 %4548
        %v4550 = vsel %vm1153, %v4316, 0.0
        %4551 = vadd.xlane.f32.xlu0 %v4550
        %v4552 = vpop.xlane.xlu0 %4551
        %v4553 = vsel %vm1153, %v4318, 0.0
        %4554 = vadd.xlane.f32.xlu0 %v4553
        %v4555 = vpop.xlane.xlu0 %4554
        %v4556 = vsel %vm1153, %v4320, 0.0
        %4557 = vadd.xlane.f32.xlu0 %v4556
        %v4558 = vpop.xlane.xlu0 %4557
        %v4559 = vsel %vm1153, %v4322, 0.0
        %4560 = vadd.xlane.f32.xlu0 %v4559
        %v4561 = vpop.xlane.xlu0 %4560
        %v4562 = vsel %vm1153, %v4324, 0.0
        %4563 = vadd.xlane.f32.xlu0 %v4562
        %v4564 = vpop.xlane.xlu0 %4563
        %v4565 = vsel %vm1153, %v4326, 0.0
        %4566 = vadd.xlane.f32.xlu0 %v4565
        %v4567 = vpop.xlane.xlu0 %4566
        %v4568 = vsel %vm1153, %v4328, 0.0
        %4569 = vadd.xlane.f32.xlu0 %v4568
        %v4570 = vpop.xlane.xlu0 %4569
        %v4571 = vsel %vm1153, %v4330, 0.0
        %4572 = vadd.xlane.f32.xlu0 %v4571
        %v4573 = vpop.xlane.xlu0 %4572
        %v4574 = vsel %vm1153, %v4332, 0.0
        %4575 = vadd.xlane.f32.xlu0 %v4574
        %v4576 = vpop.xlane.xlu0 %4575
        %v4577 = vsel %vm1153, %v4334, 0.0
        %4578 = vadd.xlane.f32.xlu0 %v4577
        %v4579 = vpop.xlane.xlu0 %4578
        %v4580 = vsel %vm1153, %v4336, 0.0
        %4581 = vadd.xlane.f32.xlu0 %v4580
        %v4582 = vpop.xlane.xlu0 %4581
        %v4583 = vsel %vm1153, %v4338, 0.0
        %4584 = vadd.xlane.f32.xlu0 %v4583
        %v4585 = vpop.xlane.xlu0 %4584
        %v4586 = vsel %vm1153, %v4340, 0.0
        %4587 = vadd.xlane.f32.xlu0 %v4586
        %v4588 = vpop.xlane.xlu0 %4587
        %v4589 = vsel %vm1153, %v4342, 0.0
        %4590 = vadd.xlane.f32.xlu0 %v4589
        %v4591 = vpop.xlane.xlu0 %4590
        %v4592 = vsel %vm1153, %v4344, 0.0
        %4593 = vadd.xlane.f32.xlu0 %v4592
        %v4594 = vpop.xlane.xlu0 %4593
        %v4595 = vsel %vm1153, %v4346, 0.0
        %4596 = vadd.xlane.f32.xlu0 %v4595
        %v4597 = vpop.xlane.xlu0 %4596
        %v4598 = vsel %vm1153, %v4348, 0.0
        %4599 = vadd.xlane.f32.xlu0 %v4598
        %v4600 = vpop.xlane.xlu0 %4599
        %v4601 = vsel %vm1153, %v4350, 0.0
        %4602 = vadd.xlane.f32.xlu0 %v4601
        %v4603 = vpop.xlane.xlu0 %4602
        %v4604 = vsel %vm1153, %v4352, 0.0
        %4605 = vadd.xlane.f32.xlu0 %v4604
        %v4606 = vpop.xlane.xlu0 %4605
        %v4607 = vsel %vm1153, %v4354, 0.0
        %4608 = vadd.xlane.f32.xlu0 %v4607
        %v4609 = vpop.xlane.xlu0 %4608
        %v4610 = vsel %vm1153, %v4356, 0.0
        %4611 = vadd.xlane.f32.xlu0 %v4610
        %v4612 = vpop.xlane.xlu0 %4611
        %v4613 = vrcp.pop %v4423
        %v4614 = vmul.f32 %v4038, %v4613
        %v4615 = vrcp.pop %v4426
        %v4616 = vmul.f32 %v4040, %v4615
        %v4617 = vrcp.pop %v4429
        %v4618 = vmul.f32 %v4042, %v4617
        %v4619 = vrcp.pop %v4432
        %v4620 = vmul.f32 %v4044, %v4619
        %v4621 = vrcp.pop %v4435
        %v4622 = vmul.f32 %v4046, %v4621
        %v4623 = vrcp.pop %v4438
        %v4624 = vmul.f32 %v4048, %v4623
        %v4625 = vrcp.pop %v4441
        %v4626 = vmul.f32 %v4050, %v4625
        %v4627 = vrcp.pop %v4444
        %v4628 = vmul.f32 %v4052, %v4627
        %v4629 = vrcp.pop %v4447
        %v4630 = vmul.f32 %v4054, %v4629
        %v4631 = vrcp.pop %v4450
        %v4632 = vmul.f32 %v4056, %v4631
        %v4633 = vrcp.pop %v4453
        %v4634 = vmul.f32 %v4058, %v4633
        %v4635 = vrcp.pop %v4456
        %v4636 = vmul.f32 %v4060, %v4635
        %v4637 = vrcp.pop %v4459
        %v4638 = vmul.f32 %v4062, %v4637
        %v4639 = vrcp.pop %v4462
        %v4640 = vmul.f32 %v4064, %v4639
        %v4641 = vrcp.pop %v4465
        %v4642 = vmul.f32 %v4066, %v4641
        %v4643 = vrcp.pop %v4468
        %v4644 = vmul.f32 %v4068, %v4643
        %v4645 = vrcp.pop %v4471
        %v4646 = vmul.f32 %v4070, %v4645
        %v4647 = vrcp.pop %v4474
        %v4648 = vmul.f32 %v4072, %v4647
        %v4649 = vrcp.pop %v4477
        %v4650 = vmul.f32 %v4074, %v4649
        %v4651 = vrcp.pop %v4480
        %v4652 = vmul.f32 %v4076, %v4651
        %v4653 = vrcp.pop %v4483
        %v4654 = vmul.f32 %v4078, %v4653
        %v4655 = vrcp.pop %v4486
        %v4656 = vmul.f32 %v4080, %v4655
        %v4657 = vrcp.pop %v4489
        %v4658 = vmul.f32 %v4082, %v4657
        %v4659 = vrcp.pop %v4492
        %v4660 = vmul.f32 %v4084, %v4659
        %v4661 = vrcp.pop %v4495
        %v4662 = vmul.f32 %v4086, %v4661
        %v4663 = vrcp.pop %v4498
        %v4664 = vmul.f32 %v4088, %v4663
        %v4665 = vrcp.pop %v4501
        %v4666 = vmul.f32 %v4090, %v4665
        %v4667 = vrcp.pop %v4504
        %v4668 = vmul.f32 %v4092, %v4667
        %v4669 = vrcp.pop %v4507
        %v4670 = vmul.f32 %v4094, %v4669
        %v4671 = vrcp.pop %v4510
        %v4672 = vmul.f32 %v4096, %v4671
        %v4673 = vrcp.pop %v4513
        %v4674 = vmul.f32 %v4098, %v4673
        %v4675 = vrcp.pop %v4516
        %v4676 = vmul.f32 %v4100, %v4675
        %v4677 = vrcp.pop %v4519
        %v4678 = vmul.f32 %v4102, %v4677
        %v4679 = vrcp.pop %v4522
        %v4680 = vmul.f32 %v4104, %v4679
        %v4681 = vrcp.pop %v4525
        %v4682 = vmul.f32 %v4106, %v4681
        %v4683 = vrcp.pop %v4528
        %v4684 = vmul.f32 %v4108, %v4683
        %v4685 = vrcp.pop %v4531
        %v4686 = vmul.f32 %v4110, %v4685
        %v4687 = vrcp.pop %v4534
        %v4688 = vmul.f32 %v4112, %v4687
        %v4689 = vrcp.pop %v4537
        %v4690 = vmul.f32 %v4114, %v4689
        %v4691 = vrcp.pop %v4540
        %v4692 = vmul.f32 %v4116, %v4691
        %v4693 = vrcp.pop %v4543
        %v4694 = vmul.f32 %v4118, %v4693
        %v4695 = vrcp.pop %v4546
        %v4696 = vmul.f32 %v4120, %v4695
        %v4697 = vrcp.pop %v4549
        %v4698 = vmul.f32 %v4122, %v4697
        %v4699 = vrcp.pop %v4552
        %v4700 = vmul.f32 %v4124, %v4699
        %v4701 = vrcp.pop %v4555
        %v4702 = vmul.f32 %v4126, %v4701
        %v4703 = vrcp.pop %v4558
        %v4704 = vmul.f32 %v4128, %v4703
        %v4705 = vrcp.pop %v4561
        %v4706 = vmul.f32 %v4130, %v4705
        %v4707 = vrcp.pop %v4564
        %v4708 = vmul.f32 %v4132, %v4707
        %v4709 = vrcp.pop %v4567
        %v4710 = vmul.f32 %v4134, %v4709
        %v4711 = vrcp.pop %v4570
        %v4712 = vmul.f32 %v4136, %v4711
        %v4713 = vrcp.pop %v4573
        %v4714 = vmul.f32 %v4138, %v4713
        %v4715 = vrcp.pop %v4576
        %v4716 = vmul.f32 %v4140, %v4715
        %v4717 = vrcp.pop %v4579
        %v4718 = vmul.f32 %v4142, %v4717
        %v4719 = vrcp.pop %v4582
        %v4720 = vmul.f32 %v4144, %v4719
        %v4721 = vrcp.pop %v4585
        %v4722 = vmul.f32 %v4146, %v4721
        %v4723 = vrcp.pop %v4588
        %v4724 = vmul.f32 %v4148, %v4723
        %v4725 = vrcp.pop %v4591
        %v4726 = vmul.f32 %v4150, %v4725
        %v4727 = vrcp.pop %v4594
        %v4728 = vmul.f32 %v4152, %v4727
        %v4729 = vrcp.pop %v4597
        %v4730 = vmul.f32 %v4154, %v4729
        %v4731 = vrcp.pop %v4600
        %v4732 = vmul.f32 %v4156, %v4731
        %v4733 = vrcp.pop %v4603
        %v4734 = vmul.f32 %v4158, %v4733
        %v4735 = vrcp.pop %v4606
        %v4736 = vmul.f32 %v4160, %v4735
        %v4737 = vrcp.pop %v4609
        %v4738 = vmul.f32 %v4162, %v4737
        %v4739 = vrcp.pop %v4612
        %v4740 = vmul.f32 %v4164, %v4739
        %v4741 = vsel %vm1153, %v1731, %v2692
        %v4742 = vsel %vm1153, %v1733, %v2694
        %v4743 = vsel %vm1153, %v1735, %v2696
        %v4744 = vsel %vm1153, %v1737, %v2698
        %v4745 = vsel %vm1153, %v1739, %v2700
        %v4746 = vsel %vm1153, %v1741, %v2702
        %v4747 = vsel %vm1153, %v1743, %v2704
        %v4748 = vsel %vm1153, %v1745, %v2706
        %v4749 = vsel %vm1153, %v1747, %v2708
        %v4750 = vsel %vm1153, %v1749, %v2710
        %v4751 = vsel %vm1153, %v1751, %v2712
        %v4752 = vsel %vm1153, %v1753, %v2714
        %v4753 = vsel %vm1153, %v1755, %v2716
        %v4754 = vsel %vm1153, %v1757, %v2718
        %v4755 = vsel %vm1153, %v1759, %v2720
        %v4756 = vsel %vm1153, %v1761, %v2722
        %v4757 = vsel %vm1153, %v1763, %v2724
        %v4758 = vsel %vm1153, %v1765, %v2726
        %v4759 = vsel %vm1153, %v1767, %v2728
        %v4760 = vsel %vm1153, %v1769, %v2730
        %v4761 = vsel %vm1153, %v1771, %v2732
        %v4762 = vsel %vm1153, %v1773, %v2734
        %v4763 = vsel %vm1153, %v1775, %v2736
        %v4764 = vsel %vm1153, %v1777, %v2738
        %v4765 = vsel %vm1153, %v1779, %v2740
        %v4766 = vsel %vm1153, %v1781, %v2742
        %v4767 = vsel %vm1153, %v1783, %v2744
        %v4768 = vsel %vm1153, %v1785, %v2746
        %v4769 = vsel %vm1153, %v1787, %v2748
        %v4770 = vsel %vm1153, %v1789, %v2750
        %v4771 = vsel %vm1153, %v1791, %v2752
        %v4772 = vsel %vm1153, %v1793, %v2754
        %v4773 = vsel %vm1153, %v1795, %v2756
        %v4774 = vsel %vm1153, %v1797, %v2758
        %v4775 = vsel %vm1153, %v1799, %v2760
        %v4776 = vsel %vm1153, %v1801, %v2762
        %v4777 = vsel %vm1153, %v1803, %v2764
        %v4778 = vsel %vm1153, %v1805, %v2766
        %v4779 = vsel %vm1153, %v1807, %v2768
        %v4780 = vsel %vm1153, %v1809, %v2770
        %v4781 = vsel %vm1153, %v1811, %v2772
        %v4782 = vsel %vm1153, %v1813, %v2774
        %v4783 = vsel %vm1153, %v1815, %v2776
        %v4784 = vsel %vm1153, %v1817, %v2778
        %v4785 = vsel %vm1153, %v1819, %v2780
        %v4786 = vsel %vm1153, %v1821, %v2782
        %v4787 = vsel %vm1153, %v1823, %v2784
        %v4788 = vsel %vm1153, %v1825, %v2786
        %v4789 = vsel %vm1153, %v1827, %v2788
        %v4790 = vsel %vm1153, %v1829, %v2790
        %v4791 = vsel %vm1153, %v1831, %v2792
        %v4792 = vsel %vm1153, %v1833, %v2794
        %v4793 = vsel %vm1153, %v1835, %v2796
        %v4794 = vsel %vm1153, %v1837, %v2798
        %v4795 = vsel %vm1153, %v1839, %v2800
        %v4796 = vsel %vm1153, %v1841, %v2802
        %v4797 = vsel %vm1153, %v1843, %v2804
        %v4798 = vsel %vm1153, %v1845, %v2806
        %v4799 = vsel %vm1153, %v1847, %v2808
        %v4800 = vsel %vm1153, %v1849, %v2810
        %v4801 = vsel %vm1153, %v1851, %v2812
        %v4802 = vsel %vm1153, %v1853, %v2814
        %v4803 = vsel %vm1153, %v1855, %v2816
        %v4804 = vsel %vm1153, %v1857, %v2818
        %vm4805 = vcmask 261120
        %v4806 = vsel %vm4805, %v4741, %v3653
        %v4807 = vsel %vm4805, %v4742, %v3655
        %v4808 = vsel %vm4805, %v4743, %v3657
        %v4809 = vsel %vm4805, %v4744, %v3659
        %v4810 = vsel %vm4805, %v4745, %v3661
        %v4811 = vsel %vm4805, %v4746, %v3663
        %v4812 = vsel %vm4805, %v4747, %v3665
        %v4813 = vsel %vm4805, %v4748, %v3667
        %v4814 = vsel %vm4805, %v4749, %v3669
        %v4815 = vsel %vm4805, %v4750, %v3671
        %v4816 = vsel %vm4805, %v4751, %v3673
        %v4817 = vsel %vm4805, %v4752, %v3675
        %v4818 = vsel %vm4805, %v4753, %v3677
        %v4819 = vsel %vm4805, %v4754, %v3679
        %v4820 = vsel %vm4805, %v4755, %v3681
        %v4821 = vsel %vm4805, %v4756, %v3683
        %v4822 = vsel %vm4805, %v4757, %v3685
        %v4823 = vsel %vm4805, %v4758, %v3687
        %v4824 = vsel %vm4805, %v4759, %v3689
        %v4825 = vsel %vm4805, %v4760, %v3691
        %v4826 = vsel %vm4805, %v4761, %v3693
        %v4827 = vsel %vm4805, %v4762, %v3695
        %v4828 = vsel %vm4805, %v4763, %v3697
        %v4829 = vsel %vm4805, %v4764, %v3699
        %v4830 = vsel %vm4805, %v4765, %v3701
        %v4831 = vsel %vm4805, %v4766, %v3703
        %v4832 = vsel %vm4805, %v4767, %v3705
        %v4833 = vsel %vm4805, %v4768, %v3707
        %v4834 = vsel %vm4805, %v4769, %v3709
        %v4835 = vsel %vm4805, %v4770, %v3711
        %v4836 = vsel %vm4805, %v4771, %v3713
        %v4837 = vsel %vm4805, %v4772, %v3715
        %v4838 = vsel %vm4805, %v4773, %v3717
        %v4839 = vsel %vm4805, %v4774, %v3719
        %v4840 = vsel %vm4805, %v4775, %v3721
        %v4841 = vsel %vm4805, %v4776, %v3723
        %v4842 = vsel %vm4805, %v4777, %v3725
        %v4843 = vsel %vm4805, %v4778, %v3727
        %v4844 = vsel %vm4805, %v4779, %v3729
        %v4845 = vsel %vm4805, %v4780, %v3731
        %v4846 = vsel %vm4805, %v4781, %v3733
        %v4847 = vsel %vm4805, %v4782, %v3735
        %v4848 = vsel %vm4805, %v4783, %v3737
        %v4849 = vsel %vm4805, %v4784, %v3739
        %v4850 = vsel %vm4805, %v4785, %v3741
        %v4851 = vsel %vm4805, %v4786, %v3743
        %v4852 = vsel %vm4805, %v4787, %v3745
        %v4853 = vsel %vm4805, %v4788, %v3747
        %v4854 = vsel %vm4805, %v4789, %v3749
        %v4855 = vsel %vm4805, %v4790, %v3751
        %v4856 = vsel %vm4805, %v4791, %v3753
        %v4857 = vsel %vm4805, %v4792, %v3755
        %v4858 = vsel %vm4805, %v4793, %v3757
        %v4859 = vsel %vm4805, %v4794, %v3759
        %v4860 = vsel %vm4805, %v4795, %v3761
        %v4861 = vsel %vm4805, %v4796, %v3763
        %v4862 = vsel %vm4805, %v4797, %v3765
        %v4863 = vsel %vm4805, %v4798, %v3767
        %v4864 = vsel %vm4805, %v4799, %v3769
        %v4865 = vsel %vm4805, %v4800, %v3771
        %v4866 = vsel %vm4805, %v4801, %v3773
        %v4867 = vsel %vm4805, %v4802, %v3775
        %v4868 = vsel %vm4805, %v4803, %v3777
        %v4869 = vsel %vm4805, %v4804, %v3779
        %vm4870 = vcmask 392192
        %v4871 = vsel %vm4870, %v4806, %v4614
        %v4872 = vsel %vm4870, %v4807, %v4616
        %v4873 = vsel %vm4870, %v4808, %v4618
        %v4874 = vsel %vm4870, %v4809, %v4620
        %v4875 = vsel %vm4870, %v4810, %v4622
        %v4876 = vsel %vm4870, %v4811, %v4624
        %v4877 = vsel %vm4870, %v4812, %v4626
        %v4878 = vsel %vm4870, %v4813, %v4628
        %v4879 = vsel %vm4870, %v4814, %v4630
        %v4880 = vsel %vm4870, %v4815, %v4632
        %v4881 = vsel %vm4870, %v4816, %v4634
        %v4882 = vsel %vm4870, %v4817, %v4636
        %v4883 = vsel %vm4870, %v4818, %v4638
        %v4884 = vsel %vm4870, %v4819, %v4640
        %v4885 = vsel %vm4870, %v4820, %v4642
        %v4886 = vsel %vm4870, %v4821, %v4644
        %v4887 = vsel %vm4870, %v4822, %v4646
        %v4888 = vsel %vm4870, %v4823, %v4648
        %v4889 = vsel %vm4870, %v4824, %v4650
        %v4890 = vsel %vm4870, %v4825, %v4652
        %v4891 = vsel %vm4870, %v4826, %v4654
        %v4892 = vsel %vm4870, %v4827, %v4656
        %v4893 = vsel %vm4870, %v4828, %v4658
        %v4894 = vsel %vm4870, %v4829, %v4660
        %v4895 = vsel %vm4870, %v4830, %v4662
        %v4896 = vsel %vm4870, %v4831, %v4664
        %v4897 = vsel %vm4870, %v4832, %v4666
        %v4898 = vsel %vm4870, %v4833, %v4668
        %v4899 = vsel %vm4870, %v4834, %v4670
        %v4900 = vsel %vm4870, %v4835, %v4672
        %v4901 = vsel %vm4870, %v4836, %v4674
        %v4902 = vsel %vm4870, %v4837, %v4676
        %v4903 = vsel %vm4870, %v4838, %v4678
        %v4904 = vsel %vm4870, %v4839, %v4680
        %v4905 = vsel %vm4870, %v4840, %v4682
        %v4906 = vsel %vm4870, %v4841, %v4684
        %v4907 = vsel %vm4870, %v4842, %v4686
        %v4908 = vsel %vm4870, %v4843, %v4688
        %v4909 = vsel %vm4870, %v4844, %v4690
        %v4910 = vsel %vm4870, %v4845, %v4692
        %v4911 = vsel %vm4870, %v4846, %v4694
        %v4912 = vsel %vm4870, %v4847, %v4696
        %v4913 = vsel %vm4870, %v4848, %v4698
        %v4914 = vsel %vm4870, %v4849, %v4700
        %v4915 = vsel %vm4870, %v4850, %v4702
        %v4916 = vsel %vm4870, %v4851, %v4704
        %v4917 = vsel %vm4870, %v4852, %v4706
        %v4918 = vsel %vm4870, %v4853, %v4708
        %v4919 = vsel %vm4870, %v4854, %v4710
        %v4920 = vsel %vm4870, %v4855, %v4712
        %v4921 = vsel %vm4870, %v4856, %v4714
        %v4922 = vsel %vm4870, %v4857, %v4716
        %v4923 = vsel %vm4870, %v4858, %v4718
        %v4924 = vsel %vm4870, %v4859, %v4720
        %v4925 = vsel %vm4870, %v4860, %v4722
        %v4926 = vsel %vm4870, %v4861, %v4724
        %v4927 = vsel %vm4870, %v4862, %v4726
        %v4928 = vsel %vm4870, %v4863, %v4728
        %v4929 = vsel %vm4870, %v4864, %v4730
        %v4930 = vsel %vm4870, %v4865, %v4732
        %v4931 = vsel %vm4870, %v4866, %v4734
        %v4932 = vsel %vm4870, %v4867, %v4736
        %v4933 = vsel %vm4870, %v4868, %v4738
        %v4934 = vsel %vm4870, %v4869, %v4740
        %v4935 = vld [vmem:[%s4] sm:$0xff]
        %v4936 = vld [vmem:[%s4 + $0x8] sm:$0xff]
        %v4937 = vld [vmem:[%s4 + $0x10] sm:$0xff]
        %v4938 = vld [vmem:[%s4 + $0x18] sm:$0xff]
        %v4939 = vld [vmem:[%s4 + $0x20] sm:$0xff]
        %v4940 = vld [vmem:[%s4 + $0x28] sm:$0xff]
        %v4941 = vld [vmem:[%s4 + $0x30] sm:$0xff]
        %v4942 = vld [vmem:[%s4 + $0x38] sm:$0xff]
        %vm4943 = vcmask 523264
        %v4945 = vsel %vm4943, %v4871, 0
        %v4948 = vsel %vm4943, %v4872, 0
        %v4951 = vsel %vm4943, %v4873, 0
        %v4954 = vsel %vm4943, %v4874, 0
        %v4957 = vsel %vm4943, %v4875, 0
        %v4960 = vsel %vm4943, %v4876, 0
        %v4963 = vsel %vm4943, %v4877, 0
        %v4966 = vsel %vm4943, %v4878, 0
        %v4969 = vsel %vm4943, %v4879, 0
        %v4972 = vsel %vm4943, %v4880, 0
        %v4975 = vsel %vm4943, %v4881, 0
        %v4978 = vsel %vm4943, %v4882, 0
        %v4981 = vsel %vm4943, %v4883, 0
        %v4984 = vsel %vm4943, %v4884, 0
        %v4987 = vsel %vm4943, %v4885, 0
        %v4990 = vsel %vm4943, %v4886, 0
        %v4993 = vsel %vm4943, %v4887, 0
        %v4996 = vsel %vm4943, %v4888, 0
        %v4999 = vsel %vm4943, %v4889, 0
        %v5002 = vsel %vm4943, %v4890, 0
        %v5005 = vsel %vm4943, %v4891, 0
        %v5008 = vsel %vm4943, %v4892, 0
        %v5011 = vsel %vm4943, %v4893, 0
        %v5014 = vsel %vm4943, %v4894, 0
        %v5017 = vsel %vm4943, %v4895, 0
        %v5020 = vsel %vm4943, %v4896, 0
        %v5023 = vsel %vm4943, %v4897, 0
        %v5026 = vsel %vm4943, %v4898, 0
        %v5029 = vsel %vm4943, %v4899, 0
        %v5032 = vsel %vm4943, %v4900, 0
        %v5035 = vsel %vm4943, %v4901, 0
        %v5038 = vsel %vm4943, %v4902, 0
        %v5041 = vsel %vm4943, %v4903, 0
        %v5044 = vsel %vm4943, %v4904, 0
        %v5047 = vsel %vm4943, %v4905, 0
        %v5050 = vsel %vm4943, %v4906, 0
        %v5053 = vsel %vm4943, %v4907, 0
        %v5056 = vsel %vm4943, %v4908, 0
        %v5059 = vsel %vm4943, %v4909, 0
        %v5062 = vsel %vm4943, %v4910, 0
        %v5065 = vsel %vm4943, %v4911, 0
        %v5068 = vsel %vm4943, %v4912, 0
        %v5071 = vsel %vm4943, %v4913, 0
        %v5074 = vsel %vm4943, %v4914, 0
        %v5077 = vsel %vm4943, %v4915, 0
        %v5080 = vsel %vm4943, %v4916, 0
        %v5083 = vsel %vm4943, %v4917, 0
        %v5086 = vsel %vm4943, %v4918, 0
        %v5089 = vsel %vm4943, %v4919, 0
        %v5092 = vsel %vm4943, %v4920, 0
        %v5095 = vsel %vm4943, %v4921, 0
        %v5098 = vsel %vm4943, %v4922, 0
        %v5101 = vsel %vm4943, %v4923, 0
        %v5104 = vsel %vm4943, %v4924, 0
        %v5107 = vsel %vm4943, %v4925, 0
        %v5110 = vsel %vm4943, %v4926, 0
        %v5113 = vsel %vm4943, %v4927, 0
        %v5116 = vsel %vm4943, %v4928, 0
        %v5119 = vsel %vm4943, %v4929, 0
        %v5122 = vsel %vm4943, %v4930, 0
        %v5125 = vsel %vm4943, %v4931, 0
        %v5128 = vsel %vm4943, %v4932, 0
        %v5131 = vsel %vm4943, %v4933, 0
        %v5134 = vsel %vm4943, %v4934, 0
        %5136 = vmatprep.subr.mxu0 0.0
        %5137 = vmatpush1.msra.mxu0 %v4935
        %5138 = vmatprep.subr.mxu0 0.0
        %5139 = vmatpush1.msra.mxu0 %v4936
        %5140 = vmatprep.subr.mxu0 0.0
        %5141 = vmatpush1.msra.mxu0 %v4937
        %5142 = vmatprep.subr.mxu0 0.0
        %5143 = vmatpush1.msra.mxu0 %v4938
        %5144 = vmatprep.subr.mxu0 0.0
        %5145 = vmatpush1.msra.mxu0 %v4939
        %5146 = vmatprep.subr.mxu0 0.0
        %5147 = vmatpush1.msra.mxu0 %v4940
        %5148 = vmatprep.subr.mxu0 0.0
        %5149 = vmatpush1.msra.mxu0 %v4941
        %5150 = vmatprep.subr.mxu0 0.0
        %5151 = vmatpush1.msra.mxu0 %v4942
        %5152 = vmatprep.subr.mxu0 0.0
        %5153 = vmatpush1.msra.mxu0 0.0
        %5154 = vmatprep.subr.mxu0 0.0
        %5155 = vmatpush1.msra.mxu0 0.0
        %5156 = vmatprep.subr.mxu0 0.0
        %5157 = vmatpush1.msra.mxu0 0.0
        %5158 = vmatprep.subr.mxu0 0.0
        %5159 = vmatpush1.msra.mxu0 0.0
        %5160 = vmatprep.subr.mxu0 0.0
        %5161 = vmatpush1.msra.mxu0 0.0
        %5162 = vmatprep.subr.mxu0 0.0
        %5163 = vmatpush1.msra.mxu0 0.0
        %5164 = vmatprep.subr.mxu0 0.0
        %5165 = vmatpush1.msra.mxu0 0.0
        %5166 = vmatprep.subr.mxu0 0.0
        %5167 = vmatpush1.msra.mxu0 0.0
        %5168 = vmatprep.subr.mxu0 0.0
        %5169 = vmatpush1.msra.mxu0 0.0
        %5170 = vmatprep.subr.mxu0 0.0
        %5171 = vmatpush1.msra.mxu0 0.0
        %5172 = vmatprep.subr.mxu0 0.0
        %5173 = vmatpush1.msra.mxu0 0.0
        %5174 = vmatprep.subr.mxu0 0.0
        %5175 = vmatpush1.msra.mxu0 0.0
        %5176 = vmatprep.subr.mxu0 0.0
        %5177 = vmatpush1.msra.mxu0 0.0
        %5178 = vmatprep.subr.mxu0 0.0
        %5179 = vmatpush1.msra.mxu0 0.0
        %5180 = vmatprep.subr.mxu0 0.0
        %5181 = vmatpush1.msra.mxu0 0.0
        %5182 = vmatprep.subr.mxu0 0.0
        %5183 = vmatpush1.msra.mxu0 0.0
        %5184 = vmatprep.subr.mxu0 0.0
        %5185 = vmatpush1.msra.mxu0 0.0
        %5186 = vmatprep.subr.mxu0 0.0
        %5187 = vmatpush1.msra.mxu0 0.0
        %5188 = vmatprep.subr.mxu0 0.0
        %5189 = vmatpush1.msra.mxu0 0.0
        %5190 = vmatprep.subr.mxu0 0.0
        %5191 = vmatpush1.msra.mxu0 0.0
        %5192 = vmatprep.subr.mxu0 0.0
        %5193 = vmatpush1.msra.mxu0 0.0
        %5194 = vmatprep.subr.mxu0 0.0
        %5195 = vmatpush1.msra.mxu0 0.0
        %5196 = vmatprep.subr.mxu0 0.0
        %5197 = vmatpush1.msra.mxu0 0.0
        %5198 = vmatprep.subr.mxu0 0.0
        %5199 = vmatpush1.msra.mxu0 0.0
        %5200 = vmatprep.mubr.f32.mxu0 0.0
        %5201 = vmatmul.mubr.f32.gmra.mrb[0].mxu0 %v4945
        %v5202 = vpop.f32.mrb[0].mxu0
        %v5203 = vadd.f32 0.0, %v5202
        %v5204 = vpop.f32.mrb[0].mxu0
        %5205 = vmatprep.mubr.f32.mxu0 0.0
        %5206 = vmatmul.mubr.f32.gmra.mrb[0].mxu0 %v4948
        %v5207 = vpop.f32.mrb[0].mxu0
        %v5208 = vadd.f32 0.0, %v5207
        %v5209 = vpop.f32.mrb[0].mxu0
        %5210 = vmatprep.mubr.f32.mxu0 0.0
        %5211 = vmatmul.mubr.f32.gmra.mrb[0].mxu0 %v4951
        %v5212 = vpop.f32.mrb[0].mxu0
        %v5213 = vadd.f32 0.0, %v5212
        %v5214 = vpop.f32.mrb[0].mxu0
        %5215 = vmatprep.mubr.f32.mxu0 0.0
        %5216 = vmatmul.mubr.f32.gmra.mrb[0].mxu0 %v4954
        %v5217 = vpop.f32.mrb[0].mxu0
        %v5218 = vadd.f32 0.0, %v5217
        %v5219 = vpop.f32.mrb[0].mxu0
        %5220 = vmatprep.mubr.f32.mxu0 0.0
        %5221 = vmatmul.mubr.f32.gmra.mrb[0].mxu0 %v4957
        %v5222 = vpop.f32.mrb[0].mxu0
        %v5223 = vadd.f32 0.0, %v5222
        %v5224 = vpop.f32.mrb[0].mxu0
        %5225 = vmatprep.mubr.f32.mxu0 0.0
        %5226 = vmatmul.mubr.f32.gmra.mrb[0].mxu0 %v4960
        %v5227 = vpop.f32.mrb[0].mxu0
        %v5228 = vadd.f32 0.0, %v5227
        %v5229 = vpop.f32.mrb[0].mxu0
        %5230 = vmatprep.mubr.f32.mxu0 0.0
        %5231 = vmatmul.mubr.f32.gmra.mrb[0].mxu0 %v4963
        %v5232 = vpop.f32.mrb[0].mxu0
        %v5233 = vadd.f32 0.0, %v5232
        %v5234 = vpop.f32.mrb[0].mxu0
        %5235 = vmatprep.mubr.f32.mxu0 0.0
        %5236 = vmatmul.mubr.f32.gmra.mrb[0].mxu0 %v4966
        %v5237 = vpop.f32.mrb[0].mxu0
        %v5238 = vadd.f32 0.0, %v5237
        %v5239 = vpop.f32.mrb[0].mxu0
        %5240 = vmatprep.mubr.f32.mxu0 0.0
        %5241 = vmatmul.mubr.f32.gmra.mrb[0].mxu0 %v4969
        %v5242 = vpop.f32.mrb[0].mxu0
        %v5243 = vadd.f32 0.0, %v5242
        %v5244 = vpop.f32.mrb[0].mxu0
        %5245 = vmatprep.mubr.f32.mxu0 0.0
        %5246 = vmatmul.mubr.f32.gmra.mrb[0].mxu0 %v4972
        %v5247 = vpop.f32.mrb[0].mxu0
        %v5248 = vadd.f32 0.0, %v5247
        %v5249 = vpop.f32.mrb[0].mxu0
        %5250 = vmatprep.mubr.f32.mxu0 0.0
        %5251 = vmatmul.mubr.f32.gmra.mrb[0].mxu0 %v4975
        %v5252 = vpop.f32.mrb[0].mxu0
        %v5253 = vadd.f32 0.0, %v5252
        %v5254 = vpop.f32.mrb[0].mxu0
        %5255 = vmatprep.mubr.f32.mxu0 0.0
        %5256 = vmatmul.mubr.f32.gmra.mrb[0].mxu0 %v4978
        %v5257 = vpop.f32.mrb[0].mxu0
        %v5258 = vadd.f32 0.0, %v5257
        %v5259 = vpop.f32.mrb[0].mxu0
        %5260 = vmatprep.mubr.f32.mxu0 0.0
        %5261 = vmatmul.mubr.f32.gmra.mrb[0].mxu0 %v4981
        %v5262 = vpop.f32.mrb[0].mxu0
        %v5263 = vadd.f32 0.0, %v5262
        %v5264 = vpop.f32.mrb[0].mxu0
        %5265 = vmatprep.mubr.f32.mxu0 0.0
        %5266 = vmatmul.mubr.f32.gmra.mrb[0].mxu0 %v4984
        %v5267 = vpop.f32.mrb[0].mxu0
        %v5268 = vadd.f32 0.0, %v5267
        %v5269 = vpop.f32.mrb[0].mxu0
        %5270 = vmatprep.mubr.f32.mxu0 0.0
        %5271 = vmatmul.mubr.f32.gmra.mrb[0].mxu0 %v4987
        %v5272 = vpop.f32.mrb[0].mxu0
        %v5273 = vadd.f32 0.0, %v5272
        %v5274 = vpop.f32.mrb[0].mxu0
        %5275 = vmatprep.mubr.f32.mxu0 0.0
        %5276 = vmatmul.mubr.f32.gmra.mrb[0].mxu0 %v4990
        %v5277 = vpop.f32.mrb[0].mxu0
        %v5278 = vadd.f32 0.0, %v5277
        %v5279 = vpop.f32.mrb[0].mxu0
        %5280 = vmatprep.mubr.f32.mxu0 0.0
        %5281 = vmatmul.mubr.f32.gmra.mrb[0].mxu0 %v4993
        %v5282 = vpop.f32.mrb[0].mxu0
        %v5283 = vadd.f32 0.0, %v5282
        %v5284 = vpop.f32.mrb[0].mxu0
        %5285 = vmatprep.mubr.f32.mxu0 0.0
        %5286 = vmatmul.mubr.f32.gmra.mrb[0].mxu0 %v4996
        %v5287 = vpop.f32.mrb[0].mxu0
        %v5288 = vadd.f32 0.0, %v5287
        %v5289 = vpop.f32.mrb[0].mxu0
        %5290 = vmatprep.mubr.f32.mxu0 0.0
        %5291 = vmatmul.mubr.f32.gmra.mrb[0].mxu0 %v4999
        %v5292 = vpop.f32.mrb[0].mxu0
        %v5293 = vadd.f32 0.0, %v5292
        %v5294 = vpop.f32.mrb[0].mxu0
        %5295 = vmatprep.mubr.f32.mxu0 0.0
        %5296 = vmatmul.mubr.f32.gmra.mrb[0].mxu0 %v5002
        %v5297 = vpop.f32.mrb[0].mxu0
        %v5298 = vadd.f32 0.0, %v5297
        %v5299 = vpop.f32.mrb[0].mxu0
        %5300 = vmatprep.mubr.f32.mxu0 0.0
        %5301 = vmatmul.mubr.f32.gmra.mrb[0].mxu0 %v5005
        %v5302 = vpop.f32.mrb[0].mxu0
        %v5303 = vadd.f32 0.0, %v5302
        %v5304 = vpop.f32.mrb[0].mxu0
        %5305 = vmatprep.mubr.f32.mxu0 0.0
        %5306 = vmatmul.mubr.f32.gmra.mrb[0].mxu0 %v5008
        %v5307 = vpop.f32.mrb[0].mxu0
        %v5308 = vadd.f32 0.0, %v5307
        %v5309 = vpop.f32.mrb[0].mxu0
        %5310 = vmatprep.mubr.f32.mxu0 0.0
        %5311 = vmatmul.mubr.f32.gmra.mrb[0].mxu0 %v5011
        %v5312 = vpop.f32.mrb[0].mxu0
        %v5313 = vadd.f32 0.0, %v5312
        %v5314 = vpop.f32.mrb[0].mxu0
        %5315 = vmatprep.mubr.f32.mxu0 0.0
        %5316 = vmatmul.mubr.f32.gmra.mrb[0].mxu0 %v5014
        %v5317 = vpop.f32.mrb[0].mxu0
        %v5318 = vadd.f32 0.0, %v5317
        %v5319 = vpop.f32.mrb[0].mxu0
        %5320 = vmatprep.mubr.f32.mxu0 0.0
        %5321 = vmatmul.mubr.f32.gmra.mrb[0].mxu0 %v5017
        %v5322 = vpop.f32.mrb[0].mxu0
        %v5323 = vadd.f32 0.0, %v5322
        %v5324 = vpop.f32.mrb[0].mxu0
        %5325 = vmatprep.mubr.f32.mxu0 0.0
        %5326 = vmatmul.mubr.f32.gmra.mrb[0].mxu0 %v5020
        %v5327 = vpop.f32.mrb[0].mxu0
        %v5328 = vadd.f32 0.0, %v5327
        %v5329 = vpop.f32.mrb[0].mxu0
        %5330 = vmatprep.mubr.f32.mxu0 0.0
        %5331 = vmatmul.mubr.f32.gmra.mrb[0].mxu0 %v5023
        %v5332 = vpop.f32.mrb[0].mxu0
        %v5333 = vadd.f32 0.0, %v5332
        %v5334 = vpop.f32.mrb[0].mxu0
        %5335 = vmatprep.mubr.f32.mxu0 0.0
        %5336 = vmatmul.mubr.f32.gmra.mrb[0].mxu0 %v5026
        %v5337 = vpop.f32.mrb[0].mxu0
        %v5338 = vadd.f32 0.0, %v5337
        %v5339 = vpop.f32.mrb[0].mxu0
        %5340 = vmatprep.mubr.f32.mxu0 0.0
        %5341 = vmatmul.mubr.f32.gmra.mrb[0].mxu0 %v5029
        %v5342 = vpop.f32.mrb[0].mxu0
        %v5343 = vadd.f32 0.0, %v5342
        %v5344 = vpop.f32.mrb[0].mxu0
        %5345 = vmatprep.mubr.f32.mxu0 0.0
        %5346 = vmatmul.mubr.f32.gmra.mrb[0].mxu0 %v5032
        %v5347 = vpop.f32.mrb[0].mxu0
        %v5348 = vadd.f32 0.0, %v5347
        %v5349 = vpop.f32.mrb[0].mxu0
        %5350 = vmatprep.mubr.f32.mxu0 0.0
        %5351 = vmatmul.mubr.f32.gmra.mrb[0].mxu0 %v5035
        %v5352 = vpop.f32.mrb[0].mxu0
        %v5353 = vadd.f32 0.0, %v5352
        %v5354 = vpop.f32.mrb[0].mxu0
        %5355 = vmatprep.mubr.f32.mxu0 0.0
        %5356 = vmatmul.mubr.f32.gmra.mrb[0].mxu0 %v5038
        %v5357 = vpop.f32.mrb[0].mxu0
        %v5358 = vadd.f32 0.0, %v5357
        %v5359 = vpop.f32.mrb[0].mxu0
        %5360 = vmatprep.mubr.f32.mxu0 0.0
        %5361 = vmatmul.mubr.f32.gmra.mrb[0].mxu0 %v5041
        %v5362 = vpop.f32.mrb[0].mxu0
        %v5363 = vadd.f32 0.0, %v5362
        %v5364 = vpop.f32.mrb[0].mxu0
        %5365 = vmatprep.mubr.f32.mxu0 0.0
        %5366 = vmatmul.mubr.f32.gmra.mrb[0].mxu0 %v5044
        %v5367 = vpop.f32.mrb[0].mxu0
        %v5368 = vadd.f32 0.0, %v5367
        %v5369 = vpop.f32.mrb[0].mxu0
        %5370 = vmatprep.mubr.f32.mxu0 0.0
        %5371 = vmatmul.mubr.f32.gmra.mrb[0].mxu0 %v5047
        %v5372 = vpop.f32.mrb[0].mxu0
        %v5373 = vadd.f32 0.0, %v5372
        %v5374 = vpop.f32.mrb[0].mxu0
        %5375 = vmatprep.mubr.f32.mxu0 0.0
        %5376 = vmatmul.mubr.f32.gmra.mrb[0].mxu0 %v5050
        %v5377 = vpop.f32.mrb[0].mxu0
        %v5378 = vadd.f32 0.0, %v5377
        %v5379 = vpop.f32.mrb[0].mxu0
        %5380 = vmatprep.mubr.f32.mxu0 0.0
        %5381 = vmatmul.mubr.f32.gmra.mrb[0].mxu0 %v5053
        %v5382 = vpop.f32.mrb[0].mxu0
        %v5383 = vadd.f32 0.0, %v5382
        %v5384 = vpop.f32.mrb[0].mxu0
        %5385 = vmatprep.mubr.f32.mxu0 0.0
        %5386 = vmatmul.mubr.f32.gmra.mrb[0].mxu0 %v5056
        %v5387 = vpop.f32.mrb[0].mxu0
        %v5388 = vadd.f32 0.0, %v5387
        %v5389 = vpop.f32.mrb[0].mxu0
        %5390 = vmatprep.mubr.f32.mxu0 0.0
        %5391 = vmatmul.mubr.f32.gmra.mrb[0].mxu0 %v5059
        %v5392 = vpop.f32.mrb[0].mxu0
        %v5393 = vadd.f32 0.0, %v5392
        %v5394 = vpop.f32.mrb[0].mxu0
        %5395 = vmatprep.mubr.f32.mxu0 0.0
        %5396 = vmatmul.mubr.f32.gmra.mrb[0].mxu0 %v5062
        %v5397 = vpop.f32.mrb[0].mxu0
        %v5398 = vadd.f32 0.0, %v5397
        %v5399 = vpop.f32.mrb[0].mxu0
        %5400 = vmatprep.mubr.f32.mxu0 0.0
        %5401 = vmatmul.mubr.f32.gmra.mrb[0].mxu0 %v5065
        %v5402 = vpop.f32.mrb[0].mxu0
        %v5403 = vadd.f32 0.0, %v5402
        %v5404 = vpop.f32.mrb[0].mxu0
        %5405 = vmatprep.mubr.f32.mxu0 0.0
        %5406 = vmatmul.mubr.f32.gmra.mrb[0].mxu0 %v5068
        %v5407 = vpop.f32.mrb[0].mxu0
        %v5408 = vadd.f32 0.0, %v5407
        %v5409 = vpop.f32.mrb[0].mxu0
        %5410 = vmatprep.mubr.f32.mxu0 0.0
        %5411 = vmatmul.mubr.f32.gmra.mrb[0].mxu0 %v5071
        %v5412 = vpop.f32.mrb[0].mxu0
        %v5413 = vadd.f32 0.0, %v5412
        %v5414 = vpop.f32.mrb[0].mxu0
        %5415 = vmatprep.mubr.f32.mxu0 0.0
        %5416 = vmatmul.mubr.f32.gmra.mrb[0].mxu0 %v5074
        %v5417 = vpop.f32.mrb[0].mxu0
        %v5418 = vadd.f32 0.0, %v5417
        %v5419 = vpop.f32.mrb[0].mxu0
        %5420 = vmatprep.mubr.f32.mxu0 0.0
        %5421 = vmatmul.mubr.f32.gmra.mrb[0].mxu0 %v5077
        %v5422 = vpop.f32.mrb[0].mxu0
        %v5423 = vadd.f32 0.0, %v5422
        %v5424 = vpop.f32.mrb[0].mxu0
        %5425 = vmatprep.mubr.f32.mxu0 0.0
        %5426 = vmatmul.mubr.f32.gmra.mrb[0].mxu0 %v5080
        %v5427 = vpop.f32.mrb[0].mxu0
        %v5428 = vadd.f32 0.0, %v5427
        %v5429 = vpop.f32.mrb[0].mxu0
        %5430 = vmatprep.mubr.f32.mxu0 0.0
        %5431 = vmatmul.mubr.f32.gmra.mrb[0].mxu0 %v5083
        %v5432 = vpop.f32.mrb[0].mxu0
        %v5433 = vadd.f32 0.0, %v5432
        %v5434 = vpop.f32.mrb[0].mxu0
        %5435 = vmatprep.mubr.f32.mxu0 0.0
        %5436 = vmatmul.mubr.f32.gmra.mrb[0].mxu0 %v5086
        %v5437 = vpop.f32.mrb[0].mxu0
        %v5438 = vadd.f32 0.0, %v5437
        %v5439 = vpop.f32.mrb[0].mxu0
        %5440 = vmatprep.mubr.f32.mxu0 0.0
        %5441 = vmatmul.mubr.f32.gmra.mrb[0].mxu0 %v5089
        %v5442 = vpop.f32.mrb[0].mxu0
        %v5443 = vadd.f32 0.0, %v5442
        %v5444 = vpop.f32.mrb[0].mxu0
        %5445 = vmatprep.mubr.f32.mxu0 0.0
        %5446 = vmatmul.mubr.f32.gmra.mrb[0].mxu0 %v5092
        %v5447 = vpop.f32.mrb[0].mxu0
        %v5448 = vadd.f32 0.0, %v5447
        %v5449 = vpop.f32.mrb[0].mxu0
        %5450 = vmatprep.mubr.f32.mxu0 0.0
        %5451 = vmatmul.mubr.f32.gmra.mrb[0].mxu0 %v5095
        %v5452 = vpop.f32.mrb[0].mxu0
        %v5453 = vadd.f32 0.0, %v5452
        %v5454 = vpop.f32.mrb[0].mxu0
        %5455 = vmatprep.mubr.f32.mxu0 0.0
        %5456 = vmatmul.mubr.f32.gmra.mrb[0].mxu0 %v5098
        %v5457 = vpop.f32.mrb[0].mxu0
        %v5458 = vadd.f32 0.0, %v5457
        %v5459 = vpop.f32.mrb[0].mxu0
        %5460 = vmatprep.mubr.f32.mxu0 0.0
        %5461 = vmatmul.mubr.f32.gmra.mrb[0].mxu0 %v5101
        %v5462 = vpop.f32.mrb[0].mxu0
        %v5463 = vadd.f32 0.0, %v5462
        %v5464 = vpop.f32.mrb[0].mxu0
        %5465 = vmatprep.mubr.f32.mxu0 0.0
        %5466 = vmatmul.mubr.f32.gmra.mrb[0].mxu0 %v5104
        %v5467 = vpop.f32.mrb[0].mxu0
        %v5468 = vadd.f32 0.0, %v5467
        %v5469 = vpop.f32.mrb[0].mxu0
        %5470 = vmatprep.mubr.f32.mxu0 0.0
        %5471 = vmatmul.mubr.f32.gmra.mrb[0].mxu0 %v5107
        %v5472 = vpop.f32.mrb[0].mxu0
        %v5473 = vadd.f32 0.0, %v5472
        %v5474 = vpop.f32.mrb[0].mxu0
        %5475 = vmatprep.mubr.f32.mxu0 0.0
        %5476 = vmatmul.mubr.f32.gmra.mrb[0].mxu0 %v5110
        %v5477 = vpop.f32.mrb[0].mxu0
        %v5478 = vadd.f32 0.0, %v5477
        %v5479 = vpop.f32.mrb[0].mxu0
        %5480 = vmatprep.mubr.f32.mxu0 0.0
        %5481 = vmatmul.mubr.f32.gmra.mrb[0].mxu0 %v5113
        %v5482 = vpop.f32.mrb[0].mxu0
        %v5483 = vadd.f32 0.0, %v5482
        %v5484 = vpop.f32.mrb[0].mxu0
        %5485 = vmatprep.mubr.f32.mxu0 0.0
        %5486 = vmatmul.mubr.f32.gmra.mrb[0].mxu0 %v5116
        %v5487 = vpop.f32.mrb[0].mxu0
        %v5488 = vadd.f32 0.0, %v5487
        %v5489 = vpop.f32.mrb[0].mxu0
        %5490 = vmatprep.mubr.f32.mxu0 0.0
        %5491 = vmatmul.mubr.f32.gmra.mrb[0].mxu0 %v5119
        %v5492 = vpop.f32.mrb[0].mxu0
        %v5493 = vadd.f32 0.0, %v5492
        %v5494 = vpop.f32.mrb[0].mxu0
        %5495 = vmatprep.mubr.f32.mxu0 0.0
        %5496 = vmatmul.mubr.f32.gmra.mrb[0].mxu0 %v5122
        %v5497 = vpop.f32.mrb[0].mxu0
        %v5498 = vadd.f32 0.0, %v5497
        %v5499 = vpop.f32.mrb[0].mxu0
        %5500 = vmatprep.mubr.f32.mxu0 0.0
        %5501 = vmatmul.mubr.f32.gmra.mrb[0].mxu0 %v5125
        %v5502 = vpop.f32.mrb[0].mxu0
        %v5503 = vadd.f32 0.0, %v5502
        %v5504 = vpop.f32.mrb[0].mxu0
        %5505 = vmatprep.mubr.f32.mxu0 0.0
        %5506 = vmatmul.mubr.f32.gmra.mrb[0].mxu0 %v5128
        %v5507 = vpop.f32.mrb[0].mxu0
        %v5508 = vadd.f32 0.0, %v5507
        %v5509 = vpop.f32.mrb[0].mxu0
        %5510 = vmatprep.mubr.f32.mxu0 0.0
        %5511 = vmatmul.mubr.f32.gmra.mrb[0].mxu0 %v5131
        %v5512 = vpop.f32.mrb[0].mxu0
        %v5513 = vadd.f32 0.0, %v5512
        %v5514 = vpop.f32.mrb[0].mxu0
        %5515 = vmatprep.mubr.f32.mxu0 0.0
        %5516 = vmatmul.mubr.f32.gmra.mrb[0].mxu0 %v5134
        %v5517 = vpop.f32.mrb[0].mxu0
        %v5518 = vadd.f32 0.0, %v5517
        %v5519 = vpop.f32.mrb[0].mxu0
        %5520 = vdwg.mxu0
        %v5521 = vld [vmem:[%s5] sm:$0xff]
        %v5522 = vld [vmem:[%s5 + $0x8] sm:$0xff]
        %v5523 = vld [vmem:[%s5 + $0x10] sm:$0xff]
        %v5524 = vld [vmem:[%s5 + $0x18] sm:$0xff]
        %v5525 = vld [vmem:[%s5 + $0x20] sm:$0xff]
        %v5526 = vld [vmem:[%s5 + $0x28] sm:$0xff]
        %v5527 = vld [vmem:[%s5 + $0x30] sm:$0xff]
        %v5528 = vld [vmem:[%s5 + $0x38] sm:$0xff]
        %v5529 = vld [vmem:[%s5 + $0x40] sm:$0xff]
        %v5530 = vld [vmem:[%s5 + $0x48] sm:$0xff]
        %v5531 = vld [vmem:[%s5 + $0x50] sm:$0xff]
        %v5532 = vld [vmem:[%s5 + $0x58] sm:$0xff]
        %v5533 = vld [vmem:[%s5 + $0x60] sm:$0xff]
        %v5534 = vld [vmem:[%s5 + $0x68] sm:$0xff]
        %v5535 = vld [vmem:[%s5 + $0x70] sm:$0xff]
        %v5536 = vld [vmem:[%s5 + $0x78] sm:$0xff]
        %v5537 = vld [vmem:[%s6] sm:$0x1]
        %v5539 = vlaneseq
        %v5540 = vshrl.u32 %v5539, 7
        %v5541 = vsub.s32 0, %v5540
        %v5542 = vrot.slane %v5537, %v5541
        %5544 = vmatprep.subr.mxu0 0.0
        %5545 = vmatpush1.msra.mxu0 %v5521
        %5546 = vmatprep.subr.mxu0 0.0
        %5547 = vmatpush1.msra.mxu0 %v5522
        %5548 = vmatprep.subr.mxu0 0.0
        %5549 = vmatpush1.msra.mxu0 %v5523
        %5550 = vmatprep.subr.mxu0 0.0
        %5551 = vmatpush1.msra.mxu0 %v5524
        %5552 = vmatprep.subr.mxu0 0.0
        %5553 = vmatpush1.msra.mxu0 %v5525
        %5554 = vmatprep.subr.mxu0 0.0
        %5555 = vmatpush1.msra.mxu0 %v5526
        %5556 = vmatprep.subr.mxu0 0.0
        %5557 = vmatpush1.msra.mxu0 %v5527
        %5558 = vmatprep.subr.mxu0 0.0
        %5559 = vmatpush1.msra.mxu0 %v5528
        %5560 = vmatprep.subr.mxu0 0.0
        %5561 = vmatpush1.msra.mxu0 %v5529
        %5562 = vmatprep.subr.mxu0 0.0
        %5563 = vmatpush1.msra.mxu0 %v5530
        %5564 = vmatprep.subr.mxu0 0.0
        %5565 = vmatpush1.msra.mxu0 %v5531
        %5566 = vmatprep.subr.mxu0 0.0
        %5567 = vmatpush1.msra.mxu0 %v5532
        %5568 = vmatprep.subr.mxu0 0.0
        %5569 = vmatpush1.msra.mxu0 %v5533
        %5570 = vmatprep.subr.mxu0 0.0
        %5571 = vmatpush1.msra.mxu0 %v5534
        %5572 = vmatprep.subr.mxu0 0.0
        %5573 = vmatpush1.msra.mxu0 %v5535
        %5574 = vmatprep.subr.mxu0 0.0
        %5575 = vmatpush1.msra.mxu0 %v5536
        %5576 = vmatprep.subr.mxu0 0.0
        %5577 = vmatpush1.msra.mxu0 0.0
        %5578 = vmatprep.subr.mxu0 0.0
        %5579 = vmatpush1.msra.mxu0 0.0
        %5580 = vmatprep.subr.mxu0 0.0
        %5581 = vmatpush1.msra.mxu0 0.0
        %5582 = vmatprep.subr.mxu0 0.0
        %5583 = vmatpush1.msra.mxu0 0.0
        %5584 = vmatprep.subr.mxu0 0.0
        %5585 = vmatpush1.msra.mxu0 0.0
        %5586 = vmatprep.subr.mxu0 0.0
        %5587 = vmatpush1.msra.mxu0 0.0
        %5588 = vmatprep.subr.mxu0 0.0
        %5589 = vmatpush1.msra.mxu0 0.0
        %5590 = vmatprep.subr.mxu0 0.0
        %5591 = vmatpush1.msra.mxu0 0.0
        %5592 = vmatprep.subr.mxu0 0.0
        %5593 = vmatpush1.msra.mxu0 0.0
        %5594 = vmatprep.subr.mxu0 0.0
        %5595 = vmatpush1.msra.mxu0 0.0
        %5596 = vmatprep.subr.mxu0 0.0
        %5597 = vmatpush1.msra.mxu0 0.0
        %5598 = vmatprep.subr.mxu0 0.0
        %5599 = vmatpush1.msra.mxu0 0.0
        %5600 = vmatprep.subr.mxu0 0.0
        %5601 = vmatpush1.msra.mxu0 0.0
        %5602 = vmatprep.subr.mxu0 0.0
        %5603 = vmatpush1.msra.mxu0 0.0
        %5604 = vmatprep.subr.mxu0 0.0
        %5605 = vmatpush1.msra.mxu0 0.0
        %5606 = vmatprep.subr.mxu0 0.0
        %5607 = vmatpush1.msra.mxu0 0.0
        %5608 = vmatprep.mubr.f32.mxu0 0.0
        %5609 = vmatmul.mubr.f32.gmra.mrb[0].mxu0 %v5203
        %v5610 = vpop.f32.mrb[0].mxu0
        %v5611 = vadd.f32 %v5542, %v5610
        %v5612 = vpop.f32.mrb[0].mxu0
        %5613 = vmatprep.mubr.f32.mxu0 0.0
        %5614 = vmatmul.mubr.f32.gmra.mrb[0].mxu0 %v5208
        %v5615 = vpop.f32.mrb[0].mxu0
        %v5616 = vadd.f32 %v5542, %v5615
        %v5617 = vpop.f32.mrb[0].mxu0
        %5618 = vmatprep.mubr.f32.mxu0 0.0
        %5619 = vmatmul.mubr.f32.gmra.mrb[0].mxu0 %v5213
        %v5620 = vpop.f32.mrb[0].mxu0
        %v5621 = vadd.f32 %v5542, %v5620
        %v5622 = vpop.f32.mrb[0].mxu0
        %5623 = vmatprep.mubr.f32.mxu0 0.0
        %5624 = vmatmul.mubr.f32.gmra.mrb[0].mxu0 %v5218
        %v5625 = vpop.f32.mrb[0].mxu0
        %v5626 = vadd.f32 %v5542, %v5625
        %v5627 = vpop.f32.mrb[0].mxu0
        %5628 = vmatprep.mubr.f32.mxu0 0.0
        %5629 = vmatmul.mubr.f32.gmra.mrb[0].mxu0 %v5223
        %v5630 = vpop.f32.mrb[0].mxu0
        %v5631 = vadd.f32 %v5542, %v5630
        %v5632 = vpop.f32.mrb[0].mxu0
        %5633 = vmatprep.mubr.f32.mxu0 0.0
        %5634 = vmatmul.mubr.f32.gmra.mrb[0].mxu0 %v5228
        %v5635 = vpop.f32.mrb[0].mxu0
        %v5636 = vadd.f32 %v5542, %v5635
        %v5637 = vpop.f32.mrb[0].mxu0
        %5638 = vmatprep.mubr.f32.mxu0 0.0
        %5639 = vmatmul.mubr.f32.gmra.mrb[0].mxu0 %v5233
        %v5640 = vpop.f32.mrb[0].mxu0
        %v5641 = vadd.f32 %v5542, %v5640
        %v5642 = vpop.f32.mrb[0].mxu0
        %5643 = vmatprep.mubr.f32.mxu0 0.0
        %5644 = vmatmul.mubr.f32.gmra.mrb[0].mxu0 %v5238
        %v5645 = vpop.f32.mrb[0].mxu0
        %v5646 = vadd.f32 %v5542, %v5645
        %v5647 = vpop.f32.mrb[0].mxu0
        %5648 = vmatprep.mubr.f32.mxu0 0.0
        %5649 = vmatmul.mubr.f32.gmra.mrb[0].mxu0 %v5243
        %v5650 = vpop.f32.mrb[0].mxu0
        %v5651 = vadd.f32 %v5542, %v5650
        %v5652 = vpop.f32.mrb[0].mxu0
        %5653 = vmatprep.mubr.f32.mxu0 0.0
        %5654 = vmatmul.mubr.f32.gmra.mrb[0].mxu0 %v5248
        %v5655 = vpop.f32.mrb[0].mxu0
        %v5656 = vadd.f32 %v5542, %v5655
        %v5657 = vpop.f32.mrb[0].mxu0
        %5658 = vmatprep.mubr.f32.mxu0 0.0
        %5659 = vmatmul.mubr.f32.gmra.mrb[0].mxu0 %v5253
        %v5660 = vpop.f32.mrb[0].mxu0
        %v5661 = vadd.f32 %v5542, %v5660
        %v5662 = vpop.f32.mrb[0].mxu0
        %5663 = vmatprep.mubr.f32.mxu0 0.0
        %5664 = vmatmul.mubr.f32.gmra.mrb[0].mxu0 %v5258
        %v5665 = vpop.f32.mrb[0].mxu0
        %v5666 = vadd.f32 %v5542, %v5665
        %v5667 = vpop.f32.mrb[0].mxu0
        %5668 = vmatprep.mubr.f32.mxu0 0.0
        %5669 = vmatmul.mubr.f32.gmra.mrb[0].mxu0 %v5263
        %v5670 = vpop.f32.mrb[0].mxu0
        %v5671 = vadd.f32 %v5542, %v5670
        %v5672 = vpop.f32.mrb[0].mxu0
        %5673 = vmatprep.mubr.f32.mxu0 0.0
        %5674 = vmatmul.mubr.f32.gmra.mrb[0].mxu0 %v5268
        %v5675 = vpop.f32.mrb[0].mxu0
        %v5676 = vadd.f32 %v5542, %v5675
        %v5677 = vpop.f32.mrb[0].mxu0
        %5678 = vmatprep.mubr.f32.mxu0 0.0
        %5679 = vmatmul.mubr.f32.gmra.mrb[0].mxu0 %v5273
        %v5680 = vpop.f32.mrb[0].mxu0
        %v5681 = vadd.f32 %v5542, %v5680
        %v5682 = vpop.f32.mrb[0].mxu0
        %5683 = vmatprep.mubr.f32.mxu0 0.0
        %5684 = vmatmul.mubr.f32.gmra.mrb[0].mxu0 %v5278
        %v5685 = vpop.f32.mrb[0].mxu0
        %v5686 = vadd.f32 %v5542, %v5685
        %v5687 = vpop.f32.mrb[0].mxu0
        %5688 = vmatprep.mubr.f32.mxu0 0.0
        %5689 = vmatmul.mubr.f32.gmra.mrb[0].mxu0 %v5283
        %v5690 = vpop.f32.mrb[0].mxu0
        %v5691 = vadd.f32 %v5542, %v5690
        %v5692 = vpop.f32.mrb[0].mxu0
        %5693 = vmatprep.mubr.f32.mxu0 0.0
        %5694 = vmatmul.mubr.f32.gmra.mrb[0].mxu0 %v5288
        %v5695 = vpop.f32.mrb[0].mxu0
        %v5696 = vadd.f32 %v5542, %v5695
        %v5697 = vpop.f32.mrb[0].mxu0
        %5698 = vmatprep.mubr.f32.mxu0 0.0
        %5699 = vmatmul.mubr.f32.gmra.mrb[0].mxu0 %v5293
        %v5700 = vpop.f32.mrb[0].mxu0
        %v5701 = vadd.f32 %v5542, %v5700
        %v5702 = vpop.f32.mrb[0].mxu0
        %5703 = vmatprep.mubr.f32.mxu0 0.0
        %5704 = vmatmul.mubr.f32.gmra.mrb[0].mxu0 %v5298
        %v5705 = vpop.f32.mrb[0].mxu0
        %v5706 = vadd.f32 %v5542, %v5705
        %v5707 = vpop.f32.mrb[0].mxu0
        %5708 = vmatprep.mubr.f32.mxu0 0.0
        %5709 = vmatmul.mubr.f32.gmra.mrb[0].mxu0 %v5303
        %v5710 = vpop.f32.mrb[0].mxu0
        %v5711 = vadd.f32 %v5542, %v5710
        %v5712 = vpop.f32.mrb[0].mxu0
        %5713 = vmatprep.mubr.f32.mxu0 0.0
        %5714 = vmatmul.mubr.f32.gmra.mrb[0].mxu0 %v5308
        %v5715 = vpop.f32.mrb[0].mxu0
        %v5716 = vadd.f32 %v5542, %v5715
        %v5717 = vpop.f32.mrb[0].mxu0
        %5718 = vmatprep.mubr.f32.mxu0 0.0
        %5719 = vmatmul.mubr.f32.gmra.mrb[0].mxu0 %v5313
        %v5720 = vpop.f32.mrb[0].mxu0
        %v5721 = vadd.f32 %v5542, %v5720
        %v5722 = vpop.f32.mrb[0].mxu0
        %5723 = vmatprep.mubr.f32.mxu0 0.0
        %5724 = vmatmul.mubr.f32.gmra.mrb[0].mxu0 %v5318
        %v5725 = vpop.f32.mrb[0].mxu0
        %v5726 = vadd.f32 %v5542, %v5725
        %v5727 = vpop.f32.mrb[0].mxu0
        %5728 = vmatprep.mubr.f32.mxu0 0.0
        %5729 = vmatmul.mubr.f32.gmra.mrb[0].mxu0 %v5323
        %v5730 = vpop.f32.mrb[0].mxu0
        %v5731 = vadd.f32 %v5542, %v5730
        %v5732 = vpop.f32.mrb[0].mxu0
        %5733 = vmatprep.mubr.f32.mxu0 0.0
        %5734 = vmatmul.mubr.f32.gmra.mrb[0].mxu0 %v5328
        %v5735 = vpop.f32.mrb[0].mxu0
        %v5736 = vadd.f32 %v5542, %v5735
        %v5737 = vpop.f32.mrb[0].mxu0
        %5738 = vmatprep.mubr.f32.mxu0 0.0
        %5739 = vmatmul.mubr.f32.gmra.mrb[0].mxu0 %v5333
        %v5740 = vpop.f32.mrb[0].mxu0
        %v5741 = vadd.f32 %v5542, %v5740
        %v5742 = vpop.f32.mrb[0].mxu0
        %5743 = vmatprep.mubr.f32.mxu0 0.0
        %5744 = vmatmul.mubr.f32.gmra.mrb[0].mxu0 %v5338
        %v5745 = vpop.f32.mrb[0].mxu0
        %v5746 = vadd.f32 %v5542, %v5745
        %v5747 = vpop.f32.mrb[0].mxu0
        %5748 = vmatprep.mubr.f32.mxu0 0.0
        %5749 = vmatmul.mubr.f32.gmra.mrb[0].mxu0 %v5343
        %v5750 = vpop.f32.mrb[0].mxu0
        %v5751 = vadd.f32 %v5542, %v5750
        %v5752 = vpop.f32.mrb[0].mxu0
        %5753 = vmatprep.mubr.f32.mxu0 0.0
        %5754 = vmatmul.mubr.f32.gmra.mrb[0].mxu0 %v5348
        %v5755 = vpop.f32.mrb[0].mxu0
        %v5756 = vadd.f32 %v5542, %v5755
        %v5757 = vpop.f32.mrb[0].mxu0
        %5758 = vmatprep.mubr.f32.mxu0 0.0
        %5759 = vmatmul.mubr.f32.gmra.mrb[0].mxu0 %v5353
        %v5760 = vpop.f32.mrb[0].mxu0
        %v5761 = vadd.f32 %v5542, %v5760
        %v5762 = vpop.f32.mrb[0].mxu0
        %5763 = vmatprep.mubr.f32.mxu0 0.0
        %5764 = vmatmul.mubr.f32.gmra.mrb[0].mxu0 %v5358
        %v5765 = vpop.f32.mrb[0].mxu0
        %v5766 = vadd.f32 %v5542, %v5765
        %v5767 = vpop.f32.mrb[0].mxu0
        %5768 = vmatprep.mubr.f32.mxu0 0.0
        %5769 = vmatmul.mubr.f32.gmra.mrb[0].mxu0 %v5363
        %v5770 = vpop.f32.mrb[0].mxu0
        %v5771 = vadd.f32 %v5542, %v5770
        %v5772 = vpop.f32.mrb[0].mxu0
        %5773 = vmatprep.mubr.f32.mxu0 0.0
        %5774 = vmatmul.mubr.f32.gmra.mrb[0].mxu0 %v5368
        %v5775 = vpop.f32.mrb[0].mxu0
        %v5776 = vadd.f32 %v5542, %v5775
        %v5777 = vpop.f32.mrb[0].mxu0
        %5778 = vmatprep.mubr.f32.mxu0 0.0
        %5779 = vmatmul.mubr.f32.gmra.mrb[0].mxu0 %v5373
        %v5780 = vpop.f32.mrb[0].mxu0
        %v5781 = vadd.f32 %v5542, %v5780
        %v5782 = vpop.f32.mrb[0].mxu0
        %5783 = vmatprep.mubr.f32.mxu0 0.0
        %5784 = vmatmul.mubr.f32.gmra.mrb[0].mxu0 %v5378
        %v5785 = vpop.f32.mrb[0].mxu0
        %v5786 = vadd.f32 %v5542, %v5785
        %v5787 = vpop.f32.mrb[0].mxu0
        %5788 = vmatprep.mubr.f32.mxu0 0.0
        %5789 = vmatmul.mubr.f32.gmra.mrb[0].mxu0 %v5383
        %v5790 = vpop.f32.mrb[0].mxu0
        %v5791 = vadd.f32 %v5542, %v5790
        %v5792 = vpop.f32.mrb[0].mxu0
        %5793 = vmatprep.mubr.f32.mxu0 0.0
        %5794 = vmatmul.mubr.f32.gmra.mrb[0].mxu0 %v5388
        %v5795 = vpop.f32.mrb[0].mxu0
        %v5796 = vadd.f32 %v5542, %v5795
        %v5797 = vpop.f32.mrb[0].mxu0
        %5798 = vmatprep.mubr.f32.mxu0 0.0
        %5799 = vmatmul.mubr.f32.gmra.mrb[0].mxu0 %v5393
        %v5800 = vpop.f32.mrb[0].mxu0
        %v5801 = vadd.f32 %v5542, %v5800
        %v5802 = vpop.f32.mrb[0].mxu0
        %5803 = vmatprep.mubr.f32.mxu0 0.0
        %5804 = vmatmul.mubr.f32.gmra.mrb[0].mxu0 %v5398
        %v5805 = vpop.f32.mrb[0].mxu0
        %v5806 = vadd.f32 %v5542, %v5805
        %v5807 = vpop.f32.mrb[0].mxu0
        %5808 = vmatprep.mubr.f32.mxu0 0.0
        %5809 = vmatmul.mubr.f32.gmra.mrb[0].mxu0 %v5403
        %v5810 = vpop.f32.mrb[0].mxu0
        %v5811 = vadd.f32 %v5542, %v5810
        %v5812 = vpop.f32.mrb[0].mxu0
        %5813 = vmatprep.mubr.f32.mxu0 0.0
        %5814 = vmatmul.mubr.f32.gmra.mrb[0].mxu0 %v5408
        %v5815 = vpop.f32.mrb[0].mxu0
        %v5816 = vadd.f32 %v5542, %v5815
        %v5817 = vpop.f32.mrb[0].mxu0
        %5818 = vmatprep.mubr.f32.mxu0 0.0
        %5819 = vmatmul.mubr.f32.gmra.mrb[0].mxu0 %v5413
        %v5820 = vpop.f32.mrb[0].mxu0
        %v5821 = vadd.f32 %v5542, %v5820
        %v5822 = vpop.f32.mrb[0].mxu0
        %5823 = vmatprep.mubr.f32.mxu0 0.0
        %5824 = vmatmul.mubr.f32.gmra.mrb[0].mxu0 %v5418
        %v5825 = vpop.f32.mrb[0].mxu0
        %v5826 = vadd.f32 %v5542, %v5825
        %v5827 = vpop.f32.mrb[0].mxu0
        %5828 = vmatprep.mubr.f32.mxu0 0.0
        %5829 = vmatmul.mubr.f32.gmra.mrb[0].mxu0 %v5423
        %v5830 = vpop.f32.mrb[0].mxu0
        %v5831 = vadd.f32 %v5542, %v5830
        %v5832 = vpop.f32.mrb[0].mxu0
        %5833 = vmatprep.mubr.f32.mxu0 0.0
        %5834 = vmatmul.mubr.f32.gmra.mrb[0].mxu0 %v5428
        %v5835 = vpop.f32.mrb[0].mxu0
        %v5836 = vadd.f32 %v5542, %v5835
        %v5837 = vpop.f32.mrb[0].mxu0
        %5838 = vmatprep.mubr.f32.mxu0 0.0
        %5839 = vmatmul.mubr.f32.gmra.mrb[0].mxu0 %v5433
        %v5840 = vpop.f32.mrb[0].mxu0
        %v5841 = vadd.f32 %v5542, %v5840
        %v5842 = vpop.f32.mrb[0].mxu0
        %5843 = vmatprep.mubr.f32.mxu0 0.0
        %5844 = vmatmul.mubr.f32.gmra.mrb[0].mxu0 %v5438
        %v5845 = vpop.f32.mrb[0].mxu0
        %v5846 = vadd.f32 %v5542, %v5845
        %v5847 = vpop.f32.mrb[0].mxu0
        %5848 = vmatprep.mubr.f32.mxu0 0.0
        %5849 = vmatmul.mubr.f32.gmra.mrb[0].mxu0 %v5443
        %v5850 = vpop.f32.mrb[0].mxu0
        %v5851 = vadd.f32 %v5542, %v5850
        %v5852 = vpop.f32.mrb[0].mxu0
        %5853 = vmatprep.mubr.f32.mxu0 0.0
        %5854 = vmatmul.mubr.f32.gmra.mrb[0].mxu0 %v5448
        %v5855 = vpop.f32.mrb[0].mxu0
        %v5856 = vadd.f32 %v5542, %v5855
        %v5857 = vpop.f32.mrb[0].mxu0
        %5858 = vmatprep.mubr.f32.mxu0 0.0
        %5859 = vmatmul.mubr.f32.gmra.mrb[0].mxu0 %v5453
        %v5860 = vpop.f32.mrb[0].mxu0
        %v5861 = vadd.f32 %v5542, %v5860
        %v5862 = vpop.f32.mrb[0].mxu0
        %5863 = vmatprep.mubr.f32.mxu0 0.0
        %5864 = vmatmul.mubr.f32.gmra.mrb[0].mxu0 %v5458
        %v5865 = vpop.f32.mrb[0].mxu0
        %v5866 = vadd.f32 %v5542, %v5865
        %v5867 = vpop.f32.mrb[0].mxu0
        %5868 = vmatprep.mubr.f32.mxu0 0.0
        %5869 = vmatmul.mubr.f32.gmra.mrb[0].mxu0 %v5463
        %v5870 = vpop.f32.mrb[0].mxu0
        %v5871 = vadd.f32 %v5542, %v5870
        %v5872 = vpop.f32.mrb[0].mxu0
        %5873 = vmatprep.mubr.f32.mxu0 0.0
        %5874 = vmatmul.mubr.f32.gmra.mrb[0].mxu0 %v5468
        %v5875 = vpop.f32.mrb[0].mxu0
        %v5876 = vadd.f32 %v5542, %v5875
        %v5877 = vpop.f32.mrb[0].mxu0
        %5878 = vmatprep.mubr.f32.mxu0 0.0
        %5879 = vmatmul.mubr.f32.gmra.mrb[0].mxu0 %v5473
        %v5880 = vpop.f32.mrb[0].mxu0
        %v5881 = vadd.f32 %v5542, %v5880
        %v5882 = vpop.f32.mrb[0].mxu0
        %5883 = vmatprep.mubr.f32.mxu0 0.0
        %5884 = vmatmul.mubr.f32.gmra.mrb[0].mxu0 %v5478
        %v5885 = vpop.f32.mrb[0].mxu0
        %v5886 = vadd.f32 %v5542, %v5885
        %v5887 = vpop.f32.mrb[0].mxu0
        %5888 = vmatprep.mubr.f32.mxu0 0.0
        %5889 = vmatmul.mubr.f32.gmra.mrb[0].mxu0 %v5483
        %v5890 = vpop.f32.mrb[0].mxu0
        %v5891 = vadd.f32 %v5542, %v5890
        %v5892 = vpop.f32.mrb[0].mxu0
        %5893 = vmatprep.mubr.f32.mxu0 0.0
        %5894 = vmatmul.mubr.f32.gmra.mrb[0].mxu0 %v5488
        %v5895 = vpop.f32.mrb[0].mxu0
        %v5896 = vadd.f32 %v5542, %v5895
        %v5897 = vpop.f32.mrb[0].mxu0
        %5898 = vmatprep.mubr.f32.mxu0 0.0
        %5899 = vmatmul.mubr.f32.gmra.mrb[0].mxu0 %v5493
        %v5900 = vpop.f32.mrb[0].mxu0
        %v5901 = vadd.f32 %v5542, %v5900
        %v5902 = vpop.f32.mrb[0].mxu0
        %5903 = vmatprep.mubr.f32.mxu0 0.0
        %5904 = vmatmul.mubr.f32.gmra.mrb[0].mxu0 %v5498
        %v5905 = vpop.f32.mrb[0].mxu0
        %v5906 = vadd.f32 %v5542, %v5905
        %v5907 = vpop.f32.mrb[0].mxu0
        %5908 = vmatprep.mubr.f32.mxu0 0.0
        %5909 = vmatmul.mubr.f32.gmra.mrb[0].mxu0 %v5503
        %v5910 = vpop.f32.mrb[0].mxu0
        %v5911 = vadd.f32 %v5542, %v5910
        %v5912 = vpop.f32.mrb[0].mxu0
        %5913 = vmatprep.mubr.f32.mxu0 0.0
        %5914 = vmatmul.mubr.f32.gmra.mrb[0].mxu0 %v5508
        %v5915 = vpop.f32.mrb[0].mxu0
        %v5916 = vadd.f32 %v5542, %v5915
        %v5917 = vpop.f32.mrb[0].mxu0
        %5918 = vmatprep.mubr.f32.mxu0 0.0
        %5919 = vmatmul.mubr.f32.gmra.mrb[0].mxu0 %v5513
        %v5920 = vpop.f32.mrb[0].mxu0
        %v5921 = vadd.f32 %v5542, %v5920
        %v5922 = vpop.f32.mrb[0].mxu0
        %5923 = vmatprep.mubr.f32.mxu0 0.0
        %5924 = vmatmul.mubr.f32.gmra.mrb[0].mxu0 %v5518
        %v5925 = vpop.f32.mrb[0].mxu0
        %v5926 = vadd.f32 %v5542, %v5925
        %v5927 = vpop.f32.mrb[0].mxu0
        %5928 = vdwg.mxu0
        %v5929 = vmul.f32 %v280, 4.0
        %v5930 = vmul.f32 %v281, 4.0
        %v5931 = vmul.f32 %v282, 4.0
        %v5932 = vmul.f32 %v283, 4.0
        %v5933 = vmul.f32 %v284, 4.0
        %v5934 = vmul.f32 %v285, 4.0
        %v5935 = vmul.f32 %v286, 4.0
        %v5936 = vmul.f32 %v287, 4.0
        %v5937 = vmul.f32 %v288, 4.0
        %v5938 = vmul.f32 %v289, 4.0
        %v5939 = vmul.f32 %v290, 4.0
        %v5940 = vmul.f32 %v291, 4.0
        %v5941 = vmul.f32 %v292, 4.0
        %v5942 = vmul.f32 %v293, 4.0
        %v5943 = vmul.f32 %v294, 4.0
        %v5944 = vmul.f32 %v295, 4.0
        %v5945 = vmul.f32 %v296, 4.0
        %v5946 = vmul.f32 %v297, 4.0
        %v5947 = vmul.f32 %v298, 4.0
        %v5948 = vmul.f32 %v299, 4.0
        %v5949 = vmul.f32 %v300, 4.0
        %v5950 = vmul.f32 %v301, 4.0
        %v5951 = vmul.f32 %v302, 4.0
        %v5952 = vmul.f32 %v303, 4.0
        %v5953 = vmul.f32 %v304, 4.0
        %v5954 = vmul.f32 %v305, 4.0
        %v5955 = vmul.f32 %v306, 4.0
        %v5956 = vmul.f32 %v307, 4.0
        %v5957 = vmul.f32 %v308, 4.0
        %v5958 = vmul.f32 %v309, 4.0
        %v5959 = vmul.f32 %v310, 4.0
        %v5960 = vmul.f32 %v311, 4.0
        %v5961 = vmul.f32 %v312, 4.0
        %v5962 = vmul.f32 %v313, 4.0
        %v5963 = vmul.f32 %v314, 4.0
        %v5964 = vmul.f32 %v315, 4.0
        %v5965 = vmul.f32 %v316, 4.0
        %v5966 = vmul.f32 %v317, 4.0
        %v5967 = vmul.f32 %v318, 4.0
        %v5968 = vmul.f32 %v319, 4.0
        %v5969 = vmul.f32 %v320, 4.0
        %v5970 = vmul.f32 %v321, 4.0
        %v5971 = vmul.f32 %v322, 4.0
        %v5972 = vmul.f32 %v323, 4.0
        %v5973 = vmul.f32 %v324, 4.0
        %v5974 = vmul.f32 %v325, 4.0
        %v5975 = vmul.f32 %v326, 4.0
        %v5976 = vmul.f32 %v327, 4.0
        %v5977 = vmul.f32 %v328, 4.0
        %v5978 = vmul.f32 %v329, 4.0
        %v5979 = vmul.f32 %v330, 4.0
        %v5980 = vmul.f32 %v331, 4.0
        %v5981 = vmul.f32 %v332, 4.0
        %v5982 = vmul.f32 %v333, 4.0
        %v5983 = vmul.f32 %v334, 4.0
        %v5984 = vmul.f32 %v335, 4.0
        %v5985 = vmul.f32 %v336, 4.0
        %v5986 = vmul.f32 %v337, 4.0
        %v5987 = vmul.f32 %v338, 4.0
        %v5988 = vmul.f32 %v339, 4.0
        %v5989 = vmul.f32 %v340, 4.0
        %v5990 = vmul.f32 %v341, 4.0
        %v5991 = vmul.f32 %v342, 4.0
        %v5992 = vmul.f32 %v343, 4.0
        %v5993 = vadd.f32 %v5611, %v5929
        %v5994 = vadd.f32 %v5616, %v5930
        %v5995 = vadd.f32 %v5621, %v5931
        %v5996 = vadd.f32 %v5626, %v5932
        %v5997 = vadd.f32 %v5631, %v5933
        %v5998 = vadd.f32 %v5636, %v5934
        %v5999 = vadd.f32 %v5641, %v5935
        %v6000 = vadd.f32 %v5646, %v5936
        %v6001 = vadd.f32 %v5651, %v5937
        %v6002 = vadd.f32 %v5656, %v5938
        %v6003 = vadd.f32 %v5661, %v5939
        %v6004 = vadd.f32 %v5666, %v5940
        %v6005 = vadd.f32 %v5671, %v5941
        %v6006 = vadd.f32 %v5676, %v5942
        %v6007 = vadd.f32 %v5681, %v5943
        %v6008 = vadd.f32 %v5686, %v5944
        %v6009 = vadd.f32 %v5691, %v5945
        %v6010 = vadd.f32 %v5696, %v5946
        %v6011 = vadd.f32 %v5701, %v5947
        %v6012 = vadd.f32 %v5706, %v5948
        %v6013 = vadd.f32 %v5711, %v5949
        %v6014 = vadd.f32 %v5716, %v5950
        %v6015 = vadd.f32 %v5721, %v5951
        %v6016 = vadd.f32 %v5726, %v5952
        %v6017 = vadd.f32 %v5731, %v5953
        %v6018 = vadd.f32 %v5736, %v5954
        %v6019 = vadd.f32 %v5741, %v5955
        %v6020 = vadd.f32 %v5746, %v5956
        %v6021 = vadd.f32 %v5751, %v5957
        %v6022 = vadd.f32 %v5756, %v5958
        %v6023 = vadd.f32 %v5761, %v5959
        %v6024 = vadd.f32 %v5766, %v5960
        %v6025 = vadd.f32 %v5771, %v5961
        %v6026 = vadd.f32 %v5776, %v5962
        %v6027 = vadd.f32 %v5781, %v5963
        %v6028 = vadd.f32 %v5786, %v5964
        %v6029 = vadd.f32 %v5791, %v5965
        %v6030 = vadd.f32 %v5796, %v5966
        %v6031 = vadd.f32 %v5801, %v5967
        %v6032 = vadd.f32 %v5806, %v5968
        %v6033 = vadd.f32 %v5811, %v5969
        %v6034 = vadd.f32 %v5816, %v5970
        %v6035 = vadd.f32 %v5821, %v5971
        %v6036 = vadd.f32 %v5826, %v5972
        %v6037 = vadd.f32 %v5831, %v5973
        %v6038 = vadd.f32 %v5836, %v5974
        %v6039 = vadd.f32 %v5841, %v5975
        %v6040 = vadd.f32 %v5846, %v5976
        %v6041 = vadd.f32 %v5851, %v5977
        %v6042 = vadd.f32 %v5856, %v5978
        %v6043 = vadd.f32 %v5861, %v5979
        %v6044 = vadd.f32 %v5866, %v5980
        %v6045 = vadd.f32 %v5871, %v5981
        %v6046 = vadd.f32 %v5876, %v5982
        %v6047 = vadd.f32 %v5881, %v5983
        %v6048 = vadd.f32 %v5886, %v5984
        %v6049 = vadd.f32 %v5891, %v5985
        %v6050 = vadd.f32 %v5896, %v5986
        %v6051 = vadd.f32 %v5901, %v5987
        %v6052 = vadd.f32 %v5906, %v5988
        %v6053 = vadd.f32 %v5911, %v5989
        %v6054 = vadd.f32 %v5916, %v5990
        %v6055 = vadd.f32 %v5921, %v5991
        %v6056 = vadd.f32 %v5926, %v5992
        %6057 = vst [vmem:[%s272] sm:$0xff] %v5993
        %6058 = vst [vmem:[%s272 + $0x8] sm:$0xff] %v5994
        %6059 = vst [vmem:[%s272 + $0x10] sm:$0xff] %v5995
        %6060 = vst [vmem:[%s272 + $0x18] sm:$0xff] %v5996
        %6061 = vst [vmem:[%s272 + $0x20] sm:$0xff] %v5997
        %6062 = vst [vmem:[%s272 + $0x28] sm:$0xff] %v5998
        %6063 = vst [vmem:[%s272 + $0x30] sm:$0xff] %v5999
        %6064 = vst [vmem:[%s272 + $0x38] sm:$0xff] %v6000
        %6065 = vst [vmem:[%s272 + $0x40] sm:$0xff] %v6001
        %6066 = vst [vmem:[%s272 + $0x48] sm:$0xff] %v6002
        %6067 = vst [vmem:[%s272 + $0x50] sm:$0xff] %v6003
        %6068 = vst [vmem:[%s272 + $0x58] sm:$0xff] %v6004
        %6069 = vst [vmem:[%s272 + $0x60] sm:$0xff] %v6005
        %6070 = vst [vmem:[%s272 + $0x68] sm:$0xff] %v6006
        %6071 = vst [vmem:[%s272 + $0x70] sm:$0xff] %v6007
        %6072 = vst [vmem:[%s272 + $0x78] sm:$0xff] %v6008
        %6073 = vst [vmem:[%s272 + $0x80] sm:$0xff] %v6009
        %6074 = vst [vmem:[%s272 + $0x88] sm:$0xff] %v6010
        %6075 = vst [vmem:[%s272 + $0x90] sm:$0xff] %v6011
        %6076 = vst [vmem:[%s272 + $0x98] sm:$0xff] %v6012
        %6077 = vst [vmem:[%s272 + $0xa0] sm:$0xff] %v6013
        %6078 = vst [vmem:[%s272 + $0xa8] sm:$0xff] %v6014
        %6079 = vst [vmem:[%s272 + $0xb0] sm:$0xff] %v6015
        %6080 = vst [vmem:[%s272 + $0xb8] sm:$0xff] %v6016
        %6081 = vst [vmem:[%s272 + $0xc0] sm:$0xff] %v6017
        %6082 = vst [vmem:[%s272 + $0xc8] sm:$0xff] %v6018
        %6083 = vst [vmem:[%s272 + $0xd0] sm:$0xff] %v6019
        %6084 = vst [vmem:[%s272 + $0xd8] sm:$0xff] %v6020
        %6085 = vst [vmem:[%s272 + $0xe0] sm:$0xff] %v6021
        %6086 = vst [vmem:[%s272 + $0xe8] sm:$0xff] %v6022
        %6087 = vst [vmem:[%s272 + $0xf0] sm:$0xff] %v6023
        %6088 = vst [vmem:[%s272 + $0xf8] sm:$0xff] %v6024
        %6089 = vst [vmem:[%s272 + $0x100] sm:$0xff] %v6025
        %6090 = vst [vmem:[%s272 + $0x108] sm:$0xff] %v6026
        %6091 = vst [vmem:[%s272 + $0x110] sm:$0xff] %v6027
        %6092 = vst [vmem:[%s272 + $0x118] sm:$0xff] %v6028
        %6093 = vst [vmem:[%s272 + $0x120] sm:$0xff] %v6029
        %6094 = vst [vmem:[%s272 + $0x128] sm:$0xff] %v6030
        %6095 = vst [vmem:[%s272 + $0x130] sm:$0xff] %v6031
        %6096 = vst [vmem:[%s272 + $0x138] sm:$0xff] %v6032
        %6097 = vst [vmem:[%s272 + $0x140] sm:$0xff] %v6033
        %6098 = vst [vmem:[%s272 + $0x148] sm:$0xff] %v6034
        %6099 = vst [vmem:[%s272 + $0x150] sm:$0xff] %v6035
        %6100 = vst [vmem:[%s272 + $0x158] sm:$0xff] %v6036
        %6101 = vst [vmem:[%s272 + $0x160] sm:$0xff] %v6037
        %6102 = vst [vmem:[%s272 + $0x168] sm:$0xff] %v6038
        %6103 = vst [vmem:[%s272 + $0x170] sm:$0xff] %v6039
        %6104 = vst [vmem:[%s272 + $0x178] sm:$0xff] %v6040
        %6105 = vst [vmem:[%s272 + $0x180] sm:$0xff] %v6041
        %6106 = vst [vmem:[%s272 + $0x188] sm:$0xff] %v6042
        %6107 = vst [vmem:[%s272 + $0x190] sm:$0xff] %v6043
        %6108 = vst [vmem:[%s272 + $0x198] sm:$0xff] %v6044
        %6109 = vst [vmem:[%s272 + $0x1a0] sm:$0xff] %v6045
        %6110 = vst [vmem:[%s272 + $0x1a8] sm:$0xff] %v6046
        %6111 = vst [vmem:[%s272 + $0x1b0] sm:$0xff] %v6047
        %6112 = vst [vmem:[%s272 + $0x1b8] sm:$0xff] %v6048
        %6113 = vst [vmem:[%s272 + $0x1c0] sm:$0xff] %v6049
        %6114 = vst [vmem:[%s272 + $0x1c8] sm:$0xff] %v6050
        %6115 = vst [vmem:[%s272 + $0x1d0] sm:$0xff] %v6051
        %6116 = vst [vmem:[%s272 + $0x1d8] sm:$0xff] %v6052
        %6117 = vst [vmem:[%s272 + $0x1e0] sm:$0xff] %v6053
        %6118 = vst [vmem:[%s272 + $0x1e8] sm:$0xff] %v6054
        %6119 = vst [vmem:[%s272 + $0x1f0] sm:$0xff] %v6055
        %6120 = vst [vmem:[%s272 + $0x1f8] sm:$0xff] %v6056
        %s6121 = sand.u32 %s181, 1
        %s6122 = scalar_lea.sflag [#allocation3], %s6121
        %s6123 = sand.u32 %s181, 1
        %s6124 = smul.addr %s6123, 512
        %s6125 = scalar_lea.vmem [#allocation2], %s6124
        // Predicated region
        $region49: #{node_attention_multihead_forward.1} parent=47 // pred_check
          %p6126 = pneg %p191
        $region50: #{node_attention_multihead_forward.1} parent=47 // pred_check_branch
          %6128 = sbr.rel (%p6126) target = $region52
        $region51: #{node_attention_multihead_forward.1} parent=47 // pred_region
          %s6129 = smul.u32 64, %s21
          %s6131 = ssub.s32 8192, 8192
          %6132 = vsyncadd %s6122, %s6131
          %s6133 = smul.addr %s6129, 128
          %s6134 = scalar_lea.hbm %s7, %s6133
          %s6135 = sshll.u32 %s6125, 4
          %s6136 = int_to_ptr.vmem [resolvable:$true] %s6135
          %6141 = dma.vmem_to_hbm [thread:$0]  %s6136, 8192, %s6134, %s6122, 128, 128, 8
        $region52: #{node_attention_multihead_forward.1} parent=47 // pred_fallthru
          _
      $region48: #{node_attention_multihead_forward.1} parent=5 // pred_fallthru
        _
      %p6142 = scmp.le.s32.totalorder 2, %s16
      // Predicated region
      $region53: #{node_attention_multihead_forward.1} parent=5 // pred_check
        %p6143 = pneg %p6142
      $region54: #{node_attention_multihead_forward.1} parent=5 // pred_check_branch
        %6145 = sbr.rel (%p6143) target = $region56
      $region55: #{node_attention_multihead_forward.1} parent=5 // pred_region
        %s6146 = ssub.s32 %s16, 2
        // Predicated region
        $region57: #{node_attention_multihead_forward.1} parent=55 // pred_check
          %p6147 = pneg %p197
        $region58: #{node_attention_multihead_forward.1} parent=55 // pred_check_branch
          %6149 = sbr.rel (%p6147) target = $region60
        $region59: #{node_attention_multihead_forward.1} parent=55 // pred_region
          %s6150 = sand.u32 %s182, 1
          %s6151 = scalar_lea.sflag [#allocation3], %s6150
          %s6152 = sand.u32 %s182, 1
          %s6153 = smul.addr %s6152, 512
          %s6154 = scalar_lea.vmem [#allocation2], %s6153
          %6155 = dma.done %s6151, 8192
        $region60: #{node_attention_multihead_forward.1} parent=55 // pred_fallthru
          _
      $region56: #{node_attention_multihead_forward.1} parent=5 // pred_fallthru
        _
    $region6: #{node_attention_multihead_forward.1} parent=1 // loop_footer
      %s20 = sadd.s32 1, %s16
    $region7: #{node_attention_multihead_forward.1} parent=1 // loop_footer_branch
      %15 = sbr.rel target = $region3
    $region8: #{node_attention_multihead_forward.1} parent=1 // loop_exit
      _
    %6156 = vsyncpa [#allocation3], 1
    %s6157 = scalar_lea.sflag [#allocation3], 1
    %6158 = vsyncpa %s6157, 1

</llo_original>
